<compile_context>
chip_gen: v5e
topology: v5e:2x2
jax: 0.10.0
libtpu: 0.0.40
codegen_flags: <defaults>
</compile_context>

<pallas_src>
import jax
import jax.numpy as jnp
from jax import lax
from jax.experimental import pallas as pl
from jax.experimental.pallas import tpu as pltpu

EPS = 1e-5                      # nn.BatchNorm2d default eps
LANE = 128                      # pad channels to a multiple of the lane width
VMEM_LIMIT = 64 * 1024 * 1024   # well above per-step footprint; shrink tiles on v7x


def _round_up(x, m):
    return (x + m - 1) // m * m


# ---------------------------------------------------------------------------
# Pallas kernels
# ---------------------------------------------------------------------------
def _conv3x3_stats_kernel(xp_ref, w_ref, y_ref, s_ref, ss_ref):
    """3x3 conv (stride 1) on one spatially padded image + BN partial stats.

    xp_ref: (1, H+2, W+2, Cpi) bf16  zero-padded input (channels padded to 128*k)
    w_ref : (9*Cpi, Cpo)       bf16  tap-major / input-channel-minor weights
    y_ref : (1, H*W, Cpo)      f32   raw conv output
    s_ref, ss_ref: (1, 1, Cpo) f32   per-image sum / sum-of-squares (for BN)
    """
    _, hp, wp, cpi = xp_ref.shape
    h, w = hp - 2, wp - 2
    # In-kernel im2col: 9 shifted views of the padded tile, concatenated along
    # lanes -> one wide K = 9*Cpi MXU contraction instead of 9 skinny ones.
    taps = [xp_ref[0, dy:dy + h, dx:dx + w, :].reshape(h * w, cpi)
            for dy in range(3) for dx in range(3)]
    patches = jnp.concatenate(taps, axis=-1)                 # (H*W, 9*Cpi) bf16
    acc = jnp.dot(patches, w_ref[...],
                  preferred_element_type=jnp.float32)        # (H*W, Cpo)  f32
    y_ref[0] = acc
    # Per-image partial BN statistics; finalized across the batch in the wrapper.
    s_ref[0] = jnp.sum(acc, axis=0, keepdims=True)
    ss_ref[0] = jnp.sum(acc * acc, axis=0, keepdims=True)


def _bn_relu_kernel(y_ref, scale_ref, shift_ref, o_ref):
    """y * scale + shift -> ReLU, cast to bf16 (input of the next conv)."""
    o_ref[...] = jnp.maximum(
        y_ref[...] * scale_ref[...] + shift_ref[...], 0.0).astype(o_ref.dtype)


def _bn_add_relu_kernel(y_ref, scale_ref, shift_ref, idn_ref, o_ref):
    """y * scale + shift + identity -> ReLU."""
    o_ref[...] = jnp.maximum(
        y_ref[...] * scale_ref[...] + shift_ref[...] + idn_ref[...], 0.0
    ).astype(o_ref.dtype)


# ---------------------------------------------------------------------------
# pallas_call wrappers
# ---------------------------------------------------------------------------
def _conv3x3_with_stats(xp, w_flat, h, w):
    """xp: (N, H+2, W+2, Cpi) bf16, w_flat: (9*Cpi, Cpo) bf16."""
    n = xp.shape[0]
    cpi = xp.shape[-1]
    cpo = w_flat.shape[1]
    return pl.pallas_call(
        _conv3x3_stats_kernel,
        grid=(n,),
        in_specs=[
            pl.BlockSpec((1, h + 2, w + 2, cpi), lambda i: (i, 0, 0, 0)),
            pl.BlockSpec((9 * cpi, cpo), lambda i: (0, 0)),
        ],
        out_specs=(
            pl.BlockSpec((1, h * w, cpo), lambda i: (i, 0, 0)),
            pl.BlockSpec((1, 1, cpo), lambda i: (i, 0, 0)),
            pl.BlockSpec((1, 1, cpo), lambda i: (i, 0, 0)),
        ),
        out_shape=(
            jax.ShapeDtypeStruct((n, h * w, cpo), jnp.float32),
            jax.ShapeDtypeStruct((n, 1, cpo), jnp.float32),
            jax.ShapeDtypeStruct((n, 1, cpo), jnp.float32),
        ),
        compiler_params=pltpu.CompilerParams(
            dimension_semantics=("parallel",),     # images are independent
            vmem_limit_bytes=VMEM_LIMIT),
    )(xp, w_flat)


def _elementwise_call(kernel, out_dtype, tile, *args):
    """Tiled elementwise stage over (rows, Cp); args[0] decides rows/Cp."""
    rows, cp = args[0].shape
    in_specs = []
    for a in args:
        if a.shape[0] == 1:                       # per-channel scale / shift
            in_specs.append(pl.BlockSpec((1, cp), lambda i: (0, 0)))
        else:
            in_specs.append(pl.BlockSpec((tile, cp), lambda i: (i, 0)))
    return pl.pallas_call(
        kernel,
        grid=(pl.cdiv(rows, tile),),
        in_specs=in_specs,
        out_specs=pl.BlockSpec((tile, cp), lambda i: (i, 0)),
        out_shape=jax.ShapeDtypeStruct((rows, cp), out_dtype),
        compiler_params=pltpu.CompilerParams(
            dimension_semantics=("parallel",),
            vmem_limit_bytes=VMEM_LIMIT),
    )(*args)


def _bn_scale_shift(s, ss, gamma, beta, count):
    """Fold per-image sum/sumsq partials into per-channel BN scale/shift (tiny)."""
    total = jnp.sum(s[:, 0, :], axis=0)
    total_sq = jnp.sum(ss[:, 0, :], axis=0)
    mean = total / count
    var = jnp.maximum(total_sq / count - mean * mean, 0.0)   # biased (training) var
    scale = gamma * lax.rsqrt(var + EPS)
    shift = beta - mean * scale
    return scale.reshape(1, -1), shift.reshape(1, -1)


# ---------------------------------------------------------------------------
# BasicBlock forward
# ---------------------------------------------------------------------------
def basic_block_forward(x_nchw, params):
    """Pallas BasicBlock forward. x_nchw: (N, C, H, W) f32 -> (N, C, H, W) f32."""
    x = jnp.transpose(x_nchw, (0, 2, 3, 1))                   # NCHW -> NHWC, f32
    n, h, w, cin = x.shape
    cout = params["w1"].shape[0]
    assert cin == cout, "identity path requires in_channels == out_channels"
    cp = _round_up(cout, LANE)                                # lane-dense channels
    rows = n * h * w
    tile_r = min(256, _round_up(rows, 8))                     # elementwise row tile

    # Channel-padded activations: f32 identity, bf16 (spatially padded) conv input.
    x_cp = jnp.pad(x, ((0, 0), (0, 0), (0, 0), (0, cp - cin)))
    identity = x_cp.reshape(rows, cp)                                      # f32
    x_sp = jnp.pad(x_cp, ((0, 0), (1, 1), (1, 1), (0, 0))).astype(jnp.bfloat16)

    # Weights: torch (Cout, Cin, 3, 3) -> (3,3,Cin,Cout) -> pad -> (9*Cp, Cp) bf16.
    def prep_w(w_oihw):
        wt = jnp.transpose(w_oihw, (2, 3, 1, 0))
        wt = jnp.pad(wt, ((0, 0), (0, 0),
                          (0, cp - wt.shape[2]), (0, cp - wt.shape[3])))
        return wt.reshape(9 * cp, cp).astype(jnp.bfloat16)

    w1, w2 = prep_w(params["w1"]), prep_w(params["w2"])
    g1 = jnp.pad(params["gamma1"], (0, cp - cout), constant_values=1.0)
    b1 = jnp.pad(params["beta1"], (0, cp - cout))
    g2 = jnp.pad(params["gamma2"], (0, cp - cout), constant_values=1.0)
    b2 = jnp.pad(params["beta2"], (0, cp - cout))

    # conv1 (+ BN partial stats)  ->  bn1 + relu
    y1, s1, ss1 = _conv3x3_with_stats(x_sp, w1, h, w)
    sc1, sh1 = _bn_scale_shift(s1, ss1, g1, b1, rows)
    a1 = _elementwise_call(_bn_relu_kernel, jnp.bfloat16, tile_r,
                           y1.reshape(rows, cp), sc1, sh1)                 # bf16

    # conv2 (+ BN partial stats)  ->  bn2 + identity + relu
    # TODO(synk): fuse this spatial re-pad into the bn1+relu kernel (padded-layout
    # output block) to drop one XLA pad pass over the intermediate activation.
    a1_sp = jnp.pad(a1.reshape(n, h, w, cp), ((0, 0), (1, 1), (1, 1), (0, 0)))
    y2, s2, ss2 = _conv3x3_with_stats(a1_sp, w2, h, w)
    sc2, sh2 = _bn_scale_shift(s2, ss2, g2, b2, rows)
    out = _elementwise_call(_bn_add_relu_kernel, jnp.float32, tile_r,
                            y2.reshape(rows, cp), sc2, sh2, identity)      # f32

    out = out.reshape(n, h, w, cp)[..., :cout]
    return jnp.transpose(out, (0, 3, 1, 2))                   # NHWC -> NCHW


# ---------------------------------------------------------------------------
# Pure-JAX reference (for verification)
# ---------------------------------------------------------------------------
def _ref_bn(y_nchw, g, b):
    mean = y_nchw.mean(axis=(0, 2, 3), keepdims=True)
    var = ((y_nchw - mean) ** 2).mean(axis=(0, 2, 3), keepdims=True)
    return ((y_nchw - mean) * lax.rsqrt(var + EPS)
            * g.reshape(1, -1, 1, 1) + b.reshape(1, -1, 1, 1))


def _ref_block(x_nchw, params):
    dn = ("NCHW", "OIHW", "NCHW")
    y = lax.conv_general_dilated(x_nchw, params["w1"], (1, 1), "SAME",
                                 dimension_numbers=dn)
    y = jnp.maximum(_ref_bn(y, params["gamma1"], params["beta1"]), 0.0)
    y = lax.conv_general_dilated(y, params["w2"], (1, 1), "SAME",
                                 dimension_numbers=dn)
    y = _ref_bn(y, params["gamma2"], params["beta2"])
    return jnp.maximum(y + x_nchw, 0.0)


# ---------------------------------------------------------------------------
if __name__ == "__main__":
    N, C, H, W = 2, 4, 16, 16     # in_channels = out_channels = 4, stride = 1
    key = jax.random.PRNGKey(0)
    kx, kw1, kw2 = jax.random.split(key, 3)

    x = jax.random.normal(kx, (N, C, H, W), jnp.float32)
    params = {
        # deterministic synthetic weights, PyTorch conv weight layout (O, I, KH, KW)
        "w1": jax.random.normal(kw1, (C, C, 3, 3), jnp.float32) * 0.1,
        "w2": jax.random.normal(kw2, (C, C, 3, 3), jnp.float32) * 0.1,
        # nn.BatchNorm2d default init: gamma = 1, beta = 0
        "gamma1": jnp.ones((C,), jnp.float32),
        "beta1": jnp.zeros((C,), jnp.float32),
        "gamma2": jnp.ones((C,), jnp.float32),
        "beta2": jnp.zeros((C,), jnp.float32),
    }

    out = jax.block_until_ready(basic_block_forward(x, params))
    ref = jax.block_until_ready(_ref_block(x, params))

    assert out.shape == (N, C, H, W), out.shape
    # bf16 MXU inputs (f32 accumulation) -> slightly looser tolerance than pure f32.
    assert jnp.allclose(out, ref, atol=2e-2, rtol=2e-2), float(
        jnp.max(jnp.abs(out - ref)))
    print("KERNEL_OK")
</pallas_src>

<mosaic_0001>
module attributes {stable_mosaic.version = 11 : i64} {
  func.func @_conv3x3_stats_kernel(%arg0: i32, %arg1: memref<1x18x18x128xbf16, #tpu.memory_space<vmem>>, %arg2: memref<1152x128xbf16, #tpu.memory_space<vmem>>, %arg3: memref<1x256x128xf32, #tpu.memory_space<vmem>>, %arg4: memref<1x1x128xf32, #tpu.memory_space<vmem>>, %arg5: memref<1x1x128xf32, #tpu.memory_space<vmem>>) attributes {dimension_semantics = [#tpu.dimension_semantics<parallel>], iteration_bounds = array<i64: 2>, scalar_prefetch = 0 : i64, scratch_operands = 0 : i64, tpu.core_type = #tpu.core_type<tc>, window_params = [{transform_indices = @transform_0, window_bounds = array<i64: 1, 18, 18, 128>}, {pipeline_mode = #tpu.pipeline_mode<synchronous>, transform_indices = @transform_1, window_bounds = array<i64: 1152, 128>}, {transform_indices = @transform_2, window_bounds = array<i64: 1, 256, 128>}, {transform_indices = @transform_3, window_bounds = array<i64: 1, 1, 128>}, {transform_indices = @transform_4, window_bounds = array<i64: 1, 1, 128>}]} {
    %c0 = arith.constant 0 : index
    %c0_0 = arith.constant 0 : index
    %c0_1 = arith.constant 0 : index
    %c0_2 = arith.constant 0 : index
    %0 = vector.load %arg1[%c0, %c0_0, %c0_1, %c0_2] : memref<1x18x18x128xbf16, #tpu.memory_space<vmem>>, vector<1x16x16x128xbf16>
    %1 = vector.shape_cast %0 : vector<1x16x16x128xbf16> to vector<16x16x128xbf16>
    %2 = vector.shape_cast %1 : vector<16x16x128xbf16> to vector<256x128xbf16>
    %c0_3 = arith.constant 0 : index
    %c0_4 = arith.constant 0 : index
    %c1 = arith.constant 1 : index
    %c0_5 = arith.constant 0 : index
    %3 = vector.load %arg1[%c0_3, %c0_4, %c1, %c0_5] : memref<1x18x18x128xbf16, #tpu.memory_space<vmem>>, vector<1x16x16x128xbf16>
    %4 = vector.shape_cast %3 : vector<1x16x16x128xbf16> to vector<16x16x128xbf16>
    %5 = vector.shape_cast %4 : vector<16x16x128xbf16> to vector<256x128xbf16>
    %c0_6 = arith.constant 0 : index
    %c0_7 = arith.constant 0 : index
    %c2 = arith.constant 2 : index
    %c0_8 = arith.constant 0 : index
    %6 = vector.load %arg1[%c0_6, %c0_7, %c2, %c0_8] : memref<1x18x18x128xbf16, #tpu.memory_space<vmem>>, vector<1x16x16x128xbf16>
    %7 = vector.shape_cast %6 : vector<1x16x16x128xbf16> to vector<16x16x128xbf16>
    %8 = vector.shape_cast %7 : vector<16x16x128xbf16> to vector<256x128xbf16>
    %c0_9 = arith.constant 0 : index
    %c1_10 = arith.constant 1 : index
    %c0_11 = arith.constant 0 : index
    %c0_12 = arith.constant 0 : index
    %9 = vector.load %arg1[%c0_9, %c1_10, %c0_11, %c0_12] : memref<1x18x18x128xbf16, #tpu.memory_space<vmem>>, vector<1x16x16x128xbf16>
    %10 = vector.shape_cast %9 : vector<1x16x16x128xbf16> to vector<16x16x128xbf16>
    %11 = vector.shape_cast %10 : vector<16x16x128xbf16> to vector<256x128xbf16>
    %c0_13 = arith.constant 0 : index
    %c1_14 = arith.constant 1 : index
    %c1_15 = arith.constant 1 : index
    %c0_16 = arith.constant 0 : index
    %12 = vector.load %arg1[%c0_13, %c1_14, %c1_15, %c0_16] : memref<1x18x18x128xbf16, #tpu.memory_space<vmem>>, vector<1x16x16x128xbf16>
    %13 = vector.shape_cast %12 : vector<1x16x16x128xbf16> to vector<16x16x128xbf16>
    %14 = vector.shape_cast %13 : vector<16x16x128xbf16> to vector<256x128xbf16>
    %c0_17 = arith.constant 0 : index
    %c1_18 = arith.constant 1 : index
    %c2_19 = arith.constant 2 : index
    %c0_20 = arith.constant 0 : index
    %15 = vector.load %arg1[%c0_17, %c1_18, %c2_19, %c0_20] : memref<1x18x18x128xbf16, #tpu.memory_space<vmem>>, vector<1x16x16x128xbf16>
    %16 = vector.shape_cast %15 : vector<1x16x16x128xbf16> to vector<16x16x128xbf16>
    %17 = vector.shape_cast %16 : vector<16x16x128xbf16> to vector<256x128xbf16>
    %c0_21 = arith.constant 0 : index
    %c2_22 = arith.constant 2 : index
    %c0_23 = arith.constant 0 : index
    %c0_24 = arith.constant 0 : index
    %18 = vector.load %arg1[%c0_21, %c2_22, %c0_23, %c0_24] : memref<1x18x18x128xbf16, #tpu.memory_space<vmem>>, vector<1x16x16x128xbf16>
    %19 = vector.shape_cast %18 : vector<1x16x16x128xbf16> to vector<16x16x128xbf16>
    %20 = vector.shape_cast %19 : vector<16x16x128xbf16> to vector<256x128xbf16>
    %c0_25 = arith.constant 0 : index
    %c2_26 = arith.constant 2 : index
    %c1_27 = arith.constant 1 : index
    %c0_28 = arith.constant 0 : index
    %21 = vector.load %arg1[%c0_25, %c2_26, %c1_27, %c0_28] : memref<1x18x18x128xbf16, #tpu.memory_space<vmem>>, vector<1x16x16x128xbf16>
    %22 = vector.shape_cast %21 : vector<1x16x16x128xbf16> to vector<16x16x128xbf16>
    %23 = vector.shape_cast %22 : vector<16x16x128xbf16> to vector<256x128xbf16>
    %c0_29 = arith.constant 0 : index
    %c2_30 = arith.constant 2 : index
    %c2_31 = arith.constant 2 : index
    %c0_32 = arith.constant 0 : index
    %24 = vector.load %arg1[%c0_29, %c2_30, %c2_31, %c0_32] : memref<1x18x18x128xbf16, #tpu.memory_space<vmem>>, vector<1x16x16x128xbf16>
    %25 = vector.shape_cast %24 : vector<1x16x16x128xbf16> to vector<16x16x128xbf16>
    %26 = vector.shape_cast %25 : vector<16x16x128xbf16> to vector<256x128xbf16>
    %27 = tpu.concatenate %2, %5, %8, %11, %14, %17, %20, %23, %26 in 1 : vector<256x128xbf16>, vector<256x128xbf16>, vector<256x128xbf16>, vector<256x128xbf16>, vector<256x128xbf16>, vector<256x128xbf16>, vector<256x128xbf16>, vector<256x128xbf16>, vector<256x128xbf16> -> vector<256x1152xbf16>
    %c0_33 = arith.constant 0 : index
    %c0_34 = arith.constant 0 : index
    %28 = vector.load %arg2[%c0_33, %c0_34] : memref<1152x128xbf16, #tpu.memory_space<vmem>>, vector<1152x128xbf16>
    %cst = arith.constant dense<0.000000e+00> : vector<256x128xf32>
    %29 = tpu.matmul %27, %28, %cst {dimension_numbers = #tpu.dot_dimension_numbers<[1], [0], [0], [1], [0, 0, 1, 1], [], []>} : vector<256x1152xbf16>, vector<1152x128xbf16>, vector<256x128xf32> -> vector<256x128xf32>
    %c0_35 = arith.constant 0 : index
    %c0_36 = arith.constant 0 : index
    %c0_37 = arith.constant 0 : index
    %30 = vector.load %arg3[%c0_35, %c0_36, %c0_37] : memref<1x256x128xf32, #tpu.memory_space<vmem>>, vector<1x256x128xf32>
    %31 = vector.shape_cast %30 : vector<1x256x128xf32> to vector<256x128xf32>
    %32 = vector.shape_cast %29 : vector<256x128xf32> to vector<1x256x128xf32>
    tpu.vector_store %arg3[%c0_35, %c0_36, %c0_37], %32 {strides = array<i32>} : memref<1x256x128xf32, #tpu.memory_space<vmem>>, vector<1x256x128xf32>,
    %cst_38 = arith.constant dense<0.000000e+00> : vector<128xf32>
    %33 = vector.multi_reduction <add>, %29, %cst_38 [0] : vector<256x128xf32> to vector<128xf32>
    %34 = vector.shape_cast %33 : vector<128xf32> to vector<1x128xf32>
    %c0_39 = arith.constant 0 : index
    %c0_40 = arith.constant 0 : index
    %c0_41 = arith.constant 0 : index
    %35 = vector.load %arg4[%c0_39, %c0_40, %c0_41] : memref<1x1x128xf32, #tpu.memory_space<vmem>>, vector<1x1x128xf32>
    %36 = vector.shape_cast %35 : vector<1x1x128xf32> to vector<1x128xf32>
    %37 = vector.shape_cast %34 : vector<1x128xf32> to vector<1x1x128xf32>
    tpu.vector_store %arg4[%c0_39, %c0_40, %c0_41], %37 {strides = array<i32>} : memref<1x1x128xf32, #tpu.memory_space<vmem>>, vector<1x1x128xf32>,
    %38 = arith.mulf %29, %29 : vector<256x128xf32>
    %cst_42 = arith.constant dense<0.000000e+00> : vector<128xf32>
    %39 = vector.multi_reduction <add>, %38, %cst_42 [0] : vector<256x128xf32> to vector<128xf32>
    %40 = vector.shape_cast %39 : vector<128xf32> to vector<1x128xf32>
    %c0_43 = arith.constant 0 : index
    %c0_44 = arith.constant 0 : index
    %c0_45 = arith.constant 0 : index
    %41 = vector.load %arg5[%c0_43, %c0_44, %c0_45] : memref<1x1x128xf32, #tpu.memory_space<vmem>>, vector<1x1x128xf32>
    %42 = vector.shape_cast %41 : vector<1x1x128xf32> to vector<1x128xf32>
    %43 = vector.shape_cast %40 : vector<1x128xf32> to vector<1x1x128xf32>
    tpu.vector_store %arg5[%c0_43, %c0_44, %c0_45], %43 {strides = array<i32>} : memref<1x1x128xf32, #tpu.memory_space<vmem>>, vector<1x1x128xf32>,
    return
  }
  func.func @transform_0(%arg0: i32) -> (i32, i32, i32, i32) {
    %c0_i32 = arith.constant 0 : i32
    %c0_i32_0 = arith.constant 0 : i32
    %c0_i32_1 = arith.constant 0 : i32
    %c0_i32_2 = arith.constant 0 : i32
    return %arg0, %c0_i32, %c0_i32_0, %c0_i32_1 : i32, i32, i32, i32
  }
  func.func @transform_1(%arg0: i32) -> (i32, i32) {
    %c0_i32 = arith.constant 0 : i32
    %c0_i32_0 = arith.constant 0 : i32
    %c0_i32_1 = arith.constant 0 : i32
    return %c0_i32, %c0_i32_0 : i32, i32
  }
  func.func @transform_2(%arg0: i32) -> (i32, i32, i32) {
    %c0_i32 = arith.constant 0 : i32
    %c0_i32_0 = arith.constant 0 : i32
    %c0_i32_1 = arith.constant 0 : i32
    return %arg0, %c0_i32, %c0_i32_0 : i32, i32, i32
  }
  func.func @transform_3(%arg0: i32) -> (i32, i32, i32) {
    %c0_i32 = arith.constant 0 : i32
    %c0_i32_0 = arith.constant 0 : i32
    %c0_i32_1 = arith.constant 0 : i32
    return %arg0, %c0_i32, %c0_i32_0 : i32, i32, i32
  }
  func.func @transform_4(%arg0: i32) -> (i32, i32, i32) {
    %c0_i32 = arith.constant 0 : i32
    %c0_i32_0 = arith.constant 0 : i32
    %c0_i32_1 = arith.constant 0 : i32
    return %arg0, %c0_i32, %c0_i32_0 : i32, i32, i32
  }
}

</mosaic_0001>

<llo_original>
// kernel: tpu_custom_call.1
$region0: #{tpu_custom_call.1}
  #allocation0 [shape = 'u32[]', space=smem, size = 0x4, offset = 0x4, fixed_abs, tag = 'smem constant byte address 0x4 - core index']
  #allocation1 [shape = 'u32[72,128]{1,0:T(1,128)}', space=vmem, size = 0x9000, scoped, tag = 'internal scratch']
  %s0 = inlined_call_operand.vmem [shape: bf16[2,18,18,128], index: 0, kind: input, shape index: {}]
  %s1 = inlined_call_operand.vmem [shape: bf16[1152,128], index: 1, kind: input, shape index: {}]
  %s2 = inlined_call_operand.hbm [shape: f32[2,256,128], index: 2, kind: output, shape index: {0}]
  %s3 = inlined_call_operand.hbm [shape: f32[2,1,128], index: 3, kind: output, shape index: {1}]
  %s4 = inlined_call_operand.hbm [shape: f32[2,1,128], index: 4, kind: output, shape index: {2}]
  %5 = xla_tuple %s2, %s3, %s4
  %s6 = sld [smem:[#allocation0]]
  $region57: #{tpu_custom_call.1} parent=0
    _
  %s8 = ssub.s32 1, %s6
  %s9 = scalar_select 0, %s8, %s6
  $region1: #{tpu_custom_call.1} parent=0
    #allocation2 [shape = 'u8[262144]{0}', space=vmem, size = 0x40000, scoped, tag = 'output window, operand 0']
    #allocation3 [shape = 's32[2]{0}', space=sflag, size = 0x8, scoped, tag = 'scoped memory for tpu_custom_call.1']
    #allocation4 [shape = 'u8[1024]{0}', space=vmem, size = 0x400, scoped, tag = 'output window, operand 1']
    #allocation5 [shape = 's32[2]{0}', space=sflag, size = 0x8, scoped, tag = 'scoped memory for tpu_custom_call.1']
    #allocation6 [shape = 'u8[1024]{0}', space=vmem, size = 0x400, scoped, tag = 'output window, operand 2']
    %10 = vsyncpa [#allocation3], 0
    %s11 = scalar_lea.sflag [#allocation3], 1
    %12 = vsyncpa %s11, 0
    %13 = vsyncpa [#allocation5], 0
    %s14 = scalar_lea.sflag [#allocation5], 1
    %15 = vsyncpa %s14, 0
    loop: start=0, step=1, limit=4
    $region2: #{tpu_custom_call.1} parent=1 // loop_pre_header
      _
    $region3: #{tpu_custom_call.1} parent=1 // loop_header
      %s17 = sphi 0, %s21
      %p18 = scmp.ge.s32.totalorder %s17, 4
      %s27 = sphi 0, %s29
      %s30 = sphi 0, %s27
      %s31 = sphi 0, %s30
      %s47 = sphi 0, %s31
      %s51 = sphi 0, %s51
      %s53 = sphi 0, %s51
      %s54 = sphi 0, %s53
      %s68 = sphi 0, %s54
      %s74 = sphi 0, %s76
      %s77 = sphi 0, %s74
      %s78 = sphi 0, %s77
      %s94 = sphi 0, %s78
      %s100 = sphi 0, %s102
      %s103 = sphi 0, %s100
      %s104 = sphi 0, %s103
      %s120 = sphi 0, %s104
      %s126 = sphi 0, %s128
      %s129 = sphi 0, %s126
      %s130 = sphi 0, %s129
      %s146 = sphi 0, %s130
    $region4: #{tpu_custom_call.1} parent=1 // loop_header_branch
      %20 = sbr.rel (%p18) target = $region8
    $region5: #{tpu_custom_call.1} parent=1 // loop_body
      %s22 = ssub.s32 %s17, 1
      %s23 = ssub.s32 %s17, 2
      %s24 = sadd.s32 %s17, 1
      %s25 = ssub.s32 %s17, %s24
      %p26 = scmp.eq.s32.totalorder %s25, 0
      %s28 = sadd.s32 %s27, 1
      %s29 = scalar_select %p26, %s27, %s28
      %p32 = pneg %p26
      %p33 = scmp.eq.s32.totalorder %s17, 1
      %p34 = por %p32, %p33
      %p35 = scmp.ne.s32.totalorder %s27, %s30
      %p36 = scmp.eq.s32.totalorder %s17, 0
      %p37 = por %p35, %p36
      %p38 = scmp.ne.s32.totalorder %s27, %s30
      %p39 = scmp.eq.s32.totalorder %s22, 1
      %p40 = por %p38, %p39
      %p41 = scmp.ne.s32.totalorder %s30, %s31
      %p42 = scmp.eq.s32.totalorder %s22, 0
      %p43 = por %p41, %p42
      %p44 = scmp.ne.s32.totalorder %s30, %s31
      %p45 = scmp.eq.s32.totalorder %s23, 1
      %p46 = por %p44, %p45
      %p48 = scmp.ne.s32.totalorder %s31, %s47
      %p49 = scmp.eq.s32.totalorder %s23, 0
      %p50 = por %p48, %p49
      %s52 = sadd.s32 %s51, 1
      %p55 = scmp.eq.s32.totalorder %s17, 1
      %p56 = scmp.ne.s32.totalorder %s51, %s53
      %p57 = scmp.eq.s32.totalorder %s17, 0
      %p58 = por %p56, %p57
      %p59 = scmp.ne.s32.totalorder %s51, %s53
      %p60 = scmp.eq.s32.totalorder %s22, 1
      %p61 = por %p59, %p60
      %p62 = scmp.ne.s32.totalorder %s53, %s54
      %p63 = scmp.eq.s32.totalorder %s22, 0
      %p64 = por %p62, %p63
      %p65 = scmp.ne.s32.totalorder %s53, %s54
      %p66 = scmp.eq.s32.totalorder %s23, 1
      %p67 = por %p65, %p66
      %p69 = scmp.ne.s32.totalorder %s54, %s68
      %p70 = scmp.eq.s32.totalorder %s23, 0
      %p71 = por %p69, %p70
      %s72 = ssub.s32 %s17, %s24
      %p73 = scmp.eq.s32.totalorder %s72, 0
      %s75 = sadd.s32 %s74, 1
      %s76 = scalar_select %p73, %s74, %s75
      %p79 = pneg %p73
      %p80 = scmp.eq.s32.totalorder %s17, 1
      %p81 = por %p79, %p80
      %p82 = scmp.ne.s32.totalorder %s74, %s77
      %p83 = scmp.eq.s32.totalorder %s17, 0
      %p84 = por %p82, %p83
      %p85 = scmp.ne.s32.totalorder %s74, %s77
      %p86 = scmp.eq.s32.totalorder %s22, 1
      %p87 = por %p85, %p86
      %p88 = scmp.ne.s32.totalorder %s77, %s78
      %p89 = scmp.eq.s32.totalorder %s22, 0
      %p90 = por %p88, %p89
      %p91 = scmp.ne.s32.totalorder %s77, %s78
      %p92 = scmp.eq.s32.totalorder %s23, 1
      %p93 = por %p91, %p92
      %p95 = scmp.ne.s32.totalorder %s78, %s94
      %p96 = scmp.eq.s32.totalorder %s23, 0
      %p97 = por %p95, %p96
      %s98 = ssub.s32 %s17, %s24
      %p99 = scmp.eq.s32.totalorder %s98, 0
      %s101 = sadd.s32 %s100, 1
      %s102 = scalar_select %p99, %s100, %s101
      %p105 = pneg %p99
      %p106 = scmp.eq.s32.totalorder %s17, 1
      %p107 = por %p105, %p106
      %p108 = scmp.ne.s32.totalorder %s100, %s103
      %p109 = scmp.eq.s32.totalorder %s17, 0
      %p110 = por %p108, %p109
      %p111 = scmp.ne.s32.totalorder %s100, %s103
      %p112 = scmp.eq.s32.totalorder %s22, 1
      %p113 = por %p111, %p112
      %p114 = scmp.ne.s32.totalorder %s103, %s104
      %p115 = scmp.eq.s32.totalorder %s22, 0
      %p116 = por %p114, %p115
      %p117 = scmp.ne.s32.totalorder %s103, %s104
      %p118 = scmp.eq.s32.totalorder %s23, 1
      %p119 = por %p117, %p118
      %p121 = scmp.ne.s32.totalorder %s104, %s120
      %p122 = scmp.eq.s32.totalorder %s23, 0
      %p123 = por %p121, %p122
      %s124 = ssub.s32 %s17, %s24
      %p125 = scmp.eq.s32.totalorder %s124, 0
      %s127 = sadd.s32 %s126, 1
      %s128 = scalar_select %p125, %s126, %s127
      %p131 = pneg %p125
      %p132 = scmp.eq.s32.totalorder %s17, 1
      %p133 = por %p131, %p132
      %p134 = scmp.ne.s32.totalorder %s126, %s129
      %p135 = scmp.eq.s32.totalorder %s17, 0
      %p136 = por %p134, %p135
      %p137 = scmp.ne.s32.totalorder %s126, %s129
      %p138 = scmp.eq.s32.totalorder %s22, 1
      %p139 = por %p137, %p138
      %p140 = scmp.ne.s32.totalorder %s129, %s130
      %p141 = scmp.eq.s32.totalorder %s22, 0
      %p142 = por %p140, %p141
      %p143 = scmp.ne.s32.totalorder %s129, %s130
      %p144 = scmp.eq.s32.totalorder %s23, 1
      %p145 = por %p143, %p144
      %p147 = scmp.ne.s32.totalorder %s130, %s146
      %p148 = scmp.eq.s32.totalorder %s23, 0
      %p149 = por %p147, %p148
      %p150 = scmp.le.s32.totalorder 1, %s17
      %p151 = scmp.lt.s32.totalorder %s17, 3
      %p152 = pnand %p150, %p151
      %p153 = pneg %p152
      // Predicated region
      $region9: #{tpu_custom_call.1} parent=5 // pred_check
        _
      $region10: #{tpu_custom_call.1} parent=5 // pred_check_branch
        %155 = sbr.rel (%p152) target = $region12
      $region11: #{tpu_custom_call.1} parent=5 // pred_region
        %s156 = ssub.s32 %s17, 1
        // Predicated region
        $region13: #{tpu_custom_call.1} parent=11 // pred_check
          %p157 = pneg %p64
        $region14: #{tpu_custom_call.1} parent=11 // pred_check_branch
          %159 = sbr.rel (%p157) target = $region16
        $region15: #{tpu_custom_call.1} parent=11 // pred_region
          _
        $region16: #{tpu_custom_call.1} parent=11 // pred_fallthru
          _
      $region12: #{tpu_custom_call.1} parent=5 // pred_fallthru
        _
      %p160 = scmp.lt.s32.totalorder %s17, 2
      // Predicated region
      $region17: #{tpu_custom_call.1} parent=5 // pred_check
        %p161 = pneg %p160
      $region18: #{tpu_custom_call.1} parent=5 // pred_check_branch
        %163 = sbr.rel (%p161) target = $region20
      $region19: #{tpu_custom_call.1} parent=5 // pred_region
        // Predicated region
        $region21: #{tpu_custom_call.1} parent=19 // pred_check
          %p164 = pneg %p37
        $region22: #{tpu_custom_call.1} parent=19 // pred_check_branch
          %166 = sbr.rel (%p164) target = $region24
        $region23: #{tpu_custom_call.1} parent=19 // pred_region
          %p167 = scmp.lt.s32.totalorder %s17, 1
          %s168 = scalar_select %p167, %s17, 1
          %s169 = smul.addr %s168, 54
          %s170 = smul.addr %s169, 4
          %s171 = scalar_lea.vmem %s0, %s170
        $region24: #{tpu_custom_call.1} parent=19 // pred_fallthru
          _
      $region20: #{tpu_custom_call.1} parent=5 // pred_fallthru
        _
      %p172 = scmp.le.s32.totalorder 1, %s17
      %p173 = scmp.lt.s32.totalorder %s17, 3
      %p174 = pnand %p172, %p173
      %p175 = pneg %p174
      // Predicated region
      $region25: #{tpu_custom_call.1} parent=5 // pred_check
        _
      $region26: #{tpu_custom_call.1} parent=5 // pred_check_branch
        %177 = sbr.rel (%p174) target = $region28
      $region27: #{tpu_custom_call.1} parent=5 // pred_region
        %s178 = ssub.s32 %s17, 1
        %p179 = scmp.lt.s32.totalorder %s22, 1
        %s180 = scalar_select %p179, %s22, 1
        %s181 = smul.addr %s180, 54
        %s182 = smul.addr %s181, 4
        %s183 = scalar_lea.vmem %s0, %s182
        %p184 = pneg %p43
        %p185 = pneg %p40
        %p186 = pneg %p64
        %p187 = pneg %p61
        %p188 = pneg %p90
        %p189 = pneg %p87
        %s190 = sand.u32 %s77, 1
        %s191 = scalar_lea.sflag [#allocation3], %s190
        %s192 = sand.u32 %s77, 1
        %s193 = smul.addr %s192, 256
        %s194 = scalar_lea.vmem [#allocation2], %s193
        %p195 = pneg %p116
        %p196 = pneg %p113
        %s197 = sand.u32 %s22, 1
        %s198 = scalar_lea.sflag [#allocation5], %s197
        %s199 = sand.u32 %s103, 1
        %s200 = scalar_lea.vmem [#allocation4], %s199
        %p201 = pneg %p142
        %p202 = pneg %p139
        %s203 = sand.u32 %s22, 1
        %s204 = scalar_lea.sflag [#allocation5], %s203
        %s205 = sand.u32 %s129, 1
        %s206 = scalar_lea.vmem [#allocation6], %s205
        %p207 = scmp.lt.s32.totalorder %s22, 1
        %s208 = scalar_select %p207, %s22, 1
        %s209 = smul.addr %s208, 54
        %s210 = smul.addr %s209, 4
        %s211 = scalar_lea.vmem %s0, %s210
        %v212 = vld [vmem:[%s211] sm:$0xf]
        %v213 = vld [vmem:[%s211 + $0x4] sm:$0xf]
        %v214 = vld [vmem:[%s211 + $0xc] sm:$0xf]
        %v215 = vld [vmem:[%s211 + $0x10] sm:$0xf]
        %v216 = vld [vmem:[%s211 + $0x18] sm:$0xf]
        %v217 = vld [vmem:[%s211 + $0x1c] sm:$0xf]
        %v218 = vld [vmem:[%s211 + $0x24] sm:$0xf]
        %v219 = vld [vmem:[%s211 + $0x28] sm:$0xf]
        %v220 = vld [vmem:[%s211 + $0x30] sm:$0xf]
        %v221 = vld [vmem:[%s211 + $0x34] sm:$0xf]
        %v222 = vld [vmem:[%s211 + $0x3c] sm:$0xf]
        %v223 = vld [vmem:[%s211 + $0x40] sm:$0xf]
        %v224 = vld [vmem:[%s211 + $0x48] sm:$0xf]
        %v225 = vld [vmem:[%s211 + $0x4c] sm:$0xf]
        %v226 = vld [vmem:[%s211 + $0x54] sm:$0xf]
        %v227 = vld [vmem:[%s211 + $0x58] sm:$0xf]
        %v228 = vld [vmem:[%s211 + $0x60] sm:$0xf]
        %v229 = vld [vmem:[%s211 + $0x64] sm:$0xf]
        %v230 = vld [vmem:[%s211 + $0x6c] sm:$0xf]
        %v231 = vld [vmem:[%s211 + $0x70] sm:$0xf]
        %v232 = vld [vmem:[%s211 + $0x78] sm:$0xf]
        %v233 = vld [vmem:[%s211 + $0x7c] sm:$0xf]
        %v234 = vld [vmem:[%s211 + $0x84] sm:$0xf]
        %v235 = vld [vmem:[%s211 + $0x88] sm:$0xf]
        %v236 = vld [vmem:[%s211 + $0x90] sm:$0xf]
        %v237 = vld [vmem:[%s211 + $0x94] sm:$0xf]
        %v238 = vld [vmem:[%s211 + $0x9c] sm:$0xf]
        %v239 = vld [vmem:[%s211 + $0xa0] sm:$0xf]
        %v240 = vld [vmem:[%s211 + $0xa8] sm:$0xf]
        %v241 = vld [vmem:[%s211 + $0xac] sm:$0xf]
        %v242 = vld [vmem:[%s211 + $0xb4] sm:$0xf]
        %v243 = vld [vmem:[%s211 + $0xb8] sm:$0xf]
        %v244 = vld [vmem:[%s211 + $0x8] sm:$0x1]
        %v245 = vld [vmem:[%s211 + $0x14] sm:$0x1]
        %v246 = vld [vmem:[%s211 + $0x20] sm:$0x1]
        %v247 = vld [vmem:[%s211 + $0x2c] sm:$0x1]
        %v248 = vld [vmem:[%s211 + $0x38] sm:$0x1]
        %v249 = vld [vmem:[%s211 + $0x44] sm:$0x1]
        %v250 = vld [vmem:[%s211 + $0x50] sm:$0x1]
        %v251 = vld [vmem:[%s211 + $0x5c] sm:$0x1]
        %v252 = vld [vmem:[%s211 + $0x68] sm:$0x1]
        %v253 = vld [vmem:[%s211 + $0x74] sm:$0x1]
        %v254 = vld [vmem:[%s211 + $0x80] sm:$0x1]
        %v255 = vld [vmem:[%s211 + $0x8c] sm:$0x1]
        %v256 = vld [vmem:[%s211 + $0x98] sm:$0x1]
        %v257 = vld [vmem:[%s211 + $0xa4] sm:$0x1]
        %v258 = vld [vmem:[%s211 + $0xb0] sm:$0x1]
        %v259 = vld [vmem:[%s211 + $0xbc] sm:$0x1]
        %vm260 = vsmask.f32 3328
        %vm261 = vsmask.f32 7440
        %vm262 = vmor %vm260, %vm261
        %v264 = vshrl.u32 %v212, 16
        %v266 = vrot.slane %v264, 4
        %v267 = vshll.u32 %v212, 16
        %v269 = vrot.slane %v267, 5
        %v270 = vor.u32 %v266, %v269
        %v271 = vrot.slane %v270, 4
        %v273 = vshll.u32 %v213, 16
        %v275 = vrot.slane %v273, 5
        %v276 = vsel %vm262, %v271, %v275
        %v277 = vshrl.u32 %v213, 16
        %v279 = vrot.slane %v277, 4
        %v280 = vor.u32 %v279, %v275
        %v281 = vrot.slane %v280, 4
        %v283 = vshll.u32 %v244, 16
        %v285 = vrot.slane %v283, 5
        %v286 = vsel %vm262, %v281, %v285
        %v288 = vshrl.u32 %v214, 16
        %v290 = vrot.slane %v288, 4
        %v291 = vshll.u32 %v214, 16
        %v293 = vrot.slane %v291, 5
        %v294 = vor.u32 %v290, %v293
        %v295 = vrot.slane %v294, 4
        %v297 = vshll.u32 %v215, 16
        %v299 = vrot.slane %v297, 5
        %v300 = vsel %vm262, %v295, %v299
        %v301 = vshrl.u32 %v215, 16
        %v303 = vrot.slane %v301, 4
        %v304 = vor.u32 %v303, %v299
        %v305 = vrot.slane %v304, 4
        %v307 = vshll.u32 %v245, 16
        %v309 = vrot.slane %v307, 5
        %v310 = vsel %vm262, %v305, %v309
        %v312 = vshrl.u32 %v216, 16
        %v314 = vrot.slane %v312, 4
        %v315 = vshll.u32 %v216, 16
        %v317 = vrot.slane %v315, 5
        %v318 = vor.u32 %v314, %v317
        %v319 = vrot.slane %v318, 4
        %v321 = vshll.u32 %v217, 16
        %v323 = vrot.slane %v321, 5
        %v324 = vsel %vm262, %v319, %v323
        %v325 = vshrl.u32 %v217, 16
        %v327 = vrot.slane %v325, 4
        %v328 = vor.u32 %v327, %v323
        %v329 = vrot.slane %v328, 4
        %v331 = vshll.u32 %v246, 16
        %v333 = vrot.slane %v331, 5
        %v334 = vsel %vm262, %v329, %v333
        %v336 = vshrl.u32 %v218, 16
        %v338 = vrot.slane %v336, 4
        %v339 = vshll.u32 %v218, 16
        %v341 = vrot.slane %v339, 5
        %v342 = vor.u32 %v338, %v341
        %v343 = vrot.slane %v342, 4
        %v345 = vshll.u32 %v219, 16
        %v347 = vrot.slane %v345, 5
        %v348 = vsel %vm262, %v343, %v347
        %v349 = vshrl.u32 %v219, 16
        %v351 = vrot.slane %v349, 4
        %v352 = vor.u32 %v351, %v347
        %v353 = vrot.slane %v352, 4
        %v355 = vshll.u32 %v247, 16
        %v357 = vrot.slane %v355, 5
        %v358 = vsel %vm262, %v353, %v357
        %v360 = vshrl.u32 %v220, 16
        %v362 = vrot.slane %v360, 4
        %v363 = vshll.u32 %v220, 16
        %v365 = vrot.slane %v363, 5
        %v366 = vor.u32 %v362, %v365
        %v367 = vrot.slane %v366, 4
        %v369 = vshll.u32 %v221, 16
        %v371 = vrot.slane %v369, 5
        %v372 = vsel %vm262, %v367, %v371
        %v373 = vshrl.u32 %v221, 16
        %v375 = vrot.slane %v373, 4
        %v376 = vor.u32 %v375, %v371
        %v377 = vrot.slane %v376, 4
        %v379 = vshll.u32 %v248, 16
        %v381 = vrot.slane %v379, 5
        %v382 = vsel %vm262, %v377, %v381
        %v384 = vshrl.u32 %v222, 16
        %v386 = vrot.slane %v384, 4
        %v387 = vshll.u32 %v222, 16
        %v389 = vrot.slane %v387, 5
        %v390 = vor.u32 %v386, %v389
        %v391 = vrot.slane %v390, 4
        %v393 = vshll.u32 %v223, 16
        %v395 = vrot.slane %v393, 5
        %v396 = vsel %vm262, %v391, %v395
        %v397 = vshrl.u32 %v223, 16
        %v399 = vrot.slane %v397, 4
        %v400 = vor.u32 %v399, %v395
        %v401 = vrot.slane %v400, 4
        %v403 = vshll.u32 %v249, 16
        %v405 = vrot.slane %v403, 5
        %v406 = vsel %vm262, %v401, %v405
        %v408 = vshrl.u32 %v224, 16
        %v410 = vrot.slane %v408, 4
        %v411 = vshll.u32 %v224, 16
        %v413 = vrot.slane %v411, 5
        %v414 = vor.u32 %v410, %v413
        %v415 = vrot.slane %v414, 4
        %v417 = vshll.u32 %v225, 16
        %v419 = vrot.slane %v417, 5
        %v420 = vsel %vm262, %v415, %v419
        %v421 = vshrl.u32 %v225, 16
        %v423 = vrot.slane %v421, 4
        %v424 = vor.u32 %v423, %v419
        %v425 = vrot.slane %v424, 4
        %v427 = vshll.u32 %v250, 16
        %v429 = vrot.slane %v427, 5
        %v430 = vsel %vm262, %v425, %v429
        %v432 = vshrl.u32 %v226, 16
        %v434 = vrot.slane %v432, 4
        %v435 = vshll.u32 %v226, 16
        %v437 = vrot.slane %v435, 5
        %v438 = vor.u32 %v434, %v437
        %v439 = vrot.slane %v438, 4
        %v441 = vshll.u32 %v227, 16
        %v443 = vrot.slane %v441, 5
        %v444 = vsel %vm262, %v439, %v443
        %v445 = vshrl.u32 %v227, 16
        %v447 = vrot.slane %v445, 4
        %v448 = vor.u32 %v447, %v443
        %v449 = vrot.slane %v448, 4
        %v451 = vshll.u32 %v251, 16
        %v453 = vrot.slane %v451, 5
        %v454 = vsel %vm262, %v449, %v453
        %v456 = vshrl.u32 %v228, 16
        %v458 = vrot.slane %v456, 4
        %v459 = vshll.u32 %v228, 16
        %v461 = vrot.slane %v459, 5
        %v462 = vor.u32 %v458, %v461
        %v463 = vrot.slane %v462, 4
        %v465 = vshll.u32 %v229, 16
        %v467 = vrot.slane %v465, 5
        %v468 = vsel %vm262, %v463, %v467
        %v469 = vshrl.u32 %v229, 16
        %v471 = vrot.slane %v469, 4
        %v472 = vor.u32 %v471, %v467
        %v473 = vrot.slane %v472, 4
        %v475 = vshll.u32 %v252, 16
        %v477 = vrot.slane %v475, 5
        %v478 = vsel %vm262, %v473, %v477
        %v480 = vshrl.u32 %v230, 16
        %v482 = vrot.slane %v480, 4
        %v483 = vshll.u32 %v230, 16
        %v485 = vrot.slane %v483, 5
        %v486 = vor.u32 %v482, %v485
        %v487 = vrot.slane %v486, 4
        %v489 = vshll.u32 %v231, 16
        %v491 = vrot.slane %v489, 5
        %v492 = vsel %vm262, %v487, %v491
        %v493 = vshrl.u32 %v231, 16
        %v495 = vrot.slane %v493, 4
        %v496 = vor.u32 %v495, %v491
        %v497 = vrot.slane %v496, 4
        %v499 = vshll.u32 %v253, 16
        %v501 = vrot.slane %v499, 5
        %v502 = vsel %vm262, %v497, %v501
        %v504 = vshrl.u32 %v232, 16
        %v506 = vrot.slane %v504, 4
        %v507 = vshll.u32 %v232, 16
        %v509 = vrot.slane %v507, 5
        %v510 = vor.u32 %v506, %v509
        %v511 = vrot.slane %v510, 4
        %v513 = vshll.u32 %v233, 16
        %v515 = vrot.slane %v513, 5
        %v516 = vsel %vm262, %v511, %v515
        %v517 = vshrl.u32 %v233, 16
        %v519 = vrot.slane %v517, 4
        %v520 = vor.u32 %v519, %v515
        %v521 = vrot.slane %v520, 4
        %v523 = vshll.u32 %v254, 16
        %v525 = vrot.slane %v523, 5
        %v526 = vsel %vm262, %v521, %v525
        %v528 = vshrl.u32 %v234, 16
        %v530 = vrot.slane %v528, 4
        %v531 = vshll.u32 %v234, 16
        %v533 = vrot.slane %v531, 5
        %v534 = vor.u32 %v530, %v533
        %v535 = vrot.slane %v534, 4
        %v537 = vshll.u32 %v235, 16
        %v539 = vrot.slane %v537, 5
        %v540 = vsel %vm262, %v535, %v539
        %v541 = vshrl.u32 %v235, 16
        %v543 = vrot.slane %v541, 4
        %v544 = vor.u32 %v543, %v539
        %v545 = vrot.slane %v544, 4
        %v547 = vshll.u32 %v255, 16
        %v549 = vrot.slane %v547, 5
        %v550 = vsel %vm262, %v545, %v549
        %v552 = vshrl.u32 %v236, 16
        %v554 = vrot.slane %v552, 4
        %v555 = vshll.u32 %v236, 16
        %v557 = vrot.slane %v555, 5
        %v558 = vor.u32 %v554, %v557
        %v559 = vrot.slane %v558, 4
        %v561 = vshll.u32 %v237, 16
        %v563 = vrot.slane %v561, 5
        %v564 = vsel %vm262, %v559, %v563
        %v565 = vshrl.u32 %v237, 16
        %v567 = vrot.slane %v565, 4
        %v568 = vor.u32 %v567, %v563
        %v569 = vrot.slane %v568, 4
        %v571 = vshll.u32 %v256, 16
        %v573 = vrot.slane %v571, 5
        %v574 = vsel %vm262, %v569, %v573
        %v576 = vshrl.u32 %v238, 16
        %v578 = vrot.slane %v576, 4
        %v579 = vshll.u32 %v238, 16
        %v581 = vrot.slane %v579, 5
        %v582 = vor.u32 %v578, %v581
        %v583 = vrot.slane %v582, 4
        %v585 = vshll.u32 %v239, 16
        %v587 = vrot.slane %v585, 5
        %v588 = vsel %vm262, %v583, %v587
        %v589 = vshrl.u32 %v239, 16
        %v591 = vrot.slane %v589, 4
        %v592 = vor.u32 %v591, %v587
        %v593 = vrot.slane %v592, 4
        %v595 = vshll.u32 %v257, 16
        %v597 = vrot.slane %v595, 5
        %v598 = vsel %vm262, %v593, %v597
        %v600 = vshrl.u32 %v240, 16
        %v602 = vrot.slane %v600, 4
        %v603 = vshll.u32 %v240, 16
        %v605 = vrot.slane %v603, 5
        %v606 = vor.u32 %v602, %v605
        %v607 = vrot.slane %v606, 4
        %v609 = vshll.u32 %v241, 16
        %v611 = vrot.slane %v609, 5
        %v612 = vsel %vm262, %v607, %v611
        %v613 = vshrl.u32 %v241, 16
        %v615 = vrot.slane %v613, 4
        %v616 = vor.u32 %v615, %v611
        %v617 = vrot.slane %v616, 4
        %v619 = vshll.u32 %v258, 16
        %v621 = vrot.slane %v619, 5
        %v622 = vsel %vm262, %v617, %v621
        %v624 = vshrl.u32 %v242, 16
        %v626 = vrot.slane %v624, 4
        %v627 = vshll.u32 %v242, 16
        %v629 = vrot.slane %v627, 5
        %v630 = vor.u32 %v626, %v629
        %v631 = vrot.slane %v630, 4
        %v633 = vshll.u32 %v243, 16
        %v635 = vrot.slane %v633, 5
        %v636 = vsel %vm262, %v631, %v635
        %v637 = vshrl.u32 %v243, 16
        %v639 = vrot.slane %v637, 4
        %v640 = vor.u32 %v639, %v635
        %v641 = vrot.slane %v640, 4
        %v643 = vshll.u32 %v259, 16
        %v645 = vrot.slane %v643, 5
        %v646 = vsel %vm262, %v641, %v645
        %v647 = vld [vmem:[%s211] sm:$0xe]
        %v648 = vld [vmem:[%s211 + $0xc] sm:$0xe]
        %v649 = vld [vmem:[%s211 + $0x18] sm:$0xe]
        %v650 = vld [vmem:[%s211 + $0x24] sm:$0xe]
        %v651 = vld [vmem:[%s211 + $0x30] sm:$0xe]
        %v652 = vld [vmem:[%s211 + $0x3c] sm:$0xe]
        %v653 = vld [vmem:[%s211 + $0x48] sm:$0xe]
        %v654 = vld [vmem:[%s211 + $0x54] sm:$0xe]
        %v655 = vld [vmem:[%s211 + $0x60] sm:$0xe]
        %v656 = vld [vmem:[%s211 + $0x6c] sm:$0xe]
        %v657 = vld [vmem:[%s211 + $0x78] sm:$0xe]
        %v658 = vld [vmem:[%s211 + $0x84] sm:$0xe]
        %v659 = vld [vmem:[%s211 + $0x90] sm:$0xe]
        %v660 = vld [vmem:[%s211 + $0x9c] sm:$0xe]
        %v661 = vld [vmem:[%s211 + $0xa8] sm:$0xe]
        %v662 = vld [vmem:[%s211 + $0xb4] sm:$0xe]
        %vm711 = vcmask 1042432
        %vm712 = vcmask 1046532
        %vm713 = vmor %vm711, %vm712
        %v714 = vrot.slane %v647, 5
        %v715 = vrot.slane %v714, 4
        %v716 = vrot.slane %v213, 5
        %v717 = vsel %vm713, %v715, %v716
        %v718 = vrot.slane %v716, 4
        %v719 = vrot.slane %v244, 5
        %v720 = vsel %vm713, %v718, %v719
        %v721 = vrot.slane %v648, 5
        %v722 = vrot.slane %v721, 4
        %v723 = vrot.slane %v215, 5
        %v724 = vsel %vm713, %v722, %v723
        %v725 = vrot.slane %v723, 4
        %v726 = vrot.slane %v245, 5
        %v727 = vsel %vm713, %v725, %v726
        %v728 = vrot.slane %v649, 5
        %v729 = vrot.slane %v728, 4
        %v730 = vrot.slane %v217, 5
        %v731 = vsel %vm713, %v729, %v730
        %v732 = vrot.slane %v730, 4
        %v733 = vrot.slane %v246, 5
        %v734 = vsel %vm713, %v732, %v733
        %v735 = vrot.slane %v650, 5
        %v736 = vrot.slane %v735, 4
        %v737 = vrot.slane %v219, 5
        %v738 = vsel %vm713, %v736, %v737
        %v739 = vrot.slane %v737, 4
        %v740 = vrot.slane %v247, 5
        %v741 = vsel %vm713, %v739, %v740
        %v742 = vrot.slane %v651, 5
        %v743 = vrot.slane %v742, 4
        %v744 = vrot.slane %v221, 5
        %v745 = vsel %vm713, %v743, %v744
        %v746 = vrot.slane %v744, 4
        %v747 = vrot.slane %v248, 5
        %v748 = vsel %vm713, %v746, %v747
        %v749 = vrot.slane %v652, 5
        %v750 = vrot.slane %v749, 4
        %v751 = vrot.slane %v223, 5
        %v752 = vsel %vm713, %v750, %v751
        %v753 = vrot.slane %v751, 4
        %v754 = vrot.slane %v249, 5
        %v755 = vsel %vm713, %v753, %v754
        %v756 = vrot.slane %v653, 5
        %v757 = vrot.slane %v756, 4
        %v758 = vrot.slane %v225, 5
        %v759 = vsel %vm713, %v757, %v758
        %v760 = vrot.slane %v758, 4
        %v761 = vrot.slane %v250, 5
        %v762 = vsel %vm713, %v760, %v761
        %v763 = vrot.slane %v654, 5
        %v764 = vrot.slane %v763, 4
        %v765 = vrot.slane %v227, 5
        %v766 = vsel %vm713, %v764, %v765
        %v767 = vrot.slane %v765, 4
        %v768 = vrot.slane %v251, 5
        %v769 = vsel %vm713, %v767, %v768
        %v770 = vrot.slane %v655, 5
        %v771 = vrot.slane %v770, 4
        %v772 = vrot.slane %v229, 5
        %v773 = vsel %vm713, %v771, %v772
        %v774 = vrot.slane %v772, 4
        %v775 = vrot.slane %v252, 5
        %v776 = vsel %vm713, %v774, %v775
        %v777 = vrot.slane %v656, 5
        %v778 = vrot.slane %v777, 4
        %v779 = vrot.slane %v231, 5
        %v780 = vsel %vm713, %v778, %v779
        %v781 = vrot.slane %v779, 4
        %v782 = vrot.slane %v253, 5
        %v783 = vsel %vm713, %v781, %v782
        %v784 = vrot.slane %v657, 5
        %v785 = vrot.slane %v784, 4
        %v786 = vrot.slane %v233, 5
        %v787 = vsel %vm713, %v785, %v786
        %v788 = vrot.slane %v786, 4
        %v789 = vrot.slane %v254, 5
        %v790 = vsel %vm713, %v788, %v789
        %v791 = vrot.slane %v658, 5
        %v792 = vrot.slane %v791, 4
        %v793 = vrot.slane %v235, 5
        %v794 = vsel %vm713, %v792, %v793
        %v795 = vrot.slane %v793, 4
        %v796 = vrot.slane %v255, 5
        %v797 = vsel %vm713, %v795, %v796
        %v798 = vrot.slane %v659, 5
        %v799 = vrot.slane %v798, 4
        %v800 = vrot.slane %v237, 5
        %v801 = vsel %vm713, %v799, %v800
        %v802 = vrot.slane %v800, 4
        %v803 = vrot.slane %v256, 5
        %v804 = vsel %vm713, %v802, %v803
        %v805 = vrot.slane %v660, 5
        %v806 = vrot.slane %v805, 4
        %v807 = vrot.slane %v239, 5
        %v808 = vsel %vm713, %v806, %v807
        %v809 = vrot.slane %v807, 4
        %v810 = vrot.slane %v257, 5
        %v811 = vsel %vm713, %v809, %v810
        %v812 = vrot.slane %v661, 5
        %v813 = vrot.slane %v812, 4
        %v814 = vrot.slane %v241, 5
        %v815 = vsel %vm713, %v813, %v814
        %v816 = vrot.slane %v814, 4
        %v817 = vrot.slane %v258, 5
        %v818 = vsel %vm713, %v816, %v817
        %v819 = vrot.slane %v662, 5
        %v820 = vrot.slane %v819, 4
        %v821 = vrot.slane %v243, 5
        %v822 = vsel %vm713, %v820, %v821
        %v823 = vrot.slane %v821, 4
        %v824 = vrot.slane %v259, 5
        %v825 = vsel %vm713, %v823, %v824
        %s826 = scalar_lea.vmem %s211, 12
        %v827 = vld [vmem:[%s826] sm:$0xf]
        %v828 = vld [vmem:[%s826 + $0x4] sm:$0xf]
        %v829 = vld [vmem:[%s826 + $0xc] sm:$0xf]
        %v830 = vld [vmem:[%s826 + $0x10] sm:$0xf]
        %v831 = vld [vmem:[%s826 + $0x18] sm:$0xf]
        %v832 = vld [vmem:[%s826 + $0x1c] sm:$0xf]
        %v833 = vld [vmem:[%s826 + $0x24] sm:$0xf]
        %v834 = vld [vmem:[%s826 + $0x28] sm:$0xf]
        %v835 = vld [vmem:[%s826 + $0x30] sm:$0xf]
        %v836 = vld [vmem:[%s826 + $0x34] sm:$0xf]
        %v837 = vld [vmem:[%s826 + $0x3c] sm:$0xf]
        %v838 = vld [vmem:[%s826 + $0x40] sm:$0xf]
        %v839 = vld [vmem:[%s826 + $0x48] sm:$0xf]
        %v840 = vld [vmem:[%s826 + $0x4c] sm:$0xf]
        %v841 = vld [vmem:[%s826 + $0x54] sm:$0xf]
        %v842 = vld [vmem:[%s826 + $0x58] sm:$0xf]
        %v843 = vld [vmem:[%s826 + $0x60] sm:$0xf]
        %v844 = vld [vmem:[%s826 + $0x64] sm:$0xf]
        %v845 = vld [vmem:[%s826 + $0x6c] sm:$0xf]
        %v846 = vld [vmem:[%s826 + $0x70] sm:$0xf]
        %v847 = vld [vmem:[%s826 + $0x78] sm:$0xf]
        %v848 = vld [vmem:[%s826 + $0x7c] sm:$0xf]
        %v849 = vld [vmem:[%s826 + $0x84] sm:$0xf]
        %v850 = vld [vmem:[%s826 + $0x88] sm:$0xf]
        %v851 = vld [vmem:[%s826 + $0x90] sm:$0xf]
        %v852 = vld [vmem:[%s826 + $0x94] sm:$0xf]
        %v853 = vld [vmem:[%s826 + $0x9c] sm:$0xf]
        %v854 = vld [vmem:[%s826 + $0xa0] sm:$0xf]
        %v855 = vld [vmem:[%s826 + $0xa8] sm:$0xf]
        %v856 = vld [vmem:[%s826 + $0xac] sm:$0xf]
        %v857 = vld [vmem:[%s826 + $0xb4] sm:$0xf]
        %v858 = vld [vmem:[%s826 + $0xb8] sm:$0xf]
        %v859 = vld [vmem:[%s826 + $0x8] sm:$0x1]
        %v860 = vld [vmem:[%s826 + $0x14] sm:$0x1]
        %v861 = vld [vmem:[%s826 + $0x20] sm:$0x1]
        %v862 = vld [vmem:[%s826 + $0x2c] sm:$0x1]
        %v863 = vld [vmem:[%s826 + $0x38] sm:$0x1]
        %v864 = vld [vmem:[%s826 + $0x44] sm:$0x1]
        %v865 = vld [vmem:[%s826 + $0x50] sm:$0x1]
        %v866 = vld [vmem:[%s826 + $0x5c] sm:$0x1]
        %v867 = vld [vmem:[%s826 + $0x68] sm:$0x1]
        %v868 = vld [vmem:[%s826 + $0x74] sm:$0x1]
        %v869 = vld [vmem:[%s826 + $0x80] sm:$0x1]
        %v870 = vld [vmem:[%s826 + $0x8c] sm:$0x1]
        %v871 = vld [vmem:[%s826 + $0x98] sm:$0x1]
        %v872 = vld [vmem:[%s826 + $0xa4] sm:$0x1]
        %v873 = vld [vmem:[%s826 + $0xb0] sm:$0x1]
        %v874 = vld [vmem:[%s826 + $0xbc] sm:$0x1]
        %v876 = vshrl.u32 %v827, 16
        %v878 = vrot.slane %v876, 4
        %v879 = vshll.u32 %v827, 16
        %v881 = vrot.slane %v879, 5
        %v882 = vor.u32 %v878, %v881
        %v883 = vrot.slane %v882, 4
        %v885 = vshll.u32 %v828, 16
        %v887 = vrot.slane %v885, 5
        %v888 = vsel %vm262, %v883, %v887
        %v889 = vshrl.u32 %v828, 16
        %v891 = vrot.slane %v889, 4
        %v892 = vor.u32 %v891, %v887
        %v893 = vrot.slane %v892, 4
        %v895 = vshll.u32 %v859, 16
        %v897 = vrot.slane %v895, 5
        %v898 = vsel %vm262, %v893, %v897
        %v900 = vshrl.u32 %v829, 16
        %v902 = vrot.slane %v900, 4
        %v903 = vshll.u32 %v829, 16
        %v905 = vrot.slane %v903, 5
        %v906 = vor.u32 %v902, %v905
        %v907 = vrot.slane %v906, 4
        %v909 = vshll.u32 %v830, 16
        %v911 = vrot.slane %v909, 5
        %v912 = vsel %vm262, %v907, %v911
        %v913 = vshrl.u32 %v830, 16
        %v915 = vrot.slane %v913, 4
        %v916 = vor.u32 %v915, %v911
        %v917 = vrot.slane %v916, 4
        %v919 = vshll.u32 %v860, 16
        %v921 = vrot.slane %v919, 5
        %v922 = vsel %vm262, %v917, %v921
        %v924 = vshrl.u32 %v831, 16
        %v926 = vrot.slane %v924, 4
        %v927 = vshll.u32 %v831, 16
        %v929 = vrot.slane %v927, 5
        %v930 = vor.u32 %v926, %v929
        %v931 = vrot.slane %v930, 4
        %v933 = vshll.u32 %v832, 16
        %v935 = vrot.slane %v933, 5
        %v936 = vsel %vm262, %v931, %v935
        %v937 = vshrl.u32 %v832, 16
        %v939 = vrot.slane %v937, 4
        %v940 = vor.u32 %v939, %v935
        %v941 = vrot.slane %v940, 4
        %v943 = vshll.u32 %v861, 16
        %v945 = vrot.slane %v943, 5
        %v946 = vsel %vm262, %v941, %v945
        %v948 = vshrl.u32 %v833, 16
        %v950 = vrot.slane %v948, 4
        %v951 = vshll.u32 %v833, 16
        %v953 = vrot.slane %v951, 5
        %v954 = vor.u32 %v950, %v953
        %v955 = vrot.slane %v954, 4
        %v957 = vshll.u32 %v834, 16
        %v959 = vrot.slane %v957, 5
        %v960 = vsel %vm262, %v955, %v959
        %v961 = vshrl.u32 %v834, 16
        %v963 = vrot.slane %v961, 4
        %v964 = vor.u32 %v963, %v959
        %v965 = vrot.slane %v964, 4
        %v967 = vshll.u32 %v862, 16
        %v969 = vrot.slane %v967, 5
        %v970 = vsel %vm262, %v965, %v969
        %v972 = vshrl.u32 %v835, 16
        %v974 = vrot.slane %v972, 4
        %v975 = vshll.u32 %v835, 16
        %v977 = vrot.slane %v975, 5
        %v978 = vor.u32 %v974, %v977
        %v979 = vrot.slane %v978, 4
        %v981 = vshll.u32 %v836, 16
        %v983 = vrot.slane %v981, 5
        %v984 = vsel %vm262, %v979, %v983
        %v985 = vshrl.u32 %v836, 16
        %v987 = vrot.slane %v985, 4
        %v988 = vor.u32 %v987, %v983
        %v989 = vrot.slane %v988, 4
        %v991 = vshll.u32 %v863, 16
        %v993 = vrot.slane %v991, 5
        %v994 = vsel %vm262, %v989, %v993
        %v996 = vshrl.u32 %v837, 16
        %v998 = vrot.slane %v996, 4
        %v999 = vshll.u32 %v837, 16
        %v1001 = vrot.slane %v999, 5
        %v1002 = vor.u32 %v998, %v1001
        %v1003 = vrot.slane %v1002, 4
        %v1005 = vshll.u32 %v838, 16
        %v1007 = vrot.slane %v1005, 5
        %v1008 = vsel %vm262, %v1003, %v1007
        %v1009 = vshrl.u32 %v838, 16
        %v1011 = vrot.slane %v1009, 4
        %v1012 = vor.u32 %v1011, %v1007
        %v1013 = vrot.slane %v1012, 4
        %v1015 = vshll.u32 %v864, 16
        %v1017 = vrot.slane %v1015, 5
        %v1018 = vsel %vm262, %v1013, %v1017
        %v1020 = vshrl.u32 %v839, 16
        %v1022 = vrot.slane %v1020, 4
        %v1023 = vshll.u32 %v839, 16
        %v1025 = vrot.slane %v1023, 5
        %v1026 = vor.u32 %v1022, %v1025
        %v1027 = vrot.slane %v1026, 4
        %v1029 = vshll.u32 %v840, 16
        %v1031 = vrot.slane %v1029, 5
        %v1032 = vsel %vm262, %v1027, %v1031
        %v1033 = vshrl.u32 %v840, 16
        %v1035 = vrot.slane %v1033, 4
        %v1036 = vor.u32 %v1035, %v1031
        %v1037 = vrot.slane %v1036, 4
        %v1039 = vshll.u32 %v865, 16
        %v1041 = vrot.slane %v1039, 5
        %v1042 = vsel %vm262, %v1037, %v1041
        %v1044 = vshrl.u32 %v841, 16
        %v1046 = vrot.slane %v1044, 4
        %v1047 = vshll.u32 %v841, 16
        %v1049 = vrot.slane %v1047, 5
        %v1050 = vor.u32 %v1046, %v1049
        %v1051 = vrot.slane %v1050, 4
        %v1053 = vshll.u32 %v842, 16
        %v1055 = vrot.slane %v1053, 5
        %v1056 = vsel %vm262, %v1051, %v1055
        %v1057 = vshrl.u32 %v842, 16
        %v1059 = vrot.slane %v1057, 4
        %v1060 = vor.u32 %v1059, %v1055
        %v1061 = vrot.slane %v1060, 4
        %v1063 = vshll.u32 %v866, 16
        %v1065 = vrot.slane %v1063, 5
        %v1066 = vsel %vm262, %v1061, %v1065
        %v1068 = vshrl.u32 %v843, 16
        %v1070 = vrot.slane %v1068, 4
        %v1071 = vshll.u32 %v843, 16
        %v1073 = vrot.slane %v1071, 5
        %v1074 = vor.u32 %v1070, %v1073
        %v1075 = vrot.slane %v1074, 4
        %v1077 = vshll.u32 %v844, 16
        %v1079 = vrot.slane %v1077, 5
        %v1080 = vsel %vm262, %v1075, %v1079
        %v1081 = vshrl.u32 %v844, 16
        %v1083 = vrot.slane %v1081, 4
        %v1084 = vor.u32 %v1083, %v1079
        %v1085 = vrot.slane %v1084, 4
        %v1087 = vshll.u32 %v867, 16
        %v1089 = vrot.slane %v1087, 5
        %v1090 = vsel %vm262, %v1085, %v1089
        %v1092 = vshrl.u32 %v845, 16
        %v1094 = vrot.slane %v1092, 4
        %v1095 = vshll.u32 %v845, 16
        %v1097 = vrot.slane %v1095, 5
        %v1098 = vor.u32 %v1094, %v1097
        %v1099 = vrot.slane %v1098, 4
        %v1101 = vshll.u32 %v846, 16
        %v1103 = vrot.slane %v1101, 5
        %v1104 = vsel %vm262, %v1099, %v1103
        %v1105 = vshrl.u32 %v846, 16
        %v1107 = vrot.slane %v1105, 4
        %v1108 = vor.u32 %v1107, %v1103
        %v1109 = vrot.slane %v1108, 4
        %v1111 = vshll.u32 %v868, 16
        %v1113 = vrot.slane %v1111, 5
        %v1114 = vsel %vm262, %v1109, %v1113
        %v1116 = vshrl.u32 %v847, 16
        %v1118 = vrot.slane %v1116, 4
        %v1119 = vshll.u32 %v847, 16
        %v1121 = vrot.slane %v1119, 5
        %v1122 = vor.u32 %v1118, %v1121
        %v1123 = vrot.slane %v1122, 4
        %v1125 = vshll.u32 %v848, 16
        %v1127 = vrot.slane %v1125, 5
        %v1128 = vsel %vm262, %v1123, %v1127
        %v1129 = vshrl.u32 %v848, 16
        %v1131 = vrot.slane %v1129, 4
        %v1132 = vor.u32 %v1131, %v1127
        %v1133 = vrot.slane %v1132, 4
        %v1135 = vshll.u32 %v869, 16
        %v1137 = vrot.slane %v1135, 5
        %v1138 = vsel %vm262, %v1133, %v1137
        %v1140 = vshrl.u32 %v849, 16
        %v1142 = vrot.slane %v1140, 4
        %v1143 = vshll.u32 %v849, 16
        %v1145 = vrot.slane %v1143, 5
        %v1146 = vor.u32 %v1142, %v1145
        %v1147 = vrot.slane %v1146, 4
        %v1149 = vshll.u32 %v850, 16
        %v1151 = vrot.slane %v1149, 5
        %v1152 = vsel %vm262, %v1147, %v1151
        %v1153 = vshrl.u32 %v850, 16
        %v1155 = vrot.slane %v1153, 4
        %v1156 = vor.u32 %v1155, %v1151
        %v1157 = vrot.slane %v1156, 4
        %v1159 = vshll.u32 %v870, 16
        %v1161 = vrot.slane %v1159, 5
        %v1162 = vsel %vm262, %v1157, %v1161
        %v1164 = vshrl.u32 %v851, 16
        %v1166 = vrot.slane %v1164, 4
        %v1167 = vshll.u32 %v851, 16
        %v1169 = vrot.slane %v1167, 5
        %v1170 = vor.u32 %v1166, %v1169
        %v1171 = vrot.slane %v1170, 4
        %v1173 = vshll.u32 %v852, 16
        %v1175 = vrot.slane %v1173, 5
        %v1176 = vsel %vm262, %v1171, %v1175
        %v1177 = vshrl.u32 %v852, 16
        %v1179 = vrot.slane %v1177, 4
        %v1180 = vor.u32 %v1179, %v1175
        %v1181 = vrot.slane %v1180, 4
        %v1183 = vshll.u32 %v871, 16
        %v1185 = vrot.slane %v1183, 5
        %v1186 = vsel %vm262, %v1181, %v1185
        %v1188 = vshrl.u32 %v853, 16
        %v1190 = vrot.slane %v1188, 4
        %v1191 = vshll.u32 %v853, 16
        %v1193 = vrot.slane %v1191, 5
        %v1194 = vor.u32 %v1190, %v1193
        %v1195 = vrot.slane %v1194, 4
        %v1197 = vshll.u32 %v854, 16
        %v1199 = vrot.slane %v1197, 5
        %v1200 = vsel %vm262, %v1195, %v1199
        %v1201 = vshrl.u32 %v854, 16
        %v1203 = vrot.slane %v1201, 4
        %v1204 = vor.u32 %v1203, %v1199
        %v1205 = vrot.slane %v1204, 4
        %v1207 = vshll.u32 %v872, 16
        %v1209 = vrot.slane %v1207, 5
        %v1210 = vsel %vm262, %v1205, %v1209
        %v1212 = vshrl.u32 %v855, 16
        %v1214 = vrot.slane %v1212, 4
        %v1215 = vshll.u32 %v855, 16
        %v1217 = vrot.slane %v1215, 5
        %v1218 = vor.u32 %v1214, %v1217
        %v1219 = vrot.slane %v1218, 4
        %v1221 = vshll.u32 %v856, 16
        %v1223 = vrot.slane %v1221, 5
        %v1224 = vsel %vm262, %v1219, %v1223
        %v1225 = vshrl.u32 %v856, 16
        %v1227 = vrot.slane %v1225, 4
        %v1228 = vor.u32 %v1227, %v1223
        %v1229 = vrot.slane %v1228, 4
        %v1231 = vshll.u32 %v873, 16
        %v1233 = vrot.slane %v1231, 5
        %v1234 = vsel %vm262, %v1229, %v1233
        %v1236 = vshrl.u32 %v857, 16
        %v1238 = vrot.slane %v1236, 4
        %v1239 = vshll.u32 %v857, 16
        %v1241 = vrot.slane %v1239, 5
        %v1242 = vor.u32 %v1238, %v1241
        %v1243 = vrot.slane %v1242, 4
        %v1245 = vshll.u32 %v858, 16
        %v1247 = vrot.slane %v1245, 5
        %v1248 = vsel %vm262, %v1243, %v1247
        %v1249 = vshrl.u32 %v858, 16
        %v1251 = vrot.slane %v1249, 4
        %v1252 = vor.u32 %v1251, %v1247
        %v1253 = vrot.slane %v1252, 4
        %v1255 = vshll.u32 %v874, 16
        %v1257 = vrot.slane %v1255, 5
        %v1258 = vsel %vm262, %v1253, %v1257
        %v1259 = vld [vmem:[%s826] sm:$0xe]
        %v1260 = vld [vmem:[%s826 + $0xc] sm:$0xe]
        %v1261 = vld [vmem:[%s826 + $0x18] sm:$0xe]
        %v1262 = vld [vmem:[%s826 + $0x24] sm:$0xe]
        %v1263 = vld [vmem:[%s826 + $0x30] sm:$0xe]
        %v1264 = vld [vmem:[%s826 + $0x3c] sm:$0xe]
        %v1265 = vld [vmem:[%s826 + $0x48] sm:$0xe]
        %v1266 = vld [vmem:[%s826 + $0x54] sm:$0xe]
        %v1267 = vld [vmem:[%s826 + $0x60] sm:$0xe]
        %v1268 = vld [vmem:[%s826 + $0x6c] sm:$0xe]
        %v1269 = vld [vmem:[%s826 + $0x78] sm:$0xe]
        %v1270 = vld [vmem:[%s826 + $0x84] sm:$0xe]
        %v1271 = vld [vmem:[%s826 + $0x90] sm:$0xe]
        %v1272 = vld [vmem:[%s826 + $0x9c] sm:$0xe]
        %v1273 = vld [vmem:[%s826 + $0xa8] sm:$0xe]
        %v1274 = vld [vmem:[%s826 + $0xb4] sm:$0xe]
        %v1323 = vrot.slane %v1259, 5
        %v1324 = vrot.slane %v1323, 4
        %v1325 = vrot.slane %v828, 5
        %v1326 = vsel %vm713, %v1324, %v1325
        %v1327 = vrot.slane %v1325, 4
        %v1328 = vrot.slane %v859, 5
        %v1329 = vsel %vm713, %v1327, %v1328
        %v1330 = vrot.slane %v1260, 5
        %v1331 = vrot.slane %v1330, 4
        %v1332 = vrot.slane %v830, 5
        %v1333 = vsel %vm713, %v1331, %v1332
        %v1334 = vrot.slane %v1332, 4
        %v1335 = vrot.slane %v860, 5
        %v1336 = vsel %vm713, %v1334, %v1335
        %v1337 = vrot.slane %v1261, 5
        %v1338 = vrot.slane %v1337, 4
        %v1339 = vrot.slane %v832, 5
        %v1340 = vsel %vm713, %v1338, %v1339
        %v1341 = vrot.slane %v1339, 4
        %v1342 = vrot.slane %v861, 5
        %v1343 = vsel %vm713, %v1341, %v1342
        %v1344 = vrot.slane %v1262, 5
        %v1345 = vrot.slane %v1344, 4
        %v1346 = vrot.slane %v834, 5
        %v1347 = vsel %vm713, %v1345, %v1346
        %v1348 = vrot.slane %v1346, 4
        %v1349 = vrot.slane %v862, 5
        %v1350 = vsel %vm713, %v1348, %v1349
        %v1351 = vrot.slane %v1263, 5
        %v1352 = vrot.slane %v1351, 4
        %v1353 = vrot.slane %v836, 5
        %v1354 = vsel %vm713, %v1352, %v1353
        %v1355 = vrot.slane %v1353, 4
        %v1356 = vrot.slane %v863, 5
        %v1357 = vsel %vm713, %v1355, %v1356
        %v1358 = vrot.slane %v1264, 5
        %v1359 = vrot.slane %v1358, 4
        %v1360 = vrot.slane %v838, 5
        %v1361 = vsel %vm713, %v1359, %v1360
        %v1362 = vrot.slane %v1360, 4
        %v1363 = vrot.slane %v864, 5
        %v1364 = vsel %vm713, %v1362, %v1363
        %v1365 = vrot.slane %v1265, 5
        %v1366 = vrot.slane %v1365, 4
        %v1367 = vrot.slane %v840, 5
        %v1368 = vsel %vm713, %v1366, %v1367
        %v1369 = vrot.slane %v1367, 4
        %v1370 = vrot.slane %v865, 5
        %v1371 = vsel %vm713, %v1369, %v1370
        %v1372 = vrot.slane %v1266, 5
        %v1373 = vrot.slane %v1372, 4
        %v1374 = vrot.slane %v842, 5
        %v1375 = vsel %vm713, %v1373, %v1374
        %v1376 = vrot.slane %v1374, 4
        %v1377 = vrot.slane %v866, 5
        %v1378 = vsel %vm713, %v1376, %v1377
        %v1379 = vrot.slane %v1267, 5
        %v1380 = vrot.slane %v1379, 4
        %v1381 = vrot.slane %v844, 5
        %v1382 = vsel %vm713, %v1380, %v1381
        %v1383 = vrot.slane %v1381, 4
        %v1384 = vrot.slane %v867, 5
        %v1385 = vsel %vm713, %v1383, %v1384
        %v1386 = vrot.slane %v1268, 5
        %v1387 = vrot.slane %v1386, 4
        %v1388 = vrot.slane %v846, 5
        %v1389 = vsel %vm713, %v1387, %v1388
        %v1390 = vrot.slane %v1388, 4
        %v1391 = vrot.slane %v868, 5
        %v1392 = vsel %vm713, %v1390, %v1391
        %v1393 = vrot.slane %v1269, 5
        %v1394 = vrot.slane %v1393, 4
        %v1395 = vrot.slane %v848, 5
        %v1396 = vsel %vm713, %v1394, %v1395
        %v1397 = vrot.slane %v1395, 4
        %v1398 = vrot.slane %v869, 5
        %v1399 = vsel %vm713, %v1397, %v1398
        %v1400 = vrot.slane %v1270, 5
        %v1401 = vrot.slane %v1400, 4
        %v1402 = vrot.slane %v850, 5
        %v1403 = vsel %vm713, %v1401, %v1402
        %v1404 = vrot.slane %v1402, 4
        %v1405 = vrot.slane %v870, 5
        %v1406 = vsel %vm713, %v1404, %v1405
        %v1407 = vrot.slane %v1271, 5
        %v1408 = vrot.slane %v1407, 4
        %v1409 = vrot.slane %v852, 5
        %v1410 = vsel %vm713, %v1408, %v1409
        %v1411 = vrot.slane %v1409, 4
        %v1412 = vrot.slane %v871, 5
        %v1413 = vsel %vm713, %v1411, %v1412
        %v1414 = vrot.slane %v1272, 5
        %v1415 = vrot.slane %v1414, 4
        %v1416 = vrot.slane %v854, 5
        %v1417 = vsel %vm713, %v1415, %v1416
        %v1418 = vrot.slane %v1416, 4
        %v1419 = vrot.slane %v872, 5
        %v1420 = vsel %vm713, %v1418, %v1419
        %v1421 = vrot.slane %v1273, 5
        %v1422 = vrot.slane %v1421, 4
        %v1423 = vrot.slane %v856, 5
        %v1424 = vsel %vm713, %v1422, %v1423
        %v1425 = vrot.slane %v1423, 4
        %v1426 = vrot.slane %v873, 5
        %v1427 = vsel %vm713, %v1425, %v1426
        %v1428 = vrot.slane %v1274, 5
        %v1429 = vrot.slane %v1428, 4
        %v1430 = vrot.slane %v858, 5
        %v1431 = vsel %vm713, %v1429, %v1430
        %v1432 = vrot.slane %v1430, 4
        %v1433 = vrot.slane %v874, 5
        %v1434 = vsel %vm713, %v1432, %v1433
        %s1435 = scalar_lea.vmem %s211, 24
        %v1436 = vld [vmem:[%s1435] sm:$0xf]
        %v1437 = vld [vmem:[%s1435 + $0x4] sm:$0xf]
        %v1438 = vld [vmem:[%s1435 + $0xc] sm:$0xf]
        %v1439 = vld [vmem:[%s1435 + $0x10] sm:$0xf]
        %v1440 = vld [vmem:[%s1435 + $0x18] sm:$0xf]
        %v1441 = vld [vmem:[%s1435 + $0x1c] sm:$0xf]
        %v1442 = vld [vmem:[%s1435 + $0x24] sm:$0xf]
        %v1443 = vld [vmem:[%s1435 + $0x28] sm:$0xf]
        %v1444 = vld [vmem:[%s1435 + $0x30] sm:$0xf]
        %v1445 = vld [vmem:[%s1435 + $0x34] sm:$0xf]
        %v1446 = vld [vmem:[%s1435 + $0x3c] sm:$0xf]
        %v1447 = vld [vmem:[%s1435 + $0x40] sm:$0xf]
        %v1448 = vld [vmem:[%s1435 + $0x48] sm:$0xf]
        %v1449 = vld [vmem:[%s1435 + $0x4c] sm:$0xf]
        %v1450 = vld [vmem:[%s1435 + $0x54] sm:$0xf]
        %v1451 = vld [vmem:[%s1435 + $0x58] sm:$0xf]
        %v1452 = vld [vmem:[%s1435 + $0x60] sm:$0xf]
        %v1453 = vld [vmem:[%s1435 + $0x64] sm:$0xf]
        %v1454 = vld [vmem:[%s1435 + $0x6c] sm:$0xf]
        %v1455 = vld [vmem:[%s1435 + $0x70] sm:$0xf]
        %v1456 = vld [vmem:[%s1435 + $0x78] sm:$0xf]
        %v1457 = vld [vmem:[%s1435 + $0x7c] sm:$0xf]
        %v1458 = vld [vmem:[%s1435 + $0x84] sm:$0xf]
        %v1459 = vld [vmem:[%s1435 + $0x88] sm:$0xf]
        %v1460 = vld [vmem:[%s1435 + $0x90] sm:$0xf]
        %v1461 = vld [vmem:[%s1435 + $0x94] sm:$0xf]
        %v1462 = vld [vmem:[%s1435 + $0x9c] sm:$0xf]
        %v1463 = vld [vmem:[%s1435 + $0xa0] sm:$0xf]
        %v1464 = vld [vmem:[%s1435 + $0xa8] sm:$0xf]
        %v1465 = vld [vmem:[%s1435 + $0xac] sm:$0xf]
        %v1466 = vld [vmem:[%s1435 + $0xb4] sm:$0xf]
        %v1467 = vld [vmem:[%s1435 + $0xb8] sm:$0xf]
        %v1468 = vld [vmem:[%s1435 + $0x8] sm:$0x1]
        %v1469 = vld [vmem:[%s1435 + $0x14] sm:$0x1]
        %v1470 = vld [vmem:[%s1435 + $0x20] sm:$0x1]
        %v1471 = vld [vmem:[%s1435 + $0x2c] sm:$0x1]
        %v1472 = vld [vmem:[%s1435 + $0x38] sm:$0x1]
        %v1473 = vld [vmem:[%s1435 + $0x44] sm:$0x1]
        %v1474 = vld [vmem:[%s1435 + $0x50] sm:$0x1]
        %v1475 = vld [vmem:[%s1435 + $0x5c] sm:$0x1]
        %v1476 = vld [vmem:[%s1435 + $0x68] sm:$0x1]
        %v1477 = vld [vmem:[%s1435 + $0x74] sm:$0x1]
        %v1478 = vld [vmem:[%s1435 + $0x80] sm:$0x1]
        %v1479 = vld [vmem:[%s1435 + $0x8c] sm:$0x1]
        %v1480 = vld [vmem:[%s1435 + $0x98] sm:$0x1]
        %v1481 = vld [vmem:[%s1435 + $0xa4] sm:$0x1]
        %v1482 = vld [vmem:[%s1435 + $0xb0] sm:$0x1]
        %v1483 = vld [vmem:[%s1435 + $0xbc] sm:$0x1]
        %v1485 = vshrl.u32 %v1436, 16
        %v1487 = vrot.slane %v1485, 4
        %v1488 = vshll.u32 %v1436, 16
        %v1490 = vrot.slane %v1488, 5
        %v1491 = vor.u32 %v1487, %v1490
        %v1492 = vrot.slane %v1491, 4
        %v1494 = vshll.u32 %v1437, 16
        %v1496 = vrot.slane %v1494, 5
        %v1497 = vsel %vm262, %v1492, %v1496
        %v1498 = vshrl.u32 %v1437, 16
        %v1500 = vrot.slane %v1498, 4
        %v1501 = vor.u32 %v1500, %v1496
        %v1502 = vrot.slane %v1501, 4
        %v1504 = vshll.u32 %v1468, 16
        %v1506 = vrot.slane %v1504, 5
        %v1507 = vsel %vm262, %v1502, %v1506
        %v1509 = vshrl.u32 %v1438, 16
        %v1511 = vrot.slane %v1509, 4
        %v1512 = vshll.u32 %v1438, 16
        %v1514 = vrot.slane %v1512, 5
        %v1515 = vor.u32 %v1511, %v1514
        %v1516 = vrot.slane %v1515, 4
        %v1518 = vshll.u32 %v1439, 16
        %v1520 = vrot.slane %v1518, 5
        %v1521 = vsel %vm262, %v1516, %v1520
        %v1522 = vshrl.u32 %v1439, 16
        %v1524 = vrot.slane %v1522, 4
        %v1525 = vor.u32 %v1524, %v1520
        %v1526 = vrot.slane %v1525, 4
        %v1528 = vshll.u32 %v1469, 16
        %v1530 = vrot.slane %v1528, 5
        %v1531 = vsel %vm262, %v1526, %v1530
        %v1533 = vshrl.u32 %v1440, 16
        %v1535 = vrot.slane %v1533, 4
        %v1536 = vshll.u32 %v1440, 16
        %v1538 = vrot.slane %v1536, 5
        %v1539 = vor.u32 %v1535, %v1538
        %v1540 = vrot.slane %v1539, 4
        %v1542 = vshll.u32 %v1441, 16
        %v1544 = vrot.slane %v1542, 5
        %v1545 = vsel %vm262, %v1540, %v1544
        %v1546 = vshrl.u32 %v1441, 16
        %v1548 = vrot.slane %v1546, 4
        %v1549 = vor.u32 %v1548, %v1544
        %v1550 = vrot.slane %v1549, 4
        %v1552 = vshll.u32 %v1470, 16
        %v1554 = vrot.slane %v1552, 5
        %v1555 = vsel %vm262, %v1550, %v1554
        %v1557 = vshrl.u32 %v1442, 16
        %v1559 = vrot.slane %v1557, 4
        %v1560 = vshll.u32 %v1442, 16
        %v1562 = vrot.slane %v1560, 5
        %v1563 = vor.u32 %v1559, %v1562
        %v1564 = vrot.slane %v1563, 4
        %v1566 = vshll.u32 %v1443, 16
        %v1568 = vrot.slane %v1566, 5
        %v1569 = vsel %vm262, %v1564, %v1568
        %v1570 = vshrl.u32 %v1443, 16
        %v1572 = vrot.slane %v1570, 4
        %v1573 = vor.u32 %v1572, %v1568
        %v1574 = vrot.slane %v1573, 4
        %v1576 = vshll.u32 %v1471, 16
        %v1578 = vrot.slane %v1576, 5
        %v1579 = vsel %vm262, %v1574, %v1578
        %v1581 = vshrl.u32 %v1444, 16
        %v1583 = vrot.slane %v1581, 4
        %v1584 = vshll.u32 %v1444, 16
        %v1586 = vrot.slane %v1584, 5
        %v1587 = vor.u32 %v1583, %v1586
        %v1588 = vrot.slane %v1587, 4
        %v1590 = vshll.u32 %v1445, 16
        %v1592 = vrot.slane %v1590, 5
        %v1593 = vsel %vm262, %v1588, %v1592
        %v1594 = vshrl.u32 %v1445, 16
        %v1596 = vrot.slane %v1594, 4
        %v1597 = vor.u32 %v1596, %v1592
        %v1598 = vrot.slane %v1597, 4
        %v1600 = vshll.u32 %v1472, 16
        %v1602 = vrot.slane %v1600, 5
        %v1603 = vsel %vm262, %v1598, %v1602
        %v1605 = vshrl.u32 %v1446, 16
        %v1607 = vrot.slane %v1605, 4
        %v1608 = vshll.u32 %v1446, 16
        %v1610 = vrot.slane %v1608, 5
        %v1611 = vor.u32 %v1607, %v1610
        %v1612 = vrot.slane %v1611, 4
        %v1614 = vshll.u32 %v1447, 16
        %v1616 = vrot.slane %v1614, 5
        %v1617 = vsel %vm262, %v1612, %v1616
        %v1618 = vshrl.u32 %v1447, 16
        %v1620 = vrot.slane %v1618, 4
        %v1621 = vor.u32 %v1620, %v1616
        %v1622 = vrot.slane %v1621, 4
        %v1624 = vshll.u32 %v1473, 16
        %v1626 = vrot.slane %v1624, 5
        %v1627 = vsel %vm262, %v1622, %v1626
        %v1629 = vshrl.u32 %v1448, 16
        %v1631 = vrot.slane %v1629, 4
        %v1632 = vshll.u32 %v1448, 16
        %v1634 = vrot.slane %v1632, 5
        %v1635 = vor.u32 %v1631, %v1634
        %v1636 = vrot.slane %v1635, 4
        %v1638 = vshll.u32 %v1449, 16
        %v1640 = vrot.slane %v1638, 5
        %v1641 = vsel %vm262, %v1636, %v1640
        %v1642 = vshrl.u32 %v1449, 16
        %v1644 = vrot.slane %v1642, 4
        %v1645 = vor.u32 %v1644, %v1640
        %v1646 = vrot.slane %v1645, 4
        %v1648 = vshll.u32 %v1474, 16
        %v1650 = vrot.slane %v1648, 5
        %v1651 = vsel %vm262, %v1646, %v1650
        %v1653 = vshrl.u32 %v1450, 16
        %v1655 = vrot.slane %v1653, 4
        %v1656 = vshll.u32 %v1450, 16
        %v1658 = vrot.slane %v1656, 5
        %v1659 = vor.u32 %v1655, %v1658
        %v1660 = vrot.slane %v1659, 4
        %v1662 = vshll.u32 %v1451, 16
        %v1664 = vrot.slane %v1662, 5
        %v1665 = vsel %vm262, %v1660, %v1664
        %v1666 = vshrl.u32 %v1451, 16
        %v1668 = vrot.slane %v1666, 4
        %v1669 = vor.u32 %v1668, %v1664
        %v1670 = vrot.slane %v1669, 4
        %v1672 = vshll.u32 %v1475, 16
        %v1674 = vrot.slane %v1672, 5
        %v1675 = vsel %vm262, %v1670, %v1674
        %v1677 = vshrl.u32 %v1452, 16
        %v1679 = vrot.slane %v1677, 4
        %v1680 = vshll.u32 %v1452, 16
        %v1682 = vrot.slane %v1680, 5
        %v1683 = vor.u32 %v1679, %v1682
        %v1684 = vrot.slane %v1683, 4
        %v1686 = vshll.u32 %v1453, 16
        %v1688 = vrot.slane %v1686, 5
        %v1689 = vsel %vm262, %v1684, %v1688
        %v1690 = vshrl.u32 %v1453, 16
        %v1692 = vrot.slane %v1690, 4
        %v1693 = vor.u32 %v1692, %v1688
        %v1694 = vrot.slane %v1693, 4
        %v1696 = vshll.u32 %v1476, 16
        %v1698 = vrot.slane %v1696, 5
        %v1699 = vsel %vm262, %v1694, %v1698
        %v1701 = vshrl.u32 %v1454, 16
        %v1703 = vrot.slane %v1701, 4
        %v1704 = vshll.u32 %v1454, 16
        %v1706 = vrot.slane %v1704, 5
        %v1707 = vor.u32 %v1703, %v1706
        %v1708 = vrot.slane %v1707, 4
        %v1710 = vshll.u32 %v1455, 16
        %v1712 = vrot.slane %v1710, 5
        %v1713 = vsel %vm262, %v1708, %v1712
        %v1714 = vshrl.u32 %v1455, 16
        %v1716 = vrot.slane %v1714, 4
        %v1717 = vor.u32 %v1716, %v1712
        %v1718 = vrot.slane %v1717, 4
        %v1720 = vshll.u32 %v1477, 16
        %v1722 = vrot.slane %v1720, 5
        %v1723 = vsel %vm262, %v1718, %v1722
        %v1725 = vshrl.u32 %v1456, 16
        %v1727 = vrot.slane %v1725, 4
        %v1728 = vshll.u32 %v1456, 16
        %v1730 = vrot.slane %v1728, 5
        %v1731 = vor.u32 %v1727, %v1730
        %v1732 = vrot.slane %v1731, 4
        %v1734 = vshll.u32 %v1457, 16
        %v1736 = vrot.slane %v1734, 5
        %v1737 = vsel %vm262, %v1732, %v1736
        %v1738 = vshrl.u32 %v1457, 16
        %v1740 = vrot.slane %v1738, 4
        %v1741 = vor.u32 %v1740, %v1736
        %v1742 = vrot.slane %v1741, 4
        %v1744 = vshll.u32 %v1478, 16
        %v1746 = vrot.slane %v1744, 5
        %v1747 = vsel %vm262, %v1742, %v1746
        %v1749 = vshrl.u32 %v1458, 16
        %v1751 = vrot.slane %v1749, 4
        %v1752 = vshll.u32 %v1458, 16
        %v1754 = vrot.slane %v1752, 5
        %v1755 = vor.u32 %v1751, %v1754
        %v1756 = vrot.slane %v1755, 4
        %v1758 = vshll.u32 %v1459, 16
        %v1760 = vrot.slane %v1758, 5
        %v1761 = vsel %vm262, %v1756, %v1760
        %v1762 = vshrl.u32 %v1459, 16
        %v1764 = vrot.slane %v1762, 4
        %v1765 = vor.u32 %v1764, %v1760
        %v1766 = vrot.slane %v1765, 4
        %v1768 = vshll.u32 %v1479, 16
        %v1770 = vrot.slane %v1768, 5
        %v1771 = vsel %vm262, %v1766, %v1770
        %v1773 = vshrl.u32 %v1460, 16
        %v1775 = vrot.slane %v1773, 4
        %v1776 = vshll.u32 %v1460, 16
        %v1778 = vrot.slane %v1776, 5
        %v1779 = vor.u32 %v1775, %v1778
        %v1780 = vrot.slane %v1779, 4
        %v1782 = vshll.u32 %v1461, 16
        %v1784 = vrot.slane %v1782, 5
        %v1785 = vsel %vm262, %v1780, %v1784
        %v1786 = vshrl.u32 %v1461, 16
        %v1788 = vrot.slane %v1786, 4
        %v1789 = vor.u32 %v1788, %v1784
        %v1790 = vrot.slane %v1789, 4
        %v1792 = vshll.u32 %v1480, 16
        %v1794 = vrot.slane %v1792, 5
        %v1795 = vsel %vm262, %v1790, %v1794
        %v1797 = vshrl.u32 %v1462, 16
        %v1799 = vrot.slane %v1797, 4
        %v1800 = vshll.u32 %v1462, 16
        %v1802 = vrot.slane %v1800, 5
        %v1803 = vor.u32 %v1799, %v1802
        %v1804 = vrot.slane %v1803, 4
        %v1806 = vshll.u32 %v1463, 16
        %v1808 = vrot.slane %v1806, 5
        %v1809 = vsel %vm262, %v1804, %v1808
        %v1810 = vshrl.u32 %v1463, 16
        %v1812 = vrot.slane %v1810, 4
        %v1813 = vor.u32 %v1812, %v1808
        %v1814 = vrot.slane %v1813, 4
        %v1816 = vshll.u32 %v1481, 16
        %v1818 = vrot.slane %v1816, 5
        %v1819 = vsel %vm262, %v1814, %v1818
        %v1821 = vshrl.u32 %v1464, 16
        %v1823 = vrot.slane %v1821, 4
        %v1824 = vshll.u32 %v1464, 16
        %v1826 = vrot.slane %v1824, 5
        %v1827 = vor.u32 %v1823, %v1826
        %v1828 = vrot.slane %v1827, 4
        %v1830 = vshll.u32 %v1465, 16
        %v1832 = vrot.slane %v1830, 5
        %v1833 = vsel %vm262, %v1828, %v1832
        %v1834 = vshrl.u32 %v1465, 16
        %v1836 = vrot.slane %v1834, 4
        %v1837 = vor.u32 %v1836, %v1832
        %v1838 = vrot.slane %v1837, 4
        %v1840 = vshll.u32 %v1482, 16
        %v1842 = vrot.slane %v1840, 5
        %v1843 = vsel %vm262, %v1838, %v1842
        %v1845 = vshrl.u32 %v1466, 16
        %v1847 = vrot.slane %v1845, 4
        %v1848 = vshll.u32 %v1466, 16
        %v1850 = vrot.slane %v1848, 5
        %v1851 = vor.u32 %v1847, %v1850
        %v1852 = vrot.slane %v1851, 4
        %v1854 = vshll.u32 %v1467, 16
        %v1856 = vrot.slane %v1854, 5
        %v1857 = vsel %vm262, %v1852, %v1856
        %v1858 = vshrl.u32 %v1467, 16
        %v1860 = vrot.slane %v1858, 4
        %v1861 = vor.u32 %v1860, %v1856
        %v1862 = vrot.slane %v1861, 4
        %v1864 = vshll.u32 %v1483, 16
        %v1866 = vrot.slane %v1864, 5
        %v1867 = vsel %vm262, %v1862, %v1866
        %v1868 = vld [vmem:[%s1435] sm:$0xe]
        %v1869 = vld [vmem:[%s1435 + $0xc] sm:$0xe]
        %v1870 = vld [vmem:[%s1435 + $0x18] sm:$0xe]
        %v1871 = vld [vmem:[%s1435 + $0x24] sm:$0xe]
        %v1872 = vld [vmem:[%s1435 + $0x30] sm:$0xe]
        %v1873 = vld [vmem:[%s1435 + $0x3c] sm:$0xe]
        %v1874 = vld [vmem:[%s1435 + $0x48] sm:$0xe]
        %v1875 = vld [vmem:[%s1435 + $0x54] sm:$0xe]
        %v1876 = vld [vmem:[%s1435 + $0x60] sm:$0xe]
        %v1877 = vld [vmem:[%s1435 + $0x6c] sm:$0xe]
        %v1878 = vld [vmem:[%s1435 + $0x78] sm:$0xe]
        %v1879 = vld [vmem:[%s1435 + $0x84] sm:$0xe]
        %v1880 = vld [vmem:[%s1435 + $0x90] sm:$0xe]
        %v1881 = vld [vmem:[%s1435 + $0x9c] sm:$0xe]
        %v1882 = vld [vmem:[%s1435 + $0xa8] sm:$0xe]
        %v1883 = vld [vmem:[%s1435 + $0xb4] sm:$0xe]
        %v1932 = vrot.slane %v1868, 5
        %v1933 = vrot.slane %v1932, 4
        %v1934 = vrot.slane %v1437, 5
        %v1935 = vsel %vm713, %v1933, %v1934
        %v1936 = vrot.slane %v1934, 4
        %v1937 = vrot.slane %v1468, 5
        %v1938 = vsel %vm713, %v1936, %v1937
        %v1939 = vrot.slane %v1869, 5
        %v1940 = vrot.slane %v1939, 4
        %v1941 = vrot.slane %v1439, 5
        %v1942 = vsel %vm713, %v1940, %v1941
        %v1943 = vrot.slane %v1941, 4
        %v1944 = vrot.slane %v1469, 5
        %v1945 = vsel %vm713, %v1943, %v1944
        %v1946 = vrot.slane %v1870, 5
        %v1947 = vrot.slane %v1946, 4
        %v1948 = vrot.slane %v1441, 5
        %v1949 = vsel %vm713, %v1947, %v1948
        %v1950 = vrot.slane %v1948, 4
        %v1951 = vrot.slane %v1470, 5
        %v1952 = vsel %vm713, %v1950, %v1951
        %v1953 = vrot.slane %v1871, 5
        %v1954 = vrot.slane %v1953, 4
        %v1955 = vrot.slane %v1443, 5
        %v1956 = vsel %vm713, %v1954, %v1955
        %v1957 = vrot.slane %v1955, 4
        %v1958 = vrot.slane %v1471, 5
        %v1959 = vsel %vm713, %v1957, %v1958
        %v1960 = vrot.slane %v1872, 5
        %v1961 = vrot.slane %v1960, 4
        %v1962 = vrot.slane %v1445, 5
        %v1963 = vsel %vm713, %v1961, %v1962
        %v1964 = vrot.slane %v1962, 4
        %v1965 = vrot.slane %v1472, 5
        %v1966 = vsel %vm713, %v1964, %v1965
        %v1967 = vrot.slane %v1873, 5
        %v1968 = vrot.slane %v1967, 4
        %v1969 = vrot.slane %v1447, 5
        %v1970 = vsel %vm713, %v1968, %v1969
        %v1971 = vrot.slane %v1969, 4
        %v1972 = vrot.slane %v1473, 5
        %v1973 = vsel %vm713, %v1971, %v1972
        %v1974 = vrot.slane %v1874, 5
        %v1975 = vrot.slane %v1974, 4
        %v1976 = vrot.slane %v1449, 5
        %v1977 = vsel %vm713, %v1975, %v1976
        %v1978 = vrot.slane %v1976, 4
        %v1979 = vrot.slane %v1474, 5
        %v1980 = vsel %vm713, %v1978, %v1979
        %v1981 = vrot.slane %v1875, 5
        %v1982 = vrot.slane %v1981, 4
        %v1983 = vrot.slane %v1451, 5
        %v1984 = vsel %vm713, %v1982, %v1983
        %v1985 = vrot.slane %v1983, 4
        %v1986 = vrot.slane %v1475, 5
        %v1987 = vsel %vm713, %v1985, %v1986
        %v1988 = vrot.slane %v1876, 5
        %v1989 = vrot.slane %v1988, 4
        %v1990 = vrot.slane %v1453, 5
        %v1991 = vsel %vm713, %v1989, %v1990
        %v1992 = vrot.slane %v1990, 4
        %v1993 = vrot.slane %v1476, 5
        %v1994 = vsel %vm713, %v1992, %v1993
        %v1995 = vrot.slane %v1877, 5
        %v1996 = vrot.slane %v1995, 4
        %v1997 = vrot.slane %v1455, 5
        %v1998 = vsel %vm713, %v1996, %v1997
        %v1999 = vrot.slane %v1997, 4
        %v2000 = vrot.slane %v1477, 5
        %v2001 = vsel %vm713, %v1999, %v2000
        %v2002 = vrot.slane %v1878, 5
        %v2003 = vrot.slane %v2002, 4
        %v2004 = vrot.slane %v1457, 5
        %v2005 = vsel %vm713, %v2003, %v2004
        %v2006 = vrot.slane %v2004, 4
        %v2007 = vrot.slane %v1478, 5
        %v2008 = vsel %vm713, %v2006, %v2007
        %v2009 = vrot.slane %v1879, 5
        %v2010 = vrot.slane %v2009, 4
        %v2011 = vrot.slane %v1459, 5
        %v2012 = vsel %vm713, %v2010, %v2011
        %v2013 = vrot.slane %v2011, 4
        %v2014 = vrot.slane %v1479, 5
        %v2015 = vsel %vm713, %v2013, %v2014
        %v2016 = vrot.slane %v1880, 5
        %v2017 = vrot.slane %v2016, 4
        %v2018 = vrot.slane %v1461, 5
        %v2019 = vsel %vm713, %v2017, %v2018
        %v2020 = vrot.slane %v2018, 4
        %v2021 = vrot.slane %v1480, 5
        %v2022 = vsel %vm713, %v2020, %v2021
        %v2023 = vrot.slane %v1881, 5
        %v2024 = vrot.slane %v2023, 4
        %v2025 = vrot.slane %v1463, 5
        %v2026 = vsel %vm713, %v2024, %v2025
        %v2027 = vrot.slane %v2025, 4
        %v2028 = vrot.slane %v1481, 5
        %v2029 = vsel %vm713, %v2027, %v2028
        %v2030 = vrot.slane %v1882, 5
        %v2031 = vrot.slane %v2030, 4
        %v2032 = vrot.slane %v1465, 5
        %v2033 = vsel %vm713, %v2031, %v2032
        %v2034 = vrot.slane %v2032, 4
        %v2035 = vrot.slane %v1482, 5
        %v2036 = vsel %vm713, %v2034, %v2035
        %v2037 = vrot.slane %v1883, 5
        %v2038 = vrot.slane %v2037, 4
        %v2039 = vrot.slane %v1467, 5
        %v2040 = vsel %vm713, %v2038, %v2039
        %v2041 = vrot.slane %v2039, 4
        %v2042 = vrot.slane %v1483, 5
        %v2043 = vsel %vm713, %v2041, %v2042
        %v2060 = vunpack.c.l.b16 %v212
        %v2061 = vunpack.c.l.b16 %v213
        %v2062 = vunpack.c.l.b16 %v214
        %v2063 = vunpack.c.l.b16 %v215
        %v2064 = vunpack.c.l.b16 %v216
        %v2065 = vunpack.c.l.b16 %v217
        %v2066 = vunpack.c.l.b16 %v218
        %v2067 = vunpack.c.l.b16 %v219
        %v2068 = vunpack.c.l.b16 %v220
        %v2069 = vunpack.c.l.b16 %v221
        %v2070 = vunpack.c.l.b16 %v222
        %v2071 = vunpack.c.l.b16 %v223
        %v2072 = vunpack.c.l.b16 %v224
        %v2073 = vunpack.c.l.b16 %v225
        %v2074 = vunpack.c.l.b16 %v226
        %v2075 = vunpack.c.l.b16 %v227
        %v2076 = vunpack.c.l.b16 %v228
        %v2077 = vunpack.c.l.b16 %v229
        %v2078 = vunpack.c.l.b16 %v230
        %v2079 = vunpack.c.l.b16 %v231
        %v2080 = vunpack.c.l.b16 %v232
        %v2081 = vunpack.c.l.b16 %v233
        %v2082 = vunpack.c.l.b16 %v234
        %v2083 = vunpack.c.l.b16 %v235
        %v2084 = vunpack.c.l.b16 %v236
        %v2085 = vunpack.c.l.b16 %v237
        %v2086 = vunpack.c.l.b16 %v238
        %v2087 = vunpack.c.l.b16 %v239
        %v2088 = vunpack.c.l.b16 %v240
        %v2089 = vunpack.c.l.b16 %v241
        %v2090 = vunpack.c.l.b16 %v242
        %v2091 = vunpack.c.l.b16 %v243
        %v2092 = vpack.c.b16 %v2061, %v2060
        %v2093 = vpack.c.b16 %v2063, %v2062
        %v2094 = vpack.c.b16 %v2065, %v2064
        %v2095 = vpack.c.b16 %v2067, %v2066
        %v2096 = vpack.c.b16 %v2069, %v2068
        %v2097 = vpack.c.b16 %v2071, %v2070
        %v2098 = vpack.c.b16 %v2073, %v2072
        %v2099 = vpack.c.b16 %v2075, %v2074
        %v2100 = vpack.c.b16 %v2077, %v2076
        %v2101 = vpack.c.b16 %v2079, %v2078
        %v2102 = vpack.c.b16 %v2081, %v2080
        %v2103 = vpack.c.b16 %v2083, %v2082
        %v2104 = vpack.c.b16 %v2085, %v2084
        %v2105 = vpack.c.b16 %v2087, %v2086
        %v2106 = vpack.c.b16 %v2089, %v2088
        %v2107 = vpack.c.b16 %v2091, %v2090
        %v2124 = vunpack.c.l.b16 %v276
        %v2125 = vunpack.c.l.b16 %v286
        %v2126 = vunpack.c.l.b16 %v300
        %v2127 = vunpack.c.l.b16 %v310
        %v2128 = vunpack.c.l.b16 %v324
        %v2129 = vunpack.c.l.b16 %v334
        %v2130 = vunpack.c.l.b16 %v348
        %v2131 = vunpack.c.l.b16 %v358
        %v2132 = vunpack.c.l.b16 %v372
        %v2133 = vunpack.c.l.b16 %v382
        %v2134 = vunpack.c.l.b16 %v396
        %v2135 = vunpack.c.l.b16 %v406
        %v2136 = vunpack.c.l.b16 %v420
        %v2137 = vunpack.c.l.b16 %v430
        %v2138 = vunpack.c.l.b16 %v444
        %v2139 = vunpack.c.l.b16 %v454
        %v2140 = vunpack.c.l.b16 %v468
        %v2141 = vunpack.c.l.b16 %v478
        %v2142 = vunpack.c.l.b16 %v492
        %v2143 = vunpack.c.l.b16 %v502
        %v2144 = vunpack.c.l.b16 %v516
        %v2145 = vunpack.c.l.b16 %v526
        %v2146 = vunpack.c.l.b16 %v540
        %v2147 = vunpack.c.l.b16 %v550
        %v2148 = vunpack.c.l.b16 %v564
        %v2149 = vunpack.c.l.b16 %v574
        %v2150 = vunpack.c.l.b16 %v588
        %v2151 = vunpack.c.l.b16 %v598
        %v2152 = vunpack.c.l.b16 %v612
        %v2153 = vunpack.c.l.b16 %v622
        %v2154 = vunpack.c.l.b16 %v636
        %v2155 = vunpack.c.l.b16 %v646
        %v2156 = vpack.c.b16 %v2125, %v2124
        %v2157 = vpack.c.b16 %v2127, %v2126
        %v2158 = vpack.c.b16 %v2129, %v2128
        %v2159 = vpack.c.b16 %v2131, %v2130
        %v2160 = vpack.c.b16 %v2133, %v2132
        %v2161 = vpack.c.b16 %v2135, %v2134
        %v2162 = vpack.c.b16 %v2137, %v2136
        %v2163 = vpack.c.b16 %v2139, %v2138
        %v2164 = vpack.c.b16 %v2141, %v2140
        %v2165 = vpack.c.b16 %v2143, %v2142
        %v2166 = vpack.c.b16 %v2145, %v2144
        %v2167 = vpack.c.b16 %v2147, %v2146
        %v2168 = vpack.c.b16 %v2149, %v2148
        %v2169 = vpack.c.b16 %v2151, %v2150
        %v2170 = vpack.c.b16 %v2153, %v2152
        %v2171 = vpack.c.b16 %v2155, %v2154
        %v2188 = vunpack.c.l.b16 %v717
        %v2189 = vunpack.c.l.b16 %v720
        %v2190 = vunpack.c.l.b16 %v724
        %v2191 = vunpack.c.l.b16 %v727
        %v2192 = vunpack.c.l.b16 %v731
        %v2193 = vunpack.c.l.b16 %v734
        %v2194 = vunpack.c.l.b16 %v738
        %v2195 = vunpack.c.l.b16 %v741
        %v2196 = vunpack.c.l.b16 %v745
        %v2197 = vunpack.c.l.b16 %v748
        %v2198 = vunpack.c.l.b16 %v752
        %v2199 = vunpack.c.l.b16 %v755
        %v2200 = vunpack.c.l.b16 %v759
        %v2201 = vunpack.c.l.b16 %v762
        %v2202 = vunpack.c.l.b16 %v766
        %v2203 = vunpack.c.l.b16 %v769
        %v2204 = vunpack.c.l.b16 %v773
        %v2205 = vunpack.c.l.b16 %v776
        %v2206 = vunpack.c.l.b16 %v780
        %v2207 = vunpack.c.l.b16 %v783
        %v2208 = vunpack.c.l.b16 %v787
        %v2209 = vunpack.c.l.b16 %v790
        %v2210 = vunpack.c.l.b16 %v794
        %v2211 = vunpack.c.l.b16 %v797
        %v2212 = vunpack.c.l.b16 %v801
        %v2213 = vunpack.c.l.b16 %v804
        %v2214 = vunpack.c.l.b16 %v808
        %v2215 = vunpack.c.l.b16 %v811
        %v2216 = vunpack.c.l.b16 %v815
        %v2217 = vunpack.c.l.b16 %v818
        %v2218 = vunpack.c.l.b16 %v822
        %v2219 = vunpack.c.l.b16 %v825
        %v2220 = vpack.c.b16 %v2189, %v2188
        %v2221 = vpack.c.b16 %v2191, %v2190
        %v2222 = vpack.c.b16 %v2193, %v2192
        %v2223 = vpack.c.b16 %v2195, %v2194
        %v2224 = vpack.c.b16 %v2197, %v2196
        %v2225 = vpack.c.b16 %v2199, %v2198
        %v2226 = vpack.c.b16 %v2201, %v2200
        %v2227 = vpack.c.b16 %v2203, %v2202
        %v2228 = vpack.c.b16 %v2205, %v2204
        %v2229 = vpack.c.b16 %v2207, %v2206
        %v2230 = vpack.c.b16 %v2209, %v2208
        %v2231 = vpack.c.b16 %v2211, %v2210
        %v2232 = vpack.c.b16 %v2213, %v2212
        %v2233 = vpack.c.b16 %v2215, %v2214
        %v2234 = vpack.c.b16 %v2217, %v2216
        %v2235 = vpack.c.b16 %v2219, %v2218
        %v2268 = vunpack.c.l.b16 %v827
        %v2269 = vunpack.c.l.b16 %v828
        %v2270 = vunpack.c.l.b16 %v829
        %v2271 = vunpack.c.l.b16 %v830
        %v2272 = vunpack.c.l.b16 %v831
        %v2273 = vunpack.c.l.b16 %v832
        %v2274 = vunpack.c.l.b16 %v833
        %v2275 = vunpack.c.l.b16 %v834
        %v2276 = vunpack.c.l.b16 %v835
        %v2277 = vunpack.c.l.b16 %v836
        %v2278 = vunpack.c.l.b16 %v837
        %v2279 = vunpack.c.l.b16 %v838
        %v2280 = vunpack.c.l.b16 %v839
        %v2281 = vunpack.c.l.b16 %v840
        %v2282 = vunpack.c.l.b16 %v841
        %v2283 = vunpack.c.l.b16 %v842
        %v2284 = vunpack.c.l.b16 %v843
        %v2285 = vunpack.c.l.b16 %v844
        %v2286 = vunpack.c.l.b16 %v845
        %v2287 = vunpack.c.l.b16 %v846
        %v2288 = vunpack.c.l.b16 %v847
        %v2289 = vunpack.c.l.b16 %v848
        %v2290 = vunpack.c.l.b16 %v849
        %v2291 = vunpack.c.l.b16 %v850
        %v2292 = vunpack.c.l.b16 %v851
        %v2293 = vunpack.c.l.b16 %v852
        %v2294 = vunpack.c.l.b16 %v853
        %v2295 = vunpack.c.l.b16 %v854
        %v2296 = vunpack.c.l.b16 %v855
        %v2297 = vunpack.c.l.b16 %v856
        %v2298 = vunpack.c.l.b16 %v857
        %v2299 = vunpack.c.l.b16 %v858
        %v2300 = vpack.c.b16 %v2269, %v2268
        %v2301 = vpack.c.b16 %v2271, %v2270
        %v2302 = vpack.c.b16 %v2273, %v2272
        %v2303 = vpack.c.b16 %v2275, %v2274
        %v2304 = vpack.c.b16 %v2277, %v2276
        %v2305 = vpack.c.b16 %v2279, %v2278
        %v2306 = vpack.c.b16 %v2281, %v2280
        %v2307 = vpack.c.b16 %v2283, %v2282
        %v2308 = vpack.c.b16 %v2285, %v2284
        %v2309 = vpack.c.b16 %v2287, %v2286
        %v2310 = vpack.c.b16 %v2289, %v2288
        %v2311 = vpack.c.b16 %v2291, %v2290
        %v2312 = vpack.c.b16 %v2293, %v2292
        %v2313 = vpack.c.b16 %v2295, %v2294
        %v2314 = vpack.c.b16 %v2297, %v2296
        %v2315 = vpack.c.b16 %v2299, %v2298
        %v2332 = vunpack.c.l.b16 %v888
        %v2333 = vunpack.c.l.b16 %v898
        %v2334 = vunpack.c.l.b16 %v912
        %v2335 = vunpack.c.l.b16 %v922
        %v2336 = vunpack.c.l.b16 %v936
        %v2337 = vunpack.c.l.b16 %v946
        %v2338 = vunpack.c.l.b16 %v960
        %v2339 = vunpack.c.l.b16 %v970
        %v2340 = vunpack.c.l.b16 %v984
        %v2341 = vunpack.c.l.b16 %v994
        %v2342 = vunpack.c.l.b16 %v1008
        %v2343 = vunpack.c.l.b16 %v1018
        %v2344 = vunpack.c.l.b16 %v1032
        %v2345 = vunpack.c.l.b16 %v1042
        %v2346 = vunpack.c.l.b16 %v1056
        %v2347 = vunpack.c.l.b16 %v1066
        %v2348 = vunpack.c.l.b16 %v1080
        %v2349 = vunpack.c.l.b16 %v1090
        %v2350 = vunpack.c.l.b16 %v1104
        %v2351 = vunpack.c.l.b16 %v1114
        %v2352 = vunpack.c.l.b16 %v1128
        %v2353 = vunpack.c.l.b16 %v1138
        %v2354 = vunpack.c.l.b16 %v1152
        %v2355 = vunpack.c.l.b16 %v1162
        %v2356 = vunpack.c.l.b16 %v1176
        %v2357 = vunpack.c.l.b16 %v1186
        %v2358 = vunpack.c.l.b16 %v1200
        %v2359 = vunpack.c.l.b16 %v1210
        %v2360 = vunpack.c.l.b16 %v1224
        %v2361 = vunpack.c.l.b16 %v1234
        %v2362 = vunpack.c.l.b16 %v1248
        %v2363 = vunpack.c.l.b16 %v1258
        %v2364 = vpack.c.b16 %v2333, %v2332
        %v2365 = vpack.c.b16 %v2335, %v2334
        %v2366 = vpack.c.b16 %v2337, %v2336
        %v2367 = vpack.c.b16 %v2339, %v2338
        %v2368 = vpack.c.b16 %v2341, %v2340
        %v2369 = vpack.c.b16 %v2343, %v2342
        %v2370 = vpack.c.b16 %v2345, %v2344
        %v2371 = vpack.c.b16 %v2347, %v2346
        %v2372 = vpack.c.b16 %v2349, %v2348
        %v2373 = vpack.c.b16 %v2351, %v2350
        %v2374 = vpack.c.b16 %v2353, %v2352
        %v2375 = vpack.c.b16 %v2355, %v2354
        %v2376 = vpack.c.b16 %v2357, %v2356
        %v2377 = vpack.c.b16 %v2359, %v2358
        %v2378 = vpack.c.b16 %v2361, %v2360
        %v2379 = vpack.c.b16 %v2363, %v2362
        %v2396 = vunpack.c.l.b16 %v1326
        %v2397 = vunpack.c.l.b16 %v1329
        %v2398 = vunpack.c.l.b16 %v1333
        %v2399 = vunpack.c.l.b16 %v1336
        %v2400 = vunpack.c.l.b16 %v1340
        %v2401 = vunpack.c.l.b16 %v1343
        %v2402 = vunpack.c.l.b16 %v1347
        %v2403 = vunpack.c.l.b16 %v1350
        %v2404 = vunpack.c.l.b16 %v1354
        %v2405 = vunpack.c.l.b16 %v1357
        %v2406 = vunpack.c.l.b16 %v1361
        %v2407 = vunpack.c.l.b16 %v1364
        %v2408 = vunpack.c.l.b16 %v1368
        %v2409 = vunpack.c.l.b16 %v1371
        %v2410 = vunpack.c.l.b16 %v1375
        %v2411 = vunpack.c.l.b16 %v1378
        %v2412 = vunpack.c.l.b16 %v1382
        %v2413 = vunpack.c.l.b16 %v1385
        %v2414 = vunpack.c.l.b16 %v1389
        %v2415 = vunpack.c.l.b16 %v1392
        %v2416 = vunpack.c.l.b16 %v1396
        %v2417 = vunpack.c.l.b16 %v1399
        %v2418 = vunpack.c.l.b16 %v1403
        %v2419 = vunpack.c.l.b16 %v1406
        %v2420 = vunpack.c.l.b16 %v1410
        %v2421 = vunpack.c.l.b16 %v1413
        %v2422 = vunpack.c.l.b16 %v1417
        %v2423 = vunpack.c.l.b16 %v1420
        %v2424 = vunpack.c.l.b16 %v1424
        %v2425 = vunpack.c.l.b16 %v1427
        %v2426 = vunpack.c.l.b16 %v1431
        %v2427 = vunpack.c.l.b16 %v1434
        %v2428 = vpack.c.b16 %v2397, %v2396
        %v2429 = vpack.c.b16 %v2399, %v2398
        %v2430 = vpack.c.b16 %v2401, %v2400
        %v2431 = vpack.c.b16 %v2403, %v2402
        %v2432 = vpack.c.b16 %v2405, %v2404
        %v2433 = vpack.c.b16 %v2407, %v2406
        %v2434 = vpack.c.b16 %v2409, %v2408
        %v2435 = vpack.c.b16 %v2411, %v2410
        %v2436 = vpack.c.b16 %v2413, %v2412
        %v2437 = vpack.c.b16 %v2415, %v2414
        %v2438 = vpack.c.b16 %v2417, %v2416
        %v2439 = vpack.c.b16 %v2419, %v2418
        %v2440 = vpack.c.b16 %v2421, %v2420
        %v2441 = vpack.c.b16 %v2423, %v2422
        %v2442 = vpack.c.b16 %v2425, %v2424
        %v2443 = vpack.c.b16 %v2427, %v2426
        %v2476 = vunpack.c.l.b16 %v1436
        %v2477 = vunpack.c.l.b16 %v1437
        %v2478 = vunpack.c.l.b16 %v1438
        %v2479 = vunpack.c.l.b16 %v1439
        %v2480 = vunpack.c.l.b16 %v1440
        %v2481 = vunpack.c.l.b16 %v1441
        %v2482 = vunpack.c.l.b16 %v1442
        %v2483 = vunpack.c.l.b16 %v1443
        %v2484 = vunpack.c.l.b16 %v1444
        %v2485 = vunpack.c.l.b16 %v1445
        %v2486 = vunpack.c.l.b16 %v1446
        %v2487 = vunpack.c.l.b16 %v1447
        %v2488 = vunpack.c.l.b16 %v1448
        %v2489 = vunpack.c.l.b16 %v1449
        %v2490 = vunpack.c.l.b16 %v1450
        %v2491 = vunpack.c.l.b16 %v1451
        %v2492 = vunpack.c.l.b16 %v1452
        %v2493 = vunpack.c.l.b16 %v1453
        %v2494 = vunpack.c.l.b16 %v1454
        %v2495 = vunpack.c.l.b16 %v1455
        %v2496 = vunpack.c.l.b16 %v1456
        %v2497 = vunpack.c.l.b16 %v1457
        %v2498 = vunpack.c.l.b16 %v1458
        %v2499 = vunpack.c.l.b16 %v1459
        %v2500 = vunpack.c.l.b16 %v1460
        %v2501 = vunpack.c.l.b16 %v1461
        %v2502 = vunpack.c.l.b16 %v1462
        %v2503 = vunpack.c.l.b16 %v1463
        %v2504 = vunpack.c.l.b16 %v1464
        %v2505 = vunpack.c.l.b16 %v1465
        %v2506 = vunpack.c.l.b16 %v1466
        %v2507 = vunpack.c.l.b16 %v1467
        %v2508 = vpack.c.b16 %v2477, %v2476
        %v2509 = vpack.c.b16 %v2479, %v2478
        %v2510 = vpack.c.b16 %v2481, %v2480
        %v2511 = vpack.c.b16 %v2483, %v2482
        %v2512 = vpack.c.b16 %v2485, %v2484
        %v2513 = vpack.c.b16 %v2487, %v2486
        %v2514 = vpack.c.b16 %v2489, %v2488
        %v2515 = vpack.c.b16 %v2491, %v2490
        %v2516 = vpack.c.b16 %v2493, %v2492
        %v2517 = vpack.c.b16 %v2495, %v2494
        %v2518 = vpack.c.b16 %v2497, %v2496
        %v2519 = vpack.c.b16 %v2499, %v2498
        %v2520 = vpack.c.b16 %v2501, %v2500
        %v2521 = vpack.c.b16 %v2503, %v2502
        %v2522 = vpack.c.b16 %v2505, %v2504
        %v2523 = vpack.c.b16 %v2507, %v2506
        %v2540 = vunpack.c.l.b16 %v1497
        %v2541 = vunpack.c.l.b16 %v1507
        %v2542 = vunpack.c.l.b16 %v1521
        %v2543 = vunpack.c.l.b16 %v1531
        %v2544 = vunpack.c.l.b16 %v1545
        %v2545 = vunpack.c.l.b16 %v1555
        %v2546 = vunpack.c.l.b16 %v1569
        %v2547 = vunpack.c.l.b16 %v1579
        %v2548 = vunpack.c.l.b16 %v1593
        %v2549 = vunpack.c.l.b16 %v1603
        %v2550 = vunpack.c.l.b16 %v1617
        %v2551 = vunpack.c.l.b16 %v1627
        %v2552 = vunpack.c.l.b16 %v1641
        %v2553 = vunpack.c.l.b16 %v1651
        %v2554 = vunpack.c.l.b16 %v1665
        %v2555 = vunpack.c.l.b16 %v1675
        %v2556 = vunpack.c.l.b16 %v1689
        %v2557 = vunpack.c.l.b16 %v1699
        %v2558 = vunpack.c.l.b16 %v1713
        %v2559 = vunpack.c.l.b16 %v1723
        %v2560 = vunpack.c.l.b16 %v1737
        %v2561 = vunpack.c.l.b16 %v1747
        %v2562 = vunpack.c.l.b16 %v1761
        %v2563 = vunpack.c.l.b16 %v1771
        %v2564 = vunpack.c.l.b16 %v1785
        %v2565 = vunpack.c.l.b16 %v1795
        %v2566 = vunpack.c.l.b16 %v1809
        %v2567 = vunpack.c.l.b16 %v1819
        %v2568 = vunpack.c.l.b16 %v1833
        %v2569 = vunpack.c.l.b16 %v1843
        %v2570 = vunpack.c.l.b16 %v1857
        %v2571 = vunpack.c.l.b16 %v1867
        %v2572 = vpack.c.b16 %v2541, %v2540
        %v2573 = vpack.c.b16 %v2543, %v2542
        %v2574 = vpack.c.b16 %v2545, %v2544
        %v2575 = vpack.c.b16 %v2547, %v2546
        %v2576 = vpack.c.b16 %v2549, %v2548
        %v2577 = vpack.c.b16 %v2551, %v2550
        %v2578 = vpack.c.b16 %v2553, %v2552
        %v2579 = vpack.c.b16 %v2555, %v2554
        %v2580 = vpack.c.b16 %v2557, %v2556
        %v2581 = vpack.c.b16 %v2559, %v2558
        %v2582 = vpack.c.b16 %v2561, %v2560
        %v2583 = vpack.c.b16 %v2563, %v2562
        %v2584 = vpack.c.b16 %v2565, %v2564
        %v2585 = vpack.c.b16 %v2567, %v2566
        %v2586 = vpack.c.b16 %v2569, %v2568
        %v2587 = vpack.c.b16 %v2571, %v2570
        %v2604 = vunpack.c.l.b16 %v1935
        %v2605 = vunpack.c.l.b16 %v1938
        %v2606 = vunpack.c.l.b16 %v1942
        %v2607 = vunpack.c.l.b16 %v1945
        %v2608 = vunpack.c.l.b16 %v1949
        %v2609 = vunpack.c.l.b16 %v1952
        %v2610 = vunpack.c.l.b16 %v1956
        %v2611 = vunpack.c.l.b16 %v1959
        %v2612 = vunpack.c.l.b16 %v1963
        %v2613 = vunpack.c.l.b16 %v1966
        %v2614 = vunpack.c.l.b16 %v1970
        %v2615 = vunpack.c.l.b16 %v1973
        %v2616 = vunpack.c.l.b16 %v1977
        %v2617 = vunpack.c.l.b16 %v1980
        %v2618 = vunpack.c.l.b16 %v1984
        %v2619 = vunpack.c.l.b16 %v1987
        %v2620 = vunpack.c.l.b16 %v1991
        %v2621 = vunpack.c.l.b16 %v1994
        %v2622 = vunpack.c.l.b16 %v1998
        %v2623 = vunpack.c.l.b16 %v2001
        %v2624 = vunpack.c.l.b16 %v2005
        %v2625 = vunpack.c.l.b16 %v2008
        %v2626 = vunpack.c.l.b16 %v2012
        %v2627 = vunpack.c.l.b16 %v2015
        %v2628 = vunpack.c.l.b16 %v2019
        %v2629 = vunpack.c.l.b16 %v2022
        %v2630 = vunpack.c.l.b16 %v2026
        %v2631 = vunpack.c.l.b16 %v2029
        %v2632 = vunpack.c.l.b16 %v2033
        %v2633 = vunpack.c.l.b16 %v2036
        %v2634 = vunpack.c.l.b16 %v2040
        %v2635 = vunpack.c.l.b16 %v2043
        %v2636 = vpack.c.b16 %v2605, %v2604
        %v2637 = vpack.c.b16 %v2607, %v2606
        %v2638 = vpack.c.b16 %v2609, %v2608
        %v2639 = vpack.c.b16 %v2611, %v2610
        %v2640 = vpack.c.b16 %v2613, %v2612
        %v2641 = vpack.c.b16 %v2615, %v2614
        %v2642 = vpack.c.b16 %v2617, %v2616
        %v2643 = vpack.c.b16 %v2619, %v2618
        %v2644 = vpack.c.b16 %v2621, %v2620
        %v2645 = vpack.c.b16 %v2623, %v2622
        %v2646 = vpack.c.b16 %v2625, %v2624
        %v2647 = vpack.c.b16 %v2627, %v2626
        %v2648 = vpack.c.b16 %v2629, %v2628
        %v2649 = vpack.c.b16 %v2631, %v2630
        %v2650 = vpack.c.b16 %v2633, %v2632
        %v2651 = vpack.c.b16 %v2635, %v2634
        %v2668 = vld [vmem:[%s1] sm:$0xf]
        %v2669 = vld [vmem:[%s1 + $0x4] sm:$0xf]
        %v2670 = vld [vmem:[%s1 + $0x8] sm:$0xf]
        %v2671 = vld [vmem:[%s1 + $0xc] sm:$0xf]
        %v2672 = vld [vmem:[%s1 + $0x10] sm:$0xf]
        %v2673 = vld [vmem:[%s1 + $0x14] sm:$0xf]
        %v2674 = vld [vmem:[%s1 + $0x18] sm:$0xf]
        %v2675 = vld [vmem:[%s1 + $0x1c] sm:$0xf]
        %v2676 = vld [vmem:[%s1 + $0x20] sm:$0xf]
        %v2677 = vld [vmem:[%s1 + $0x24] sm:$0xf]
        %v2678 = vld [vmem:[%s1 + $0x28] sm:$0xf]
        %v2679 = vld [vmem:[%s1 + $0x2c] sm:$0xf]
        %v2680 = vld [vmem:[%s1 + $0x30] sm:$0xf]
        %v2681 = vld [vmem:[%s1 + $0x34] sm:$0xf]
        %v2682 = vld [vmem:[%s1 + $0x38] sm:$0xf]
        %v2683 = vld [vmem:[%s1 + $0x3c] sm:$0xf]
        %v2684 = vld [vmem:[%s1 + $0x40] sm:$0xf]
        %v2685 = vld [vmem:[%s1 + $0x44] sm:$0xf]
        %v2686 = vld [vmem:[%s1 + $0x48] sm:$0xf]
        %v2687 = vld [vmem:[%s1 + $0x4c] sm:$0xf]
        %v2688 = vld [vmem:[%s1 + $0x50] sm:$0xf]
        %v2689 = vld [vmem:[%s1 + $0x54] sm:$0xf]
        %v2690 = vld [vmem:[%s1 + $0x58] sm:$0xf]
        %v2691 = vld [vmem:[%s1 + $0x5c] sm:$0xf]
        %v2692 = vld [vmem:[%s1 + $0x60] sm:$0xf]
        %v2693 = vld [vmem:[%s1 + $0x64] sm:$0xf]
        %v2694 = vld [vmem:[%s1 + $0x68] sm:$0xf]
        %v2695 = vld [vmem:[%s1 + $0x6c] sm:$0xf]
        %v2696 = vld [vmem:[%s1 + $0x70] sm:$0xf]
        %v2697 = vld [vmem:[%s1 + $0x74] sm:$0xf]
        %v2698 = vld [vmem:[%s1 + $0x78] sm:$0xf]
        %v2699 = vld [vmem:[%s1 + $0x7c] sm:$0xf]
        %v2700 = vld [vmem:[%s1 + $0x80] sm:$0xf]
        %v2701 = vld [vmem:[%s1 + $0x84] sm:$0xf]
        %v2702 = vld [vmem:[%s1 + $0x88] sm:$0xf]
        %v2703 = vld [vmem:[%s1 + $0x8c] sm:$0xf]
        %v2704 = vld [vmem:[%s1 + $0x90] sm:$0xf]
        %v2705 = vld [vmem:[%s1 + $0x94] sm:$0xf]
        %v2706 = vld [vmem:[%s1 + $0x98] sm:$0xf]
        %v2707 = vld [vmem:[%s1 + $0x9c] sm:$0xf]
        %v2708 = vld [vmem:[%s1 + $0xa0] sm:$0xf]
        %v2709 = vld [vmem:[%s1 + $0xa4] sm:$0xf]
        %v2710 = vld [vmem:[%s1 + $0xa8] sm:$0xf]
        %v2711 = vld [vmem:[%s1 + $0xac] sm:$0xf]
        %v2712 = vld [vmem:[%s1 + $0xb0] sm:$0xf]
        %v2713 = vld [vmem:[%s1 + $0xb4] sm:$0xf]
        %v2714 = vld [vmem:[%s1 + $0xb8] sm:$0xf]
        %v2715 = vld [vmem:[%s1 + $0xbc] sm:$0xf]
        %v2716 = vld [vmem:[%s1 + $0xc0] sm:$0xf]
        %v2717 = vld [vmem:[%s1 + $0xc4] sm:$0xf]
        %v2718 = vld [vmem:[%s1 + $0xc8] sm:$0xf]
        %v2719 = vld [vmem:[%s1 + $0xcc] sm:$0xf]
        %v2720 = vld [vmem:[%s1 + $0xd0] sm:$0xf]
        %v2721 = vld [vmem:[%s1 + $0xd4] sm:$0xf]
        %v2722 = vld [vmem:[%s1 + $0xd8] sm:$0xf]
        %v2723 = vld [vmem:[%s1 + $0xdc] sm:$0xf]
        %v2724 = vld [vmem:[%s1 + $0xe0] sm:$0xf]
        %v2725 = vld [vmem:[%s1 + $0xe4] sm:$0xf]
        %v2726 = vld [vmem:[%s1 + $0xe8] sm:$0xf]
        %v2727 = vld [vmem:[%s1 + $0xec] sm:$0xf]
        %v2728 = vld [vmem:[%s1 + $0xf0] sm:$0xf]
        %v2729 = vld [vmem:[%s1 + $0xf4] sm:$0xf]
        %v2730 = vld [vmem:[%s1 + $0xf8] sm:$0xf]
        %v2731 = vld [vmem:[%s1 + $0xfc] sm:$0xf]
        %v2732 = vld [vmem:[%s1 + $0x100] sm:$0xf]
        %v2733 = vld [vmem:[%s1 + $0x104] sm:$0xf]
        %v2734 = vld [vmem:[%s1 + $0x108] sm:$0xf]
        %v2735 = vld [vmem:[%s1 + $0x10c] sm:$0xf]
        %v2736 = vld [vmem:[%s1 + $0x110] sm:$0xf]
        %v2737 = vld [vmem:[%s1 + $0x114] sm:$0xf]
        %v2738 = vld [vmem:[%s1 + $0x118] sm:$0xf]
        %v2739 = vld [vmem:[%s1 + $0x11c] sm:$0xf]
        %v2740 = vld [vmem:[%s1 + $0x120] sm:$0xf]
        %v2741 = vld [vmem:[%s1 + $0x124] sm:$0xf]
        %v2742 = vld [vmem:[%s1 + $0x128] sm:$0xf]
        %v2743 = vld [vmem:[%s1 + $0x12c] sm:$0xf]
        %v2744 = vld [vmem:[%s1 + $0x130] sm:$0xf]
        %v2745 = vld [vmem:[%s1 + $0x134] sm:$0xf]
        %v2746 = vld [vmem:[%s1 + $0x138] sm:$0xf]
        %v2747 = vld [vmem:[%s1 + $0x13c] sm:$0xf]
        %v2748 = vld [vmem:[%s1 + $0x140] sm:$0xf]
        %v2749 = vld [vmem:[%s1 + $0x144] sm:$0xf]
        %v2750 = vld [vmem:[%s1 + $0x148] sm:$0xf]
        %v2751 = vld [vmem:[%s1 + $0x14c] sm:$0xf]
        %v2752 = vld [vmem:[%s1 + $0x150] sm:$0xf]
        %v2753 = vld [vmem:[%s1 + $0x154] sm:$0xf]
        %v2754 = vld [vmem:[%s1 + $0x158] sm:$0xf]
        %v2755 = vld [vmem:[%s1 + $0x15c] sm:$0xf]
        %v2756 = vld [vmem:[%s1 + $0x160] sm:$0xf]
        %v2757 = vld [vmem:[%s1 + $0x164] sm:$0xf]
        %v2758 = vld [vmem:[%s1 + $0x168] sm:$0xf]
        %v2759 = vld [vmem:[%s1 + $0x16c] sm:$0xf]
        %v2760 = vld [vmem:[%s1 + $0x170] sm:$0xf]
        %v2761 = vld [vmem:[%s1 + $0x174] sm:$0xf]
        %v2762 = vld [vmem:[%s1 + $0x178] sm:$0xf]
        %v2763 = vld [vmem:[%s1 + $0x17c] sm:$0xf]
        %v2764 = vld [vmem:[%s1 + $0x180] sm:$0xf]
        %v2765 = vld [vmem:[%s1 + $0x184] sm:$0xf]
        %v2766 = vld [vmem:[%s1 + $0x188] sm:$0xf]
        %v2767 = vld [vmem:[%s1 + $0x18c] sm:$0xf]
        %v2768 = vld [vmem:[%s1 + $0x190] sm:$0xf]
        %v2769 = vld [vmem:[%s1 + $0x194] sm:$0xf]
        %v2770 = vld [vmem:[%s1 + $0x198] sm:$0xf]
        %v2771 = vld [vmem:[%s1 + $0x19c] sm:$0xf]
        %v2772 = vld [vmem:[%s1 + $0x1a0] sm:$0xf]
        %v2773 = vld [vmem:[%s1 + $0x1a4] sm:$0xf]
        %v2774 = vld [vmem:[%s1 + $0x1a8] sm:$0xf]
        %v2775 = vld [vmem:[%s1 + $0x1ac] sm:$0xf]
        %v2776 = vld [vmem:[%s1 + $0x1b0] sm:$0xf]
        %v2777 = vld [vmem:[%s1 + $0x1b4] sm:$0xf]
        %v2778 = vld [vmem:[%s1 + $0x1b8] sm:$0xf]
        %v2779 = vld [vmem:[%s1 + $0x1bc] sm:$0xf]
        %v2780 = vld [vmem:[%s1 + $0x1c0] sm:$0xf]
        %v2781 = vld [vmem:[%s1 + $0x1c4] sm:$0xf]
        %v2782 = vld [vmem:[%s1 + $0x1c8] sm:$0xf]
        %v2783 = vld [vmem:[%s1 + $0x1cc] sm:$0xf]
        %v2784 = vld [vmem:[%s1 + $0x1d0] sm:$0xf]
        %v2785 = vld [vmem:[%s1 + $0x1d4] sm:$0xf]
        %v2786 = vld [vmem:[%s1 + $0x1d8] sm:$0xf]
        %v2787 = vld [vmem:[%s1 + $0x1dc] sm:$0xf]
        %v2788 = vld [vmem:[%s1 + $0x1e0] sm:$0xf]
        %v2789 = vld [vmem:[%s1 + $0x1e4] sm:$0xf]
        %v2790 = vld [vmem:[%s1 + $0x1e8] sm:$0xf]
        %v2791 = vld [vmem:[%s1 + $0x1ec] sm:$0xf]
        %v2792 = vld [vmem:[%s1 + $0x1f0] sm:$0xf]
        %v2793 = vld [vmem:[%s1 + $0x1f4] sm:$0xf]
        %v2794 = vld [vmem:[%s1 + $0x1f8] sm:$0xf]
        %v2795 = vld [vmem:[%s1 + $0x1fc] sm:$0xf]
        %v2796 = vld [vmem:[%s1 + $0x200] sm:$0xf]
        %v2797 = vld [vmem:[%s1 + $0x204] sm:$0xf]
        %v2798 = vld [vmem:[%s1 + $0x208] sm:$0xf]
        %v2799 = vld [vmem:[%s1 + $0x20c] sm:$0xf]
        %v2800 = vld [vmem:[%s1 + $0x210] sm:$0xf]
        %v2801 = vld [vmem:[%s1 + $0x214] sm:$0xf]
        %v2802 = vld [vmem:[%s1 + $0x218] sm:$0xf]
        %v2803 = vld [vmem:[%s1 + $0x21c] sm:$0xf]
        %v2804 = vld [vmem:[%s1 + $0x220] sm:$0xf]
        %v2805 = vld [vmem:[%s1 + $0x224] sm:$0xf]
        %v2806 = vld [vmem:[%s1 + $0x228] sm:$0xf]
        %v2807 = vld [vmem:[%s1 + $0x22c] sm:$0xf]
        %v2808 = vld [vmem:[%s1 + $0x230] sm:$0xf]
        %v2809 = vld [vmem:[%s1 + $0x234] sm:$0xf]
        %v2810 = vld [vmem:[%s1 + $0x238] sm:$0xf]
        %v2811 = vld [vmem:[%s1 + $0x23c] sm:$0xf]
        %v2956 = vunpack.c.l.b16 %v2668
        %v2957 = vunpack.c.l.b16 %v2669
        %v2958 = vunpack.c.l.b16 %v2670
        %v2959 = vunpack.c.l.b16 %v2671
        %v2960 = vunpack.c.l.b16 %v2672
        %v2961 = vunpack.c.l.b16 %v2673
        %v2962 = vunpack.c.l.b16 %v2674
        %v2963 = vunpack.c.l.b16 %v2675
        %v2964 = vunpack.c.l.b16 %v2676
        %v2965 = vunpack.c.l.b16 %v2677
        %v2966 = vunpack.c.l.b16 %v2678
        %v2967 = vunpack.c.l.b16 %v2679
        %v2968 = vunpack.c.l.b16 %v2680
        %v2969 = vunpack.c.l.b16 %v2681
        %v2970 = vunpack.c.l.b16 %v2682
        %v2971 = vunpack.c.l.b16 %v2683
        %v2972 = vunpack.c.l.b16 %v2684
        %v2973 = vunpack.c.l.b16 %v2685
        %v2974 = vunpack.c.l.b16 %v2686
        %v2975 = vunpack.c.l.b16 %v2687
        %v2976 = vunpack.c.l.b16 %v2688
        %v2977 = vunpack.c.l.b16 %v2689
        %v2978 = vunpack.c.l.b16 %v2690
        %v2979 = vunpack.c.l.b16 %v2691
        %v2980 = vunpack.c.l.b16 %v2692
        %v2981 = vunpack.c.l.b16 %v2693
        %v2982 = vunpack.c.l.b16 %v2694
        %v2983 = vunpack.c.l.b16 %v2695
        %v2984 = vunpack.c.l.b16 %v2696
        %v2985 = vunpack.c.l.b16 %v2697
        %v2986 = vunpack.c.l.b16 %v2698
        %v2987 = vunpack.c.l.b16 %v2699
        %v2988 = vunpack.c.l.b16 %v2700
        %v2989 = vunpack.c.l.b16 %v2701
        %v2990 = vunpack.c.l.b16 %v2702
        %v2991 = vunpack.c.l.b16 %v2703
        %v2992 = vunpack.c.l.b16 %v2704
        %v2993 = vunpack.c.l.b16 %v2705
        %v2994 = vunpack.c.l.b16 %v2706
        %v2995 = vunpack.c.l.b16 %v2707
        %v2996 = vunpack.c.l.b16 %v2708
        %v2997 = vunpack.c.l.b16 %v2709
        %v2998 = vunpack.c.l.b16 %v2710
        %v2999 = vunpack.c.l.b16 %v2711
        %v3000 = vunpack.c.l.b16 %v2712
        %v3001 = vunpack.c.l.b16 %v2713
        %v3002 = vunpack.c.l.b16 %v2714
        %v3003 = vunpack.c.l.b16 %v2715
        %v3004 = vunpack.c.l.b16 %v2716
        %v3005 = vunpack.c.l.b16 %v2717
        %v3006 = vunpack.c.l.b16 %v2718
        %v3007 = vunpack.c.l.b16 %v2719
        %v3008 = vunpack.c.l.b16 %v2720
        %v3009 = vunpack.c.l.b16 %v2721
        %v3010 = vunpack.c.l.b16 %v2722
        %v3011 = vunpack.c.l.b16 %v2723
        %v3012 = vunpack.c.l.b16 %v2724
        %v3013 = vunpack.c.l.b16 %v2725
        %v3014 = vunpack.c.l.b16 %v2726
        %v3015 = vunpack.c.l.b16 %v2727
        %v3016 = vunpack.c.l.b16 %v2728
        %v3017 = vunpack.c.l.b16 %v2729
        %v3018 = vunpack.c.l.b16 %v2730
        %v3019 = vunpack.c.l.b16 %v2731
        %v3020 = vunpack.c.l.b16 %v2732
        %v3021 = vunpack.c.l.b16 %v2733
        %v3022 = vunpack.c.l.b16 %v2734
        %v3023 = vunpack.c.l.b16 %v2735
        %v3024 = vunpack.c.l.b16 %v2736
        %v3025 = vunpack.c.l.b16 %v2737
        %v3026 = vunpack.c.l.b16 %v2738
        %v3027 = vunpack.c.l.b16 %v2739
        %v3028 = vunpack.c.l.b16 %v2740
        %v3029 = vunpack.c.l.b16 %v2741
        %v3030 = vunpack.c.l.b16 %v2742
        %v3031 = vunpack.c.l.b16 %v2743
        %v3032 = vunpack.c.l.b16 %v2744
        %v3033 = vunpack.c.l.b16 %v2745
        %v3034 = vunpack.c.l.b16 %v2746
        %v3035 = vunpack.c.l.b16 %v2747
        %v3036 = vunpack.c.l.b16 %v2748
        %v3037 = vunpack.c.l.b16 %v2749
        %v3038 = vunpack.c.l.b16 %v2750
        %v3039 = vunpack.c.l.b16 %v2751
        %v3040 = vunpack.c.l.b16 %v2752
        %v3041 = vunpack.c.l.b16 %v2753
        %v3042 = vunpack.c.l.b16 %v2754
        %v3043 = vunpack.c.l.b16 %v2755
        %v3044 = vunpack.c.l.b16 %v2756
        %v3045 = vunpack.c.l.b16 %v2757
        %v3046 = vunpack.c.l.b16 %v2758
        %v3047 = vunpack.c.l.b16 %v2759
        %v3048 = vunpack.c.l.b16 %v2760
        %v3049 = vunpack.c.l.b16 %v2761
        %v3050 = vunpack.c.l.b16 %v2762
        %v3051 = vunpack.c.l.b16 %v2763
        %v3052 = vunpack.c.l.b16 %v2764
        %v3053 = vunpack.c.l.b16 %v2765
        %v3054 = vunpack.c.l.b16 %v2766
        %v3055 = vunpack.c.l.b16 %v2767
        %v3056 = vunpack.c.l.b16 %v2768
        %v3057 = vunpack.c.l.b16 %v2769
        %v3058 = vunpack.c.l.b16 %v2770
        %v3059 = vunpack.c.l.b16 %v2771
        %v3060 = vunpack.c.l.b16 %v2772
        %v3061 = vunpack.c.l.b16 %v2773
        %v3062 = vunpack.c.l.b16 %v2774
        %v3063 = vunpack.c.l.b16 %v2775
        %v3064 = vunpack.c.l.b16 %v2776
        %v3065 = vunpack.c.l.b16 %v2777
        %v3066 = vunpack.c.l.b16 %v2778
        %v3067 = vunpack.c.l.b16 %v2779
        %v3068 = vunpack.c.l.b16 %v2780
        %v3069 = vunpack.c.l.b16 %v2781
        %v3070 = vunpack.c.l.b16 %v2782
        %v3071 = vunpack.c.l.b16 %v2783
        %v3072 = vunpack.c.l.b16 %v2784
        %v3073 = vunpack.c.l.b16 %v2785
        %v3074 = vunpack.c.l.b16 %v2786
        %v3075 = vunpack.c.l.b16 %v2787
        %v3076 = vunpack.c.l.b16 %v2788
        %v3077 = vunpack.c.l.b16 %v2789
        %v3078 = vunpack.c.l.b16 %v2790
        %v3079 = vunpack.c.l.b16 %v2791
        %v3080 = vunpack.c.l.b16 %v2792
        %v3081 = vunpack.c.l.b16 %v2793
        %v3082 = vunpack.c.l.b16 %v2794
        %v3083 = vunpack.c.l.b16 %v2795
        %v3084 = vunpack.c.l.b16 %v2796
        %v3085 = vunpack.c.l.b16 %v2797
        %v3086 = vunpack.c.l.b16 %v2798
        %v3087 = vunpack.c.l.b16 %v2799
        %v3088 = vunpack.c.l.b16 %v2800
        %v3089 = vunpack.c.l.b16 %v2801
        %v3090 = vunpack.c.l.b16 %v2802
        %v3091 = vunpack.c.l.b16 %v2803
        %v3092 = vunpack.c.l.b16 %v2804
        %v3093 = vunpack.c.l.b16 %v2805
        %v3094 = vunpack.c.l.b16 %v2806
        %v3095 = vunpack.c.l.b16 %v2807
        %v3096 = vunpack.c.l.b16 %v2808
        %v3097 = vunpack.c.l.b16 %v2809
        %v3098 = vunpack.c.l.b16 %v2810
        %v3099 = vunpack.c.l.b16 %v2811
        %v3100 = vpack.c.b16 %v2957, %v2956
        %v3101 = vpack.c.b16 %v2959, %v2958
        %v3102 = vpack.c.b16 %v2961, %v2960
        %v3103 = vpack.c.b16 %v2963, %v2962
        %v3104 = vpack.c.b16 %v2965, %v2964
        %v3105 = vpack.c.b16 %v2967, %v2966
        %v3106 = vpack.c.b16 %v2969, %v2968
        %v3107 = vpack.c.b16 %v2971, %v2970
        %v3108 = vpack.c.b16 %v2973, %v2972
        %v3109 = vpack.c.b16 %v2975, %v2974
        %v3110 = vpack.c.b16 %v2977, %v2976
        %v3111 = vpack.c.b16 %v2979, %v2978
        %v3112 = vpack.c.b16 %v2981, %v2980
        %v3113 = vpack.c.b16 %v2983, %v2982
        %v3114 = vpack.c.b16 %v2985, %v2984
        %v3115 = vpack.c.b16 %v2987, %v2986
        %v3116 = vpack.c.b16 %v2989, %v2988
        %v3117 = vpack.c.b16 %v2991, %v2990
        %v3118 = vpack.c.b16 %v2993, %v2992
        %v3119 = vpack.c.b16 %v2995, %v2994
        %v3120 = vpack.c.b16 %v2997, %v2996
        %v3121 = vpack.c.b16 %v2999, %v2998
        %v3122 = vpack.c.b16 %v3001, %v3000
        %v3123 = vpack.c.b16 %v3003, %v3002
        %v3124 = vpack.c.b16 %v3005, %v3004
        %v3125 = vpack.c.b16 %v3007, %v3006
        %v3126 = vpack.c.b16 %v3009, %v3008
        %v3127 = vpack.c.b16 %v3011, %v3010
        %v3128 = vpack.c.b16 %v3013, %v3012
        %v3129 = vpack.c.b16 %v3015, %v3014
        %v3130 = vpack.c.b16 %v3017, %v3016
        %v3131 = vpack.c.b16 %v3019, %v3018
        %v3132 = vpack.c.b16 %v3021, %v3020
        %v3133 = vpack.c.b16 %v3023, %v3022
        %v3134 = vpack.c.b16 %v3025, %v3024
        %v3135 = vpack.c.b16 %v3027, %v3026
        %v3136 = vpack.c.b16 %v3029, %v3028
        %v3137 = vpack.c.b16 %v3031, %v3030
        %v3138 = vpack.c.b16 %v3033, %v3032
        %v3139 = vpack.c.b16 %v3035, %v3034
        %v3140 = vpack.c.b16 %v3037, %v3036
        %v3141 = vpack.c.b16 %v3039, %v3038
        %v3142 = vpack.c.b16 %v3041, %v3040
        %v3143 = vpack.c.b16 %v3043, %v3042
        %v3144 = vpack.c.b16 %v3045, %v3044
        %v3145 = vpack.c.b16 %v3047, %v3046
        %v3146 = vpack.c.b16 %v3049, %v3048
        %v3147 = vpack.c.b16 %v3051, %v3050
        %v3148 = vpack.c.b16 %v3053, %v3052
        %v3149 = vpack.c.b16 %v3055, %v3054
        %v3150 = vpack.c.b16 %v3057, %v3056
        %v3151 = vpack.c.b16 %v3059, %v3058
        %v3152 = vpack.c.b16 %v3061, %v3060
        %v3153 = vpack.c.b16 %v3063, %v3062
        %v3154 = vpack.c.b16 %v3065, %v3064
        %v3155 = vpack.c.b16 %v3067, %v3066
        %v3156 = vpack.c.b16 %v3069, %v3068
        %v3157 = vpack.c.b16 %v3071, %v3070
        %v3158 = vpack.c.b16 %v3073, %v3072
        %v3159 = vpack.c.b16 %v3075, %v3074
        %v3160 = vpack.c.b16 %v3077, %v3076
        %v3161 = vpack.c.b16 %v3079, %v3078
        %v3162 = vpack.c.b16 %v3081, %v3080
        %v3163 = vpack.c.b16 %v3083, %v3082
        %v3164 = vpack.c.b16 %v3085, %v3084
        %v3165 = vpack.c.b16 %v3087, %v3086
        %v3166 = vpack.c.b16 %v3089, %v3088
        %v3167 = vpack.c.b16 %v3091, %v3090
        %v3168 = vpack.c.b16 %v3093, %v3092
        %v3169 = vpack.c.b16 %v3095, %v3094
        %v3170 = vpack.c.b16 %v3097, %v3096
        %v3171 = vpack.c.b16 %v3099, %v3098
        %3244 = vmatpush.bf16.msra.mxu0 %v3107
        %3245 = vmatpush.bf16.msra.mxu0 %v3106
        %3246 = vmatpush.bf16.msra.mxu0 %v3105
        %3247 = vmatpush.bf16.msra.mxu0 %v3104
        %3248 = vmatpush.bf16.msra.mxu0 %v3103
        %3249 = vmatpush.bf16.msra.mxu0 %v3102
        %3250 = vmatpush.bf16.msra.mxu0 %v3101
        %3251 = vmatpush.bf16.msra.mxu0 %v3100
        %3252 = vmatmul.bf16.gmra.mxu0 %v2092
        %v3253 = vpop.f32.mrf.mxu0
        %v3254 = vadd.f32 0.0, %v3253
        %v3255 = vpop.f32.mrf.mxu0
        %v3256 = vadd.f32 0.0, %v3255
        %3257 = vmatmul.bf16.gmra.mxu0 %v2093
        %v3258 = vpop.f32.mrf.mxu0
        %v3259 = vadd.f32 0.0, %v3258
        %v3260 = vpop.f32.mrf.mxu0
        %v3261 = vadd.f32 0.0, %v3260
        %3262 = vmatmul.bf16.gmra.mxu0 %v2094
        %v3263 = vpop.f32.mrf.mxu0
        %v3264 = vadd.f32 0.0, %v3263
        %v3265 = vpop.f32.mrf.mxu0
        %v3266 = vadd.f32 0.0, %v3265
        %3267 = vmatmul.bf16.gmra.mxu0 %v2095
        %v3268 = vpop.f32.mrf.mxu0
        %v3269 = vadd.f32 0.0, %v3268
        %v3270 = vpop.f32.mrf.mxu0
        %v3271 = vadd.f32 0.0, %v3270
        %3272 = vmatmul.bf16.gmra.mxu0 %v2096
        %v3273 = vpop.f32.mrf.mxu0
        %v3274 = vadd.f32 0.0, %v3273
        %v3275 = vpop.f32.mrf.mxu0
        %v3276 = vadd.f32 0.0, %v3275
        %3277 = vmatmul.bf16.gmra.mxu0 %v2097
        %v3278 = vpop.f32.mrf.mxu0
        %v3279 = vadd.f32 0.0, %v3278
        %v3280 = vpop.f32.mrf.mxu0
        %v3281 = vadd.f32 0.0, %v3280
        %3282 = vmatmul.bf16.gmra.mxu0 %v2098
        %v3283 = vpop.f32.mrf.mxu0
        %v3284 = vadd.f32 0.0, %v3283
        %v3285 = vpop.f32.mrf.mxu0
        %v3286 = vadd.f32 0.0, %v3285
        %3287 = vmatmul.bf16.gmra.mxu0 %v2099
        %v3288 = vpop.f32.mrf.mxu0
        %v3289 = vadd.f32 0.0, %v3288
        %v3290 = vpop.f32.mrf.mxu0
        %v3291 = vadd.f32 0.0, %v3290
        %3292 = vmatmul.bf16.gmra.mxu0 %v2100
        %v3293 = vpop.f32.mrf.mxu0
        %v3294 = vadd.f32 0.0, %v3293
        %v3295 = vpop.f32.mrf.mxu0
        %v3296 = vadd.f32 0.0, %v3295
        %3297 = vmatmul.bf16.gmra.mxu0 %v2101
        %v3298 = vpop.f32.mrf.mxu0
        %v3299 = vadd.f32 0.0, %v3298
        %v3300 = vpop.f32.mrf.mxu0
        %v3301 = vadd.f32 0.0, %v3300
        %3302 = vmatmul.bf16.gmra.mxu0 %v2102
        %v3303 = vpop.f32.mrf.mxu0
        %v3304 = vadd.f32 0.0, %v3303
        %v3305 = vpop.f32.mrf.mxu0
        %v3306 = vadd.f32 0.0, %v3305
        %3307 = vmatmul.bf16.gmra.mxu0 %v2103
        %v3308 = vpop.f32.mrf.mxu0
        %v3309 = vadd.f32 0.0, %v3308
        %v3310 = vpop.f32.mrf.mxu0
        %v3311 = vadd.f32 0.0, %v3310
        %3312 = vmatmul.bf16.gmra.mxu0 %v2104
        %v3313 = vpop.f32.mrf.mxu0
        %v3314 = vadd.f32 0.0, %v3313
        %v3315 = vpop.f32.mrf.mxu0
        %v3316 = vadd.f32 0.0, %v3315
        %3317 = vmatmul.bf16.gmra.mxu0 %v2105
        %v3318 = vpop.f32.mrf.mxu0
        %v3319 = vadd.f32 0.0, %v3318
        %v3320 = vpop.f32.mrf.mxu0
        %v3321 = vadd.f32 0.0, %v3320
        %3322 = vmatmul.bf16.gmra.mxu0 %v2106
        %v3323 = vpop.f32.mrf.mxu0
        %v3324 = vadd.f32 0.0, %v3323
        %v3325 = vpop.f32.mrf.mxu0
        %v3326 = vadd.f32 0.0, %v3325
        %3327 = vmatmul.bf16.gmra.mxu0 %v2107
        %v3328 = vpop.f32.mrf.mxu0
        %v3329 = vadd.f32 0.0, %v3328
        %v3330 = vpop.f32.mrf.mxu0
        %v3331 = vadd.f32 0.0, %v3330
        %3332 = vdwg.mxu0
        %3333 = vmatpush.bf16.msra.mxu0 %v3115
        %3334 = vmatpush.bf16.msra.mxu0 %v3114
        %3335 = vmatpush.bf16.msra.mxu0 %v3113
        %3336 = vmatpush.bf16.msra.mxu0 %v3112
        %3337 = vmatpush.bf16.msra.mxu0 %v3111
        %3338 = vmatpush.bf16.msra.mxu0 %v3110
        %3339 = vmatpush.bf16.msra.mxu0 %v3109
        %3340 = vmatpush.bf16.msra.mxu0 %v3108
        %3341 = vmatmul.bf16.gmra.mxu0 %v2156
        %v3342 = vpop.f32.mrf.mxu0
        %v3343 = vadd.f32 %v3254, %v3342
        %v3344 = vpop.f32.mrf.mxu0
        %v3345 = vadd.f32 %v3256, %v3344
        %3346 = vmatmul.bf16.gmra.mxu0 %v2157
        %v3347 = vpop.f32.mrf.mxu0
        %v3348 = vadd.f32 %v3259, %v3347
        %v3349 = vpop.f32.mrf.mxu0
        %v3350 = vadd.f32 %v3261, %v3349
        %3351 = vmatmul.bf16.gmra.mxu0 %v2158
        %v3352 = vpop.f32.mrf.mxu0
        %v3353 = vadd.f32 %v3264, %v3352
        %v3354 = vpop.f32.mrf.mxu0
        %v3355 = vadd.f32 %v3266, %v3354
        %3356 = vmatmul.bf16.gmra.mxu0 %v2159
        %v3357 = vpop.f32.mrf.mxu0
        %v3358 = vadd.f32 %v3269, %v3357
        %v3359 = vpop.f32.mrf.mxu0
        %v3360 = vadd.f32 %v3271, %v3359
        %3361 = vmatmul.bf16.gmra.mxu0 %v2160
        %v3362 = vpop.f32.mrf.mxu0
        %v3363 = vadd.f32 %v3274, %v3362
        %v3364 = vpop.f32.mrf.mxu0
        %v3365 = vadd.f32 %v3276, %v3364
        %3366 = vmatmul.bf16.gmra.mxu0 %v2161
        %v3367 = vpop.f32.mrf.mxu0
        %v3368 = vadd.f32 %v3279, %v3367
        %v3369 = vpop.f32.mrf.mxu0
        %v3370 = vadd.f32 %v3281, %v3369
        %3371 = vmatmul.bf16.gmra.mxu0 %v2162
        %v3372 = vpop.f32.mrf.mxu0
        %v3373 = vadd.f32 %v3284, %v3372
        %v3374 = vpop.f32.mrf.mxu0
        %v3375 = vadd.f32 %v3286, %v3374
        %3376 = vmatmul.bf16.gmra.mxu0 %v2163
        %v3377 = vpop.f32.mrf.mxu0
        %v3378 = vadd.f32 %v3289, %v3377
        %v3379 = vpop.f32.mrf.mxu0
        %v3380 = vadd.f32 %v3291, %v3379
        %3381 = vmatmul.bf16.gmra.mxu0 %v2164
        %v3382 = vpop.f32.mrf.mxu0
        %v3383 = vadd.f32 %v3294, %v3382
        %v3384 = vpop.f32.mrf.mxu0
        %v3385 = vadd.f32 %v3296, %v3384
        %3386 = vmatmul.bf16.gmra.mxu0 %v2165
        %v3387 = vpop.f32.mrf.mxu0
        %v3388 = vadd.f32 %v3299, %v3387
        %v3389 = vpop.f32.mrf.mxu0
        %v3390 = vadd.f32 %v3301, %v3389
        %3391 = vmatmul.bf16.gmra.mxu0 %v2166
        %v3392 = vpop.f32.mrf.mxu0
        %v3393 = vadd.f32 %v3304, %v3392
        %v3394 = vpop.f32.mrf.mxu0
        %v3395 = vadd.f32 %v3306, %v3394
        %3396 = vmatmul.bf16.gmra.mxu0 %v2167
        %v3397 = vpop.f32.mrf.mxu0
        %v3398 = vadd.f32 %v3309, %v3397
        %v3399 = vpop.f32.mrf.mxu0
        %v3400 = vadd.f32 %v3311, %v3399
        %3401 = vmatmul.bf16.gmra.mxu0 %v2168
        %v3402 = vpop.f32.mrf.mxu0
        %v3403 = vadd.f32 %v3314, %v3402
        %v3404 = vpop.f32.mrf.mxu0
        %v3405 = vadd.f32 %v3316, %v3404
        %3406 = vmatmul.bf16.gmra.mxu0 %v2169
        %v3407 = vpop.f32.mrf.mxu0
        %v3408 = vadd.f32 %v3319, %v3407
        %v3409 = vpop.f32.mrf.mxu0
        %v3410 = vadd.f32 %v3321, %v3409
        %3411 = vmatmul.bf16.gmra.mxu0 %v2170
        %v3412 = vpop.f32.mrf.mxu0
        %v3413 = vadd.f32 %v3324, %v3412
        %v3414 = vpop.f32.mrf.mxu0
        %v3415 = vadd.f32 %v3326, %v3414
        %3416 = vmatmul.bf16.gmra.mxu0 %v2171
        %v3417 = vpop.f32.mrf.mxu0
        %v3418 = vadd.f32 %v3329, %v3417
        %v3419 = vpop.f32.mrf.mxu0
        %v3420 = vadd.f32 %v3331, %v3419
        %3421 = vdwg.mxu0
        %3422 = vmatpush.bf16.msra.mxu0 %v3123
        %3423 = vmatpush.bf16.msra.mxu0 %v3122
        %3424 = vmatpush.bf16.msra.mxu0 %v3121
        %3425 = vmatpush.bf16.msra.mxu0 %v3120
        %3426 = vmatpush.bf16.msra.mxu0 %v3119
        %3427 = vmatpush.bf16.msra.mxu0 %v3118
        %3428 = vmatpush.bf16.msra.mxu0 %v3117
        %3429 = vmatpush.bf16.msra.mxu0 %v3116
        %3430 = vmatmul.bf16.gmra.mxu0 %v2220
        %v3431 = vpop.f32.mrf.mxu0
        %v3432 = vadd.f32 %v3343, %v3431
        %v3433 = vpop.f32.mrf.mxu0
        %v3434 = vadd.f32 %v3345, %v3433
        %3435 = vmatmul.bf16.gmra.mxu0 %v2221
        %v3436 = vpop.f32.mrf.mxu0
        %v3437 = vadd.f32 %v3348, %v3436
        %v3438 = vpop.f32.mrf.mxu0
        %v3439 = vadd.f32 %v3350, %v3438
        %3440 = vmatmul.bf16.gmra.mxu0 %v2222
        %v3441 = vpop.f32.mrf.mxu0
        %v3442 = vadd.f32 %v3353, %v3441
        %v3443 = vpop.f32.mrf.mxu0
        %v3444 = vadd.f32 %v3355, %v3443
        %3445 = vmatmul.bf16.gmra.mxu0 %v2223
        %v3446 = vpop.f32.mrf.mxu0
        %v3447 = vadd.f32 %v3358, %v3446
        %v3448 = vpop.f32.mrf.mxu0
        %v3449 = vadd.f32 %v3360, %v3448
        %3450 = vmatmul.bf16.gmra.mxu0 %v2224
        %v3451 = vpop.f32.mrf.mxu0
        %v3452 = vadd.f32 %v3363, %v3451
        %v3453 = vpop.f32.mrf.mxu0
        %v3454 = vadd.f32 %v3365, %v3453
        %3455 = vmatmul.bf16.gmra.mxu0 %v2225
        %v3456 = vpop.f32.mrf.mxu0
        %v3457 = vadd.f32 %v3368, %v3456
        %v3458 = vpop.f32.mrf.mxu0
        %v3459 = vadd.f32 %v3370, %v3458
        %3460 = vmatmul.bf16.gmra.mxu0 %v2226
        %v3461 = vpop.f32.mrf.mxu0
        %v3462 = vadd.f32 %v3373, %v3461
        %v3463 = vpop.f32.mrf.mxu0
        %v3464 = vadd.f32 %v3375, %v3463
        %3465 = vmatmul.bf16.gmra.mxu0 %v2227
        %v3466 = vpop.f32.mrf.mxu0
        %v3467 = vadd.f32 %v3378, %v3466
        %v3468 = vpop.f32.mrf.mxu0
        %v3469 = vadd.f32 %v3380, %v3468
        %3470 = vmatmul.bf16.gmra.mxu0 %v2228
        %v3471 = vpop.f32.mrf.mxu0
        %v3472 = vadd.f32 %v3383, %v3471
        %v3473 = vpop.f32.mrf.mxu0
        %v3474 = vadd.f32 %v3385, %v3473
        %3475 = vmatmul.bf16.gmra.mxu0 %v2229
        %v3476 = vpop.f32.mrf.mxu0
        %v3477 = vadd.f32 %v3388, %v3476
        %v3478 = vpop.f32.mrf.mxu0
        %v3479 = vadd.f32 %v3390, %v3478
        %3480 = vmatmul.bf16.gmra.mxu0 %v2230
        %v3481 = vpop.f32.mrf.mxu0
        %v3482 = vadd.f32 %v3393, %v3481
        %v3483 = vpop.f32.mrf.mxu0
        %v3484 = vadd.f32 %v3395, %v3483
        %3485 = vmatmul.bf16.gmra.mxu0 %v2231
        %v3486 = vpop.f32.mrf.mxu0
        %v3487 = vadd.f32 %v3398, %v3486
        %v3488 = vpop.f32.mrf.mxu0
        %v3489 = vadd.f32 %v3400, %v3488
        %3490 = vmatmul.bf16.gmra.mxu0 %v2232
        %v3491 = vpop.f32.mrf.mxu0
        %v3492 = vadd.f32 %v3403, %v3491
        %v3493 = vpop.f32.mrf.mxu0
        %v3494 = vadd.f32 %v3405, %v3493
        %3495 = vmatmul.bf16.gmra.mxu0 %v2233
        %v3496 = vpop.f32.mrf.mxu0
        %v3497 = vadd.f32 %v3408, %v3496
        %v3498 = vpop.f32.mrf.mxu0
        %v3499 = vadd.f32 %v3410, %v3498
        %3500 = vmatmul.bf16.gmra.mxu0 %v2234
        %v3501 = vpop.f32.mrf.mxu0
        %v3502 = vadd.f32 %v3413, %v3501
        %v3503 = vpop.f32.mrf.mxu0
        %v3504 = vadd.f32 %v3415, %v3503
        %3505 = vmatmul.bf16.gmra.mxu0 %v2235
        %v3506 = vpop.f32.mrf.mxu0
        %v3507 = vadd.f32 %v3418, %v3506
        %v3508 = vpop.f32.mrf.mxu0
        %v3509 = vadd.f32 %v3420, %v3508
        %3510 = vdwg.mxu0
        %3511 = vmatpush.bf16.msra.mxu0 %v3131
        %3512 = vmatpush.bf16.msra.mxu0 %v3130
        %3513 = vmatpush.bf16.msra.mxu0 %v3129
        %3514 = vmatpush.bf16.msra.mxu0 %v3128
        %3515 = vmatpush.bf16.msra.mxu0 %v3127
        %3516 = vmatpush.bf16.msra.mxu0 %v3126
        %3517 = vmatpush.bf16.msra.mxu0 %v3125
        %3518 = vmatpush.bf16.msra.mxu0 %v3124
        %3519 = vmatmul.bf16.gmra.mxu0 %v2300
        %v3520 = vpop.f32.mrf.mxu0
        %v3521 = vadd.f32 %v3432, %v3520
        %v3522 = vpop.f32.mrf.mxu0
        %v3523 = vadd.f32 %v3434, %v3522
        %3524 = vmatmul.bf16.gmra.mxu0 %v2301
        %v3525 = vpop.f32.mrf.mxu0
        %v3526 = vadd.f32 %v3437, %v3525
        %v3527 = vpop.f32.mrf.mxu0
        %v3528 = vadd.f32 %v3439, %v3527
        %3529 = vmatmul.bf16.gmra.mxu0 %v2302
        %v3530 = vpop.f32.mrf.mxu0
        %v3531 = vadd.f32 %v3442, %v3530
        %v3532 = vpop.f32.mrf.mxu0
        %v3533 = vadd.f32 %v3444, %v3532
        %3534 = vmatmul.bf16.gmra.mxu0 %v2303
        %v3535 = vpop.f32.mrf.mxu0
        %v3536 = vadd.f32 %v3447, %v3535
        %v3537 = vpop.f32.mrf.mxu0
        %v3538 = vadd.f32 %v3449, %v3537
        %3539 = vmatmul.bf16.gmra.mxu0 %v2304
        %v3540 = vpop.f32.mrf.mxu0
        %v3541 = vadd.f32 %v3452, %v3540
        %v3542 = vpop.f32.mrf.mxu0
        %v3543 = vadd.f32 %v3454, %v3542
        %3544 = vmatmul.bf16.gmra.mxu0 %v2305
        %v3545 = vpop.f32.mrf.mxu0
        %v3546 = vadd.f32 %v3457, %v3545
        %v3547 = vpop.f32.mrf.mxu0
        %v3548 = vadd.f32 %v3459, %v3547
        %3549 = vmatmul.bf16.gmra.mxu0 %v2306
        %v3550 = vpop.f32.mrf.mxu0
        %v3551 = vadd.f32 %v3462, %v3550
        %v3552 = vpop.f32.mrf.mxu0
        %v3553 = vadd.f32 %v3464, %v3552
        %3554 = vmatmul.bf16.gmra.mxu0 %v2307
        %v3555 = vpop.f32.mrf.mxu0
        %v3556 = vadd.f32 %v3467, %v3555
        %v3557 = vpop.f32.mrf.mxu0
        %v3558 = vadd.f32 %v3469, %v3557
        %3559 = vmatmul.bf16.gmra.mxu0 %v2308
        %v3560 = vpop.f32.mrf.mxu0
        %v3561 = vadd.f32 %v3472, %v3560
        %v3562 = vpop.f32.mrf.mxu0
        %v3563 = vadd.f32 %v3474, %v3562
        %3564 = vmatmul.bf16.gmra.mxu0 %v2309
        %v3565 = vpop.f32.mrf.mxu0
        %v3566 = vadd.f32 %v3477, %v3565
        %v3567 = vpop.f32.mrf.mxu0
        %v3568 = vadd.f32 %v3479, %v3567
        %3569 = vmatmul.bf16.gmra.mxu0 %v2310
        %v3570 = vpop.f32.mrf.mxu0
        %v3571 = vadd.f32 %v3482, %v3570
        %v3572 = vpop.f32.mrf.mxu0
        %v3573 = vadd.f32 %v3484, %v3572
        %3574 = vmatmul.bf16.gmra.mxu0 %v2311
        %v3575 = vpop.f32.mrf.mxu0
        %v3576 = vadd.f32 %v3487, %v3575
        %v3577 = vpop.f32.mrf.mxu0
        %v3578 = vadd.f32 %v3489, %v3577
        %3579 = vmatmul.bf16.gmra.mxu0 %v2312
        %v3580 = vpop.f32.mrf.mxu0
        %v3581 = vadd.f32 %v3492, %v3580
        %v3582 = vpop.f32.mrf.mxu0
        %v3583 = vadd.f32 %v3494, %v3582
        %3584 = vmatmul.bf16.gmra.mxu0 %v2313
        %v3585 = vpop.f32.mrf.mxu0
        %v3586 = vadd.f32 %v3497, %v3585
        %v3587 = vpop.f32.mrf.mxu0
        %v3588 = vadd.f32 %v3499, %v3587
        %3589 = vmatmul.bf16.gmra.mxu0 %v2314
        %v3590 = vpop.f32.mrf.mxu0
        %v3591 = vadd.f32 %v3502, %v3590
        %v3592 = vpop.f32.mrf.mxu0
        %v3593 = vadd.f32 %v3504, %v3592
        %3594 = vmatmul.bf16.gmra.mxu0 %v2315
        %v3595 = vpop.f32.mrf.mxu0
        %v3596 = vadd.f32 %v3507, %v3595
        %v3597 = vpop.f32.mrf.mxu0
        %v3598 = vadd.f32 %v3509, %v3597
        %3599 = vdwg.mxu0
        %3600 = vmatpush.bf16.msra.mxu0 %v3139
        %3601 = vmatpush.bf16.msra.mxu0 %v3138
        %3602 = vmatpush.bf16.msra.mxu0 %v3137
        %3603 = vmatpush.bf16.msra.mxu0 %v3136
        %3604 = vmatpush.bf16.msra.mxu0 %v3135
        %3605 = vmatpush.bf16.msra.mxu0 %v3134
        %3606 = vmatpush.bf16.msra.mxu0 %v3133
        %3607 = vmatpush.bf16.msra.mxu0 %v3132
        %3608 = vmatmul.bf16.gmra.mxu0 %v2364
        %v3609 = vpop.f32.mrf.mxu0
        %v3610 = vadd.f32 %v3521, %v3609
        %v3611 = vpop.f32.mrf.mxu0
        %v3612 = vadd.f32 %v3523, %v3611
        %3613 = vmatmul.bf16.gmra.mxu0 %v2365
        %v3614 = vpop.f32.mrf.mxu0
        %v3615 = vadd.f32 %v3526, %v3614
        %v3616 = vpop.f32.mrf.mxu0
        %v3617 = vadd.f32 %v3528, %v3616
        %3618 = vmatmul.bf16.gmra.mxu0 %v2366
        %v3619 = vpop.f32.mrf.mxu0
        %v3620 = vadd.f32 %v3531, %v3619
        %v3621 = vpop.f32.mrf.mxu0
        %v3622 = vadd.f32 %v3533, %v3621
        %3623 = vmatmul.bf16.gmra.mxu0 %v2367
        %v3624 = vpop.f32.mrf.mxu0
        %v3625 = vadd.f32 %v3536, %v3624
        %v3626 = vpop.f32.mrf.mxu0
        %v3627 = vadd.f32 %v3538, %v3626
        %3628 = vmatmul.bf16.gmra.mxu0 %v2368
        %v3629 = vpop.f32.mrf.mxu0
        %v3630 = vadd.f32 %v3541, %v3629
        %v3631 = vpop.f32.mrf.mxu0
        %v3632 = vadd.f32 %v3543, %v3631
        %3633 = vmatmul.bf16.gmra.mxu0 %v2369
        %v3634 = vpop.f32.mrf.mxu0
        %v3635 = vadd.f32 %v3546, %v3634
        %v3636 = vpop.f32.mrf.mxu0
        %v3637 = vadd.f32 %v3548, %v3636
        %3638 = vmatmul.bf16.gmra.mxu0 %v2370
        %v3639 = vpop.f32.mrf.mxu0
        %v3640 = vadd.f32 %v3551, %v3639
        %v3641 = vpop.f32.mrf.mxu0
        %v3642 = vadd.f32 %v3553, %v3641
        %3643 = vmatmul.bf16.gmra.mxu0 %v2371
        %v3644 = vpop.f32.mrf.mxu0
        %v3645 = vadd.f32 %v3556, %v3644
        %v3646 = vpop.f32.mrf.mxu0
        %v3647 = vadd.f32 %v3558, %v3646
        %3648 = vmatmul.bf16.gmra.mxu0 %v2372
        %v3649 = vpop.f32.mrf.mxu0
        %v3650 = vadd.f32 %v3561, %v3649
        %v3651 = vpop.f32.mrf.mxu0
        %v3652 = vadd.f32 %v3563, %v3651
        %3653 = vmatmul.bf16.gmra.mxu0 %v2373
        %v3654 = vpop.f32.mrf.mxu0
        %v3655 = vadd.f32 %v3566, %v3654
        %v3656 = vpop.f32.mrf.mxu0
        %v3657 = vadd.f32 %v3568, %v3656
        %3658 = vmatmul.bf16.gmra.mxu0 %v2374
        %v3659 = vpop.f32.mrf.mxu0
        %v3660 = vadd.f32 %v3571, %v3659
        %v3661 = vpop.f32.mrf.mxu0
        %v3662 = vadd.f32 %v3573, %v3661
        %3663 = vmatmul.bf16.gmra.mxu0 %v2375
        %v3664 = vpop.f32.mrf.mxu0
        %v3665 = vadd.f32 %v3576, %v3664
        %v3666 = vpop.f32.mrf.mxu0
        %v3667 = vadd.f32 %v3578, %v3666
        %3668 = vmatmul.bf16.gmra.mxu0 %v2376
        %v3669 = vpop.f32.mrf.mxu0
        %v3670 = vadd.f32 %v3581, %v3669
        %v3671 = vpop.f32.mrf.mxu0
        %v3672 = vadd.f32 %v3583, %v3671
        %3673 = vmatmul.bf16.gmra.mxu0 %v2377
        %v3674 = vpop.f32.mrf.mxu0
        %v3675 = vadd.f32 %v3586, %v3674
        %v3676 = vpop.f32.mrf.mxu0
        %v3677 = vadd.f32 %v3588, %v3676
        %3678 = vmatmul.bf16.gmra.mxu0 %v2378
        %v3679 = vpop.f32.mrf.mxu0
        %v3680 = vadd.f32 %v3591, %v3679
        %v3681 = vpop.f32.mrf.mxu0
        %v3682 = vadd.f32 %v3593, %v3681
        %3683 = vmatmul.bf16.gmra.mxu0 %v2379
        %v3684 = vpop.f32.mrf.mxu0
        %v3685 = vadd.f32 %v3596, %v3684
        %v3686 = vpop.f32.mrf.mxu0
        %v3687 = vadd.f32 %v3598, %v3686
        %3688 = vdwg.mxu0
        %3689 = vmatpush.bf16.msra.mxu0 %v3147
        %3690 = vmatpush.bf16.msra.mxu0 %v3146
        %3691 = vmatpush.bf16.msra.mxu0 %v3145
        %3692 = vmatpush.bf16.msra.mxu0 %v3144
        %3693 = vmatpush.bf16.msra.mxu0 %v3143
        %3694 = vmatpush.bf16.msra.mxu0 %v3142
        %3695 = vmatpush.bf16.msra.mxu0 %v3141
        %3696 = vmatpush.bf16.msra.mxu0 %v3140
        %3697 = vmatmul.bf16.gmra.mxu0 %v2428
        %v3698 = vpop.f32.mrf.mxu0
        %v3699 = vadd.f32 %v3610, %v3698
        %v3700 = vpop.f32.mrf.mxu0
        %v3701 = vadd.f32 %v3612, %v3700
        %3702 = vmatmul.bf16.gmra.mxu0 %v2429
        %v3703 = vpop.f32.mrf.mxu0
        %v3704 = vadd.f32 %v3615, %v3703
        %v3705 = vpop.f32.mrf.mxu0
        %v3706 = vadd.f32 %v3617, %v3705
        %3707 = vmatmul.bf16.gmra.mxu0 %v2430
        %v3708 = vpop.f32.mrf.mxu0
        %v3709 = vadd.f32 %v3620, %v3708
        %v3710 = vpop.f32.mrf.mxu0
        %v3711 = vadd.f32 %v3622, %v3710
        %3712 = vmatmul.bf16.gmra.mxu0 %v2431
        %v3713 = vpop.f32.mrf.mxu0
        %v3714 = vadd.f32 %v3625, %v3713
        %v3715 = vpop.f32.mrf.mxu0
        %v3716 = vadd.f32 %v3627, %v3715
        %3717 = vmatmul.bf16.gmra.mxu0 %v2432
        %v3718 = vpop.f32.mrf.mxu0
        %v3719 = vadd.f32 %v3630, %v3718
        %v3720 = vpop.f32.mrf.mxu0
        %v3721 = vadd.f32 %v3632, %v3720
        %3722 = vmatmul.bf16.gmra.mxu0 %v2433
        %v3723 = vpop.f32.mrf.mxu0
        %v3724 = vadd.f32 %v3635, %v3723
        %v3725 = vpop.f32.mrf.mxu0
        %v3726 = vadd.f32 %v3637, %v3725
        %3727 = vmatmul.bf16.gmra.mxu0 %v2434
        %v3728 = vpop.f32.mrf.mxu0
        %v3729 = vadd.f32 %v3640, %v3728
        %v3730 = vpop.f32.mrf.mxu0
        %v3731 = vadd.f32 %v3642, %v3730
        %3732 = vmatmul.bf16.gmra.mxu0 %v2435
        %v3733 = vpop.f32.mrf.mxu0
        %v3734 = vadd.f32 %v3645, %v3733
        %v3735 = vpop.f32.mrf.mxu0
        %v3736 = vadd.f32 %v3647, %v3735
        %3737 = vmatmul.bf16.gmra.mxu0 %v2436
        %v3738 = vpop.f32.mrf.mxu0
        %v3739 = vadd.f32 %v3650, %v3738
        %v3740 = vpop.f32.mrf.mxu0
        %v3741 = vadd.f32 %v3652, %v3740
        %3742 = vmatmul.bf16.gmra.mxu0 %v2437
        %v3743 = vpop.f32.mrf.mxu0
        %v3744 = vadd.f32 %v3655, %v3743
        %v3745 = vpop.f32.mrf.mxu0
        %v3746 = vadd.f32 %v3657, %v3745
        %3747 = vmatmul.bf16.gmra.mxu0 %v2438
        %v3748 = vpop.f32.mrf.mxu0
        %v3749 = vadd.f32 %v3660, %v3748
        %v3750 = vpop.f32.mrf.mxu0
        %v3751 = vadd.f32 %v3662, %v3750
        %3752 = vmatmul.bf16.gmra.mxu0 %v2439
        %v3753 = vpop.f32.mrf.mxu0
        %v3754 = vadd.f32 %v3665, %v3753
        %v3755 = vpop.f32.mrf.mxu0
        %v3756 = vadd.f32 %v3667, %v3755
        %3757 = vmatmul.bf16.gmra.mxu0 %v2440
        %v3758 = vpop.f32.mrf.mxu0
        %v3759 = vadd.f32 %v3670, %v3758
        %v3760 = vpop.f32.mrf.mxu0
        %v3761 = vadd.f32 %v3672, %v3760
        %3762 = vmatmul.bf16.gmra.mxu0 %v2441
        %v3763 = vpop.f32.mrf.mxu0
        %v3764 = vadd.f32 %v3675, %v3763
        %v3765 = vpop.f32.mrf.mxu0
        %v3766 = vadd.f32 %v3677, %v3765
        %3767 = vmatmul.bf16.gmra.mxu0 %v2442
        %v3768 = vpop.f32.mrf.mxu0
        %v3769 = vadd.f32 %v3680, %v3768
        %v3770 = vpop.f32.mrf.mxu0
        %v3771 = vadd.f32 %v3682, %v3770
        %3772 = vmatmul.bf16.gmra.mxu0 %v2443
        %v3773 = vpop.f32.mrf.mxu0
        %v3774 = vadd.f32 %v3685, %v3773
        %v3775 = vpop.f32.mrf.mxu0
        %v3776 = vadd.f32 %v3687, %v3775
        %3777 = vdwg.mxu0
        %3778 = vmatpush.bf16.msra.mxu0 %v3155
        %3779 = vmatpush.bf16.msra.mxu0 %v3154
        %3780 = vmatpush.bf16.msra.mxu0 %v3153
        %3781 = vmatpush.bf16.msra.mxu0 %v3152
        %3782 = vmatpush.bf16.msra.mxu0 %v3151
        %3783 = vmatpush.bf16.msra.mxu0 %v3150
        %3784 = vmatpush.bf16.msra.mxu0 %v3149
        %3785 = vmatpush.bf16.msra.mxu0 %v3148
        %3786 = vmatmul.bf16.gmra.mxu0 %v2508
        %v3787 = vpop.f32.mrf.mxu0
        %v3788 = vadd.f32 %v3699, %v3787
        %v3789 = vpop.f32.mrf.mxu0
        %v3790 = vadd.f32 %v3701, %v3789
        %3791 = vmatmul.bf16.gmra.mxu0 %v2509
        %v3792 = vpop.f32.mrf.mxu0
        %v3793 = vadd.f32 %v3704, %v3792
        %v3794 = vpop.f32.mrf.mxu0
        %v3795 = vadd.f32 %v3706, %v3794
        %3796 = vmatmul.bf16.gmra.mxu0 %v2510
        %v3797 = vpop.f32.mrf.mxu0
        %v3798 = vadd.f32 %v3709, %v3797
        %v3799 = vpop.f32.mrf.mxu0
        %v3800 = vadd.f32 %v3711, %v3799
        %3801 = vmatmul.bf16.gmra.mxu0 %v2511
        %v3802 = vpop.f32.mrf.mxu0
        %v3803 = vadd.f32 %v3714, %v3802
        %v3804 = vpop.f32.mrf.mxu0
        %v3805 = vadd.f32 %v3716, %v3804
        %3806 = vmatmul.bf16.gmra.mxu0 %v2512
        %v3807 = vpop.f32.mrf.mxu0
        %v3808 = vadd.f32 %v3719, %v3807
        %v3809 = vpop.f32.mrf.mxu0
        %v3810 = vadd.f32 %v3721, %v3809
        %3811 = vmatmul.bf16.gmra.mxu0 %v2513
        %v3812 = vpop.f32.mrf.mxu0
        %v3813 = vadd.f32 %v3724, %v3812
        %v3814 = vpop.f32.mrf.mxu0
        %v3815 = vadd.f32 %v3726, %v3814
        %3816 = vmatmul.bf16.gmra.mxu0 %v2514
        %v3817 = vpop.f32.mrf.mxu0
        %v3818 = vadd.f32 %v3729, %v3817
        %v3819 = vpop.f32.mrf.mxu0
        %v3820 = vadd.f32 %v3731, %v3819
        %3821 = vmatmul.bf16.gmra.mxu0 %v2515
        %v3822 = vpop.f32.mrf.mxu0
        %v3823 = vadd.f32 %v3734, %v3822
        %v3824 = vpop.f32.mrf.mxu0
        %v3825 = vadd.f32 %v3736, %v3824
        %3826 = vmatmul.bf16.gmra.mxu0 %v2516
        %v3827 = vpop.f32.mrf.mxu0
        %v3828 = vadd.f32 %v3739, %v3827
        %v3829 = vpop.f32.mrf.mxu0
        %v3830 = vadd.f32 %v3741, %v3829
        %3831 = vmatmul.bf16.gmra.mxu0 %v2517
        %v3832 = vpop.f32.mrf.mxu0
        %v3833 = vadd.f32 %v3744, %v3832
        %v3834 = vpop.f32.mrf.mxu0
        %v3835 = vadd.f32 %v3746, %v3834
        %3836 = vmatmul.bf16.gmra.mxu0 %v2518
        %v3837 = vpop.f32.mrf.mxu0
        %v3838 = vadd.f32 %v3749, %v3837
        %v3839 = vpop.f32.mrf.mxu0
        %v3840 = vadd.f32 %v3751, %v3839
        %3841 = vmatmul.bf16.gmra.mxu0 %v2519
        %v3842 = vpop.f32.mrf.mxu0
        %v3843 = vadd.f32 %v3754, %v3842
        %v3844 = vpop.f32.mrf.mxu0
        %v3845 = vadd.f32 %v3756, %v3844
        %3846 = vmatmul.bf16.gmra.mxu0 %v2520
        %v3847 = vpop.f32.mrf.mxu0
        %v3848 = vadd.f32 %v3759, %v3847
        %v3849 = vpop.f32.mrf.mxu0
        %v3850 = vadd.f32 %v3761, %v3849
        %3851 = vmatmul.bf16.gmra.mxu0 %v2521
        %v3852 = vpop.f32.mrf.mxu0
        %v3853 = vadd.f32 %v3764, %v3852
        %v3854 = vpop.f32.mrf.mxu0
        %v3855 = vadd.f32 %v3766, %v3854
        %3856 = vmatmul.bf16.gmra.mxu0 %v2522
        %v3857 = vpop.f32.mrf.mxu0
        %v3858 = vadd.f32 %v3769, %v3857
        %v3859 = vpop.f32.mrf.mxu0
        %v3860 = vadd.f32 %v3771, %v3859
        %3861 = vmatmul.bf16.gmra.mxu0 %v2523
        %v3862 = vpop.f32.mrf.mxu0
        %v3863 = vadd.f32 %v3774, %v3862
        %v3864 = vpop.f32.mrf.mxu0
        %v3865 = vadd.f32 %v3776, %v3864
        %3866 = vdwg.mxu0
        %3867 = vmatpush.bf16.msra.mxu0 %v3163
        %3868 = vmatpush.bf16.msra.mxu0 %v3162
        %3869 = vmatpush.bf16.msra.mxu0 %v3161
        %3870 = vmatpush.bf16.msra.mxu0 %v3160
        %3871 = vmatpush.bf16.msra.mxu0 %v3159
        %3872 = vmatpush.bf16.msra.mxu0 %v3158
        %3873 = vmatpush.bf16.msra.mxu0 %v3157
        %3874 = vmatpush.bf16.msra.mxu0 %v3156
        %3875 = vmatmul.bf16.gmra.mxu0 %v2572
        %v3876 = vpop.f32.mrf.mxu0
        %v3877 = vadd.f32 %v3788, %v3876
        %v3878 = vpop.f32.mrf.mxu0
        %v3879 = vadd.f32 %v3790, %v3878
        %3880 = vmatmul.bf16.gmra.mxu0 %v2573
        %v3881 = vpop.f32.mrf.mxu0
        %v3882 = vadd.f32 %v3793, %v3881
        %v3883 = vpop.f32.mrf.mxu0
        %v3884 = vadd.f32 %v3795, %v3883
        %3885 = vmatmul.bf16.gmra.mxu0 %v2574
        %v3886 = vpop.f32.mrf.mxu0
        %v3887 = vadd.f32 %v3798, %v3886
        %v3888 = vpop.f32.mrf.mxu0
        %v3889 = vadd.f32 %v3800, %v3888
        %3890 = vmatmul.bf16.gmra.mxu0 %v2575
        %v3891 = vpop.f32.mrf.mxu0
        %v3892 = vadd.f32 %v3803, %v3891
        %v3893 = vpop.f32.mrf.mxu0
        %v3894 = vadd.f32 %v3805, %v3893
        %3895 = vmatmul.bf16.gmra.mxu0 %v2576
        %v3896 = vpop.f32.mrf.mxu0
        %v3897 = vadd.f32 %v3808, %v3896
        %v3898 = vpop.f32.mrf.mxu0
        %v3899 = vadd.f32 %v3810, %v3898
        %3900 = vmatmul.bf16.gmra.mxu0 %v2577
        %v3901 = vpop.f32.mrf.mxu0
        %v3902 = vadd.f32 %v3813, %v3901
        %v3903 = vpop.f32.mrf.mxu0
        %v3904 = vadd.f32 %v3815, %v3903
        %3905 = vmatmul.bf16.gmra.mxu0 %v2578
        %v3906 = vpop.f32.mrf.mxu0
        %v3907 = vadd.f32 %v3818, %v3906
        %v3908 = vpop.f32.mrf.mxu0
        %v3909 = vadd.f32 %v3820, %v3908
        %3910 = vmatmul.bf16.gmra.mxu0 %v2579
        %v3911 = vpop.f32.mrf.mxu0
        %v3912 = vadd.f32 %v3823, %v3911
        %v3913 = vpop.f32.mrf.mxu0
        %v3914 = vadd.f32 %v3825, %v3913
        %3915 = vmatmul.bf16.gmra.mxu0 %v2580
        %v3916 = vpop.f32.mrf.mxu0
        %v3917 = vadd.f32 %v3828, %v3916
        %v3918 = vpop.f32.mrf.mxu0
        %v3919 = vadd.f32 %v3830, %v3918
        %3920 = vmatmul.bf16.gmra.mxu0 %v2581
        %v3921 = vpop.f32.mrf.mxu0
        %v3922 = vadd.f32 %v3833, %v3921
        %v3923 = vpop.f32.mrf.mxu0
        %v3924 = vadd.f32 %v3835, %v3923
        %3925 = vmatmul.bf16.gmra.mxu0 %v2582
        %v3926 = vpop.f32.mrf.mxu0
        %v3927 = vadd.f32 %v3838, %v3926
        %v3928 = vpop.f32.mrf.mxu0
        %v3929 = vadd.f32 %v3840, %v3928
        %3930 = vmatmul.bf16.gmra.mxu0 %v2583
        %v3931 = vpop.f32.mrf.mxu0
        %v3932 = vadd.f32 %v3843, %v3931
        %v3933 = vpop.f32.mrf.mxu0
        %v3934 = vadd.f32 %v3845, %v3933
        %3935 = vmatmul.bf16.gmra.mxu0 %v2584
        %v3936 = vpop.f32.mrf.mxu0
        %v3937 = vadd.f32 %v3848, %v3936
        %v3938 = vpop.f32.mrf.mxu0
        %v3939 = vadd.f32 %v3850, %v3938
        %3940 = vmatmul.bf16.gmra.mxu0 %v2585
        %v3941 = vpop.f32.mrf.mxu0
        %v3942 = vadd.f32 %v3853, %v3941
        %v3943 = vpop.f32.mrf.mxu0
        %v3944 = vadd.f32 %v3855, %v3943
        %3945 = vmatmul.bf16.gmra.mxu0 %v2586
        %v3946 = vpop.f32.mrf.mxu0
        %v3947 = vadd.f32 %v3858, %v3946
        %v3948 = vpop.f32.mrf.mxu0
        %v3949 = vadd.f32 %v3860, %v3948
        %3950 = vmatmul.bf16.gmra.mxu0 %v2587
        %v3951 = vpop.f32.mrf.mxu0
        %v3952 = vadd.f32 %v3863, %v3951
        %v3953 = vpop.f32.mrf.mxu0
        %v3954 = vadd.f32 %v3865, %v3953
        %3955 = vdwg.mxu0
        %3956 = vmatpush.bf16.msra.mxu0 %v3171
        %3957 = vmatpush.bf16.msra.mxu0 %v3170
        %3958 = vmatpush.bf16.msra.mxu0 %v3169
        %3959 = vmatpush.bf16.msra.mxu0 %v3168
        %3960 = vmatpush.bf16.msra.mxu0 %v3167
        %3961 = vmatpush.bf16.msra.mxu0 %v3166
        %3962 = vmatpush.bf16.msra.mxu0 %v3165
        %3963 = vmatpush.bf16.msra.mxu0 %v3164
        %3964 = vmatmul.bf16.gmra.mxu0 %v2636
        %v3965 = vpop.f32.mrf.mxu0
        %v3966 = vadd.f32 %v3877, %v3965
        %v3967 = vpop.f32.mrf.mxu0
        %v3968 = vadd.f32 %v3879, %v3967
        %3969 = vmatmul.bf16.gmra.mxu0 %v2637
        %v3970 = vpop.f32.mrf.mxu0
        %v3971 = vadd.f32 %v3882, %v3970
        %v3972 = vpop.f32.mrf.mxu0
        %v3973 = vadd.f32 %v3884, %v3972
        %3974 = vmatmul.bf16.gmra.mxu0 %v2638
        %v3975 = vpop.f32.mrf.mxu0
        %v3976 = vadd.f32 %v3887, %v3975
        %v3977 = vpop.f32.mrf.mxu0
        %v3978 = vadd.f32 %v3889, %v3977
        %3979 = vmatmul.bf16.gmra.mxu0 %v2639
        %v3980 = vpop.f32.mrf.mxu0
        %v3981 = vadd.f32 %v3892, %v3980
        %v3982 = vpop.f32.mrf.mxu0
        %v3983 = vadd.f32 %v3894, %v3982
        %3984 = vmatmul.bf16.gmra.mxu0 %v2640
        %v3985 = vpop.f32.mrf.mxu0
        %v3986 = vadd.f32 %v3897, %v3985
        %v3987 = vpop.f32.mrf.mxu0
        %v3988 = vadd.f32 %v3899, %v3987
        %3989 = vmatmul.bf16.gmra.mxu0 %v2641
        %v3990 = vpop.f32.mrf.mxu0
        %v3991 = vadd.f32 %v3902, %v3990
        %v3992 = vpop.f32.mrf.mxu0
        %v3993 = vadd.f32 %v3904, %v3992
        %3994 = vmatmul.bf16.gmra.mxu0 %v2642
        %v3995 = vpop.f32.mrf.mxu0
        %v3996 = vadd.f32 %v3907, %v3995
        %v3997 = vpop.f32.mrf.mxu0
        %v3998 = vadd.f32 %v3909, %v3997
        %3999 = vmatmul.bf16.gmra.mxu0 %v2643
        %v4000 = vpop.f32.mrf.mxu0
        %v4001 = vadd.f32 %v3912, %v4000
        %v4002 = vpop.f32.mrf.mxu0
        %v4003 = vadd.f32 %v3914, %v4002
        %4004 = vmatmul.bf16.gmra.mxu0 %v2644
        %v4005 = vpop.f32.mrf.mxu0
        %v4006 = vadd.f32 %v3917, %v4005
        %v4007 = vpop.f32.mrf.mxu0
        %v4008 = vadd.f32 %v3919, %v4007
        %4009 = vmatmul.bf16.gmra.mxu0 %v2645
        %v4010 = vpop.f32.mrf.mxu0
        %v4011 = vadd.f32 %v3922, %v4010
        %v4012 = vpop.f32.mrf.mxu0
        %v4013 = vadd.f32 %v3924, %v4012
        %4014 = vmatmul.bf16.gmra.mxu0 %v2646
        %v4015 = vpop.f32.mrf.mxu0
        %v4016 = vadd.f32 %v3927, %v4015
        %v4017 = vpop.f32.mrf.mxu0
        %v4018 = vadd.f32 %v3929, %v4017
        %4019 = vmatmul.bf16.gmra.mxu0 %v2647
        %v4020 = vpop.f32.mrf.mxu0
        %v4021 = vadd.f32 %v3932, %v4020
        %v4022 = vpop.f32.mrf.mxu0
        %v4023 = vadd.f32 %v3934, %v4022
        %4024 = vmatmul.bf16.gmra.mxu0 %v2648
        %v4025 = vpop.f32.mrf.mxu0
        %v4026 = vadd.f32 %v3937, %v4025
        %v4027 = vpop.f32.mrf.mxu0
        %v4028 = vadd.f32 %v3939, %v4027
        %4029 = vmatmul.bf16.gmra.mxu0 %v2649
        %v4030 = vpop.f32.mrf.mxu0
        %v4031 = vadd.f32 %v3942, %v4030
        %v4032 = vpop.f32.mrf.mxu0
        %v4033 = vadd.f32 %v3944, %v4032
        %4034 = vmatmul.bf16.gmra.mxu0 %v2650
        %v4035 = vpop.f32.mrf.mxu0
        %v4036 = vadd.f32 %v3947, %v4035
        %v4037 = vpop.f32.mrf.mxu0
        %v4038 = vadd.f32 %v3949, %v4037
        %4039 = vmatmul.bf16.gmra.mxu0 %v2651
        %v4040 = vpop.f32.mrf.mxu0
        %v4041 = vadd.f32 %v3952, %v4040
        %v4042 = vpop.f32.mrf.mxu0
        %v4043 = vadd.f32 %v3954, %v4042
        %4044 = vdwg.mxu0
        %4045 = vst [vmem:[%s194] sm:$0xff] %v3966
        %4046 = vst [vmem:[%s194 + $0x8] sm:$0xff] %v3968
        %4047 = vst [vmem:[%s194 + $0x10] sm:$0xff] %v3971
        %4048 = vst [vmem:[%s194 + $0x18] sm:$0xff] %v3973
        %4049 = vst [vmem:[%s194 + $0x20] sm:$0xff] %v3976
        %4050 = vst [vmem:[%s194 + $0x28] sm:$0xff] %v3978
        %4051 = vst [vmem:[%s194 + $0x30] sm:$0xff] %v3981
        %4052 = vst [vmem:[%s194 + $0x38] sm:$0xff] %v3983
        %4053 = vst [vmem:[%s194 + $0x40] sm:$0xff] %v3986
        %4054 = vst [vmem:[%s194 + $0x48] sm:$0xff] %v3988
        %4055 = vst [vmem:[%s194 + $0x50] sm:$0xff] %v3991
        %4056 = vst [vmem:[%s194 + $0x58] sm:$0xff] %v3993
        %4057 = vst [vmem:[%s194 + $0x60] sm:$0xff] %v3996
        %4058 = vst [vmem:[%s194 + $0x68] sm:$0xff] %v3998
        %4059 = vst [vmem:[%s194 + $0x70] sm:$0xff] %v4001
        %4060 = vst [vmem:[%s194 + $0x78] sm:$0xff] %v4003
        %4061 = vst [vmem:[%s194 + $0x80] sm:$0xff] %v4006
        %4062 = vst [vmem:[%s194 + $0x88] sm:$0xff] %v4008
        %4063 = vst [vmem:[%s194 + $0x90] sm:$0xff] %v4011
        %4064 = vst [vmem:[%s194 + $0x98] sm:$0xff] %v4013
        %4065 = vst [vmem:[%s194 + $0xa0] sm:$0xff] %v4016
        %4066 = vst [vmem:[%s194 + $0xa8] sm:$0xff] %v4018
        %4067 = vst [vmem:[%s194 + $0xb0] sm:$0xff] %v4021
        %4068 = vst [vmem:[%s194 + $0xb8] sm:$0xff] %v4023
        %4069 = vst [vmem:[%s194 + $0xc0] sm:$0xff] %v4026
        %4070 = vst [vmem:[%s194 + $0xc8] sm:$0xff] %v4028
        %4071 = vst [vmem:[%s194 + $0xd0] sm:$0xff] %v4031
        %4072 = vst [vmem:[%s194 + $0xd8] sm:$0xff] %v4033
        %4073 = vst [vmem:[%s194 + $0xe0] sm:$0xff] %v4036
        %4074 = vst [vmem:[%s194 + $0xe8] sm:$0xff] %v4038
        %4075 = vst [vmem:[%s194 + $0xf0] sm:$0xff] %v4041
        %4076 = vst [vmem:[%s194 + $0xf8] sm:$0xff] %v4043
        %v4077 = vadd.f32 %v3966, %v3968
        %v4078 = vadd.f32 %v4077, %v3971
        %v4079 = vadd.f32 %v4078, %v3973
        %v4080 = vadd.f32 %v4079, %v3976
        %v4081 = vadd.f32 %v4080, %v3978
        %v4082 = vadd.f32 %v4081, %v3981
        %v4083 = vadd.f32 %v4082, %v3983
        %v4084 = vadd.f32 %v4083, %v3986
        %v4085 = vadd.f32 %v4084, %v3988
        %v4086 = vadd.f32 %v4085, %v3991
        %v4087 = vadd.f32 %v4086, %v3993
        %v4088 = vadd.f32 %v4087, %v3996
        %v4089 = vadd.f32 %v4088, %v3998
        %v4090 = vadd.f32 %v4089, %v4001
        %v4091 = vadd.f32 %v4090, %v4003
        %v4092 = vadd.f32 %v4091, %v4006
        %v4093 = vadd.f32 %v4092, %v4008
        %v4094 = vadd.f32 %v4093, %v4011
        %v4095 = vadd.f32 %v4094, %v4013
        %v4096 = vadd.f32 %v4095, %v4016
        %v4097 = vadd.f32 %v4096, %v4018
        %v4098 = vadd.f32 %v4097, %v4021
        %v4099 = vadd.f32 %v4098, %v4023
        %v4100 = vadd.f32 %v4099, %v4026
        %v4101 = vadd.f32 %v4100, %v4028
        %v4102 = vadd.f32 %v4101, %v4031
        %v4103 = vadd.f32 %v4102, %v4033
        %v4104 = vadd.f32 %v4103, %v4036
        %v4105 = vadd.f32 %v4104, %v4038
        %v4106 = vadd.f32 %v4105, %v4041
        %v4107 = vadd.f32 %v4106, %v4043
        %v4108 = vrot.slane %v4107, 4
        %v4109 = vadd.f32 %v4107, %v4108
        %v4110 = vrot.slane %v4109, 2
        %v4111 = vadd.f32 %v4109, %v4110
        %v4112 = vrot.slane %v4111, 1
        %v4113 = vadd.f32 %v4111, %v4112
        %4114 = vst [vmem:[%s200] sm:$0x1] %v4113
        %v4115 = vmul.f32 %v3966, %v3966
        %v4116 = vmul.f32 %v3968, %v3968
        %v4117 = vmul.f32 %v3971, %v3971
        %v4118 = vmul.f32 %v3973, %v3973
        %v4119 = vmul.f32 %v3976, %v3976
        %v4120 = vmul.f32 %v3978, %v3978
        %v4121 = vmul.f32 %v3981, %v3981
        %v4122 = vmul.f32 %v3983, %v3983
        %v4123 = vmul.f32 %v3986, %v3986
        %v4124 = vmul.f32 %v3988, %v3988
        %v4125 = vmul.f32 %v3991, %v3991
        %v4126 = vmul.f32 %v3993, %v3993
        %v4127 = vmul.f32 %v3996, %v3996
        %v4128 = vmul.f32 %v3998, %v3998
        %v4129 = vmul.f32 %v4001, %v4001
        %v4130 = vmul.f32 %v4003, %v4003
        %v4131 = vmul.f32 %v4006, %v4006
        %v4132 = vmul.f32 %v4008, %v4008
        %v4133 = vmul.f32 %v4011, %v4011
        %v4134 = vmul.f32 %v4013, %v4013
        %v4135 = vmul.f32 %v4016, %v4016
        %v4136 = vmul.f32 %v4018, %v4018
        %v4137 = vmul.f32 %v4021, %v4021
        %v4138 = vmul.f32 %v4023, %v4023
        %v4139 = vmul.f32 %v4026, %v4026
        %v4140 = vmul.f32 %v4028, %v4028
        %v4141 = vmul.f32 %v4031, %v4031
        %v4142 = vmul.f32 %v4033, %v4033
        %v4143 = vmul.f32 %v4036, %v4036
        %v4144 = vmul.f32 %v4038, %v4038
        %v4145 = vmul.f32 %v4041, %v4041
        %v4146 = vmul.f32 %v4043, %v4043
        %v4147 = vadd.f32 %v4115, %v4116
        %v4148 = vadd.f32 %v4147, %v4117
        %v4149 = vadd.f32 %v4148, %v4118
        %v4150 = vadd.f32 %v4149, %v4119
        %v4151 = vadd.f32 %v4150, %v4120
        %v4152 = vadd.f32 %v4151, %v4121
        %v4153 = vadd.f32 %v4152, %v4122
        %v4154 = vadd.f32 %v4153, %v4123
        %v4155 = vadd.f32 %v4154, %v4124
        %v4156 = vadd.f32 %v4155, %v4125
        %v4157 = vadd.f32 %v4156, %v4126
        %v4158 = vadd.f32 %v4157, %v4127
        %v4159 = vadd.f32 %v4158, %v4128
        %v4160 = vadd.f32 %v4159, %v4129
        %v4161 = vadd.f32 %v4160, %v4130
        %v4162 = vadd.f32 %v4161, %v4131
        %v4163 = vadd.f32 %v4162, %v4132
        %v4164 = vadd.f32 %v4163, %v4133
        %v4165 = vadd.f32 %v4164, %v4134
        %v4166 = vadd.f32 %v4165, %v4135
        %v4167 = vadd.f32 %v4166, %v4136
        %v4168 = vadd.f32 %v4167, %v4137
        %v4169 = vadd.f32 %v4168, %v4138
        %v4170 = vadd.f32 %v4169, %v4139
        %v4171 = vadd.f32 %v4170, %v4140
        %v4172 = vadd.f32 %v4171, %v4141
        %v4173 = vadd.f32 %v4172, %v4142
        %v4174 = vadd.f32 %v4173, %v4143
        %v4175 = vadd.f32 %v4174, %v4144
        %v4176 = vadd.f32 %v4175, %v4145
        %v4177 = vadd.f32 %v4176, %v4146
        %v4178 = vrot.slane %v4177, 4
        %v4179 = vadd.f32 %v4177, %v4178
        %v4180 = vrot.slane %v4179, 2
        %v4181 = vadd.f32 %v4179, %v4180
        %v4182 = vrot.slane %v4181, 1
        %v4183 = vadd.f32 %v4181, %v4182
        %4184 = vst [vmem:[%s206] sm:$0x1] %v4183
        %s4185 = sand.u32 %s77, 1
        %s4186 = scalar_lea.sflag [#allocation3], %s4185
        %s4187 = sand.u32 %s77, 1
        %s4188 = smul.addr %s4187, 256
        %s4189 = scalar_lea.vmem [#allocation2], %s4188
        %s4190 = sand.u32 %s22, 1
        %s4191 = scalar_lea.sflag [#allocation5], %s4190
        %s4192 = sand.u32 %s103, 1
        %s4193 = scalar_lea.vmem [#allocation4], %s4192
        %s4194 = sand.u32 %s22, 1
        %s4195 = scalar_lea.sflag [#allocation5], %s4194
        %s4196 = sand.u32 %s129, 1
        %s4197 = scalar_lea.vmem [#allocation6], %s4196
        // Predicated region
        $region29: #{tpu_custom_call.1} parent=27 // pred_check
          %p4198 = pneg %p87
        $region30: #{tpu_custom_call.1} parent=27 // pred_check_branch
          %4200 = sbr.rel (%p4198) target = $region32
        $region31: #{tpu_custom_call.1} parent=27 // pred_region
          %4202 = vsyncadd %s4186, 0
          %s4203 = smul.addr %s22, 32
          %s4204 = smul.addr %s4203, 8
          %s4205 = scalar_lea.hbm %s2, %s4204
          %s4206 = sshll.u32 %s4189, 4
          %s4207 = int_to_ptr.vmem [resolvable:$true] %s4206
          %s4208 = sshll.u32 %s4205, 4
          %s4209 = int_to_ptr.hbm [resolvable:$true] %s4208
          %4214 = dma.vmem_to_hbm [thread:$0]  %s4207, 4096, %s4209, %s4186, 128, 128, 8
        $region32: #{tpu_custom_call.1} parent=27 // pred_fallthru
          _
        // Predicated region
        $region33: #{tpu_custom_call.1} parent=27 // pred_check
          %p4215 = pneg %p113
        $region34: #{tpu_custom_call.1} parent=27 // pred_check_branch
          %4217 = sbr.rel (%p4215) target = $region36
        $region35: #{tpu_custom_call.1} parent=27 // pred_region
          %4219 = vsyncadd %s4191, 0
          %s4220 = scalar_lea.hbm %s3, %s22
          %s4222 = sshll.u32 %s4193, 4
          %s4223 = int_to_ptr.vmem [resolvable:$true] %s4222
          %s4224 = sshll.u32 %s4220, 4
          %s4225 = int_to_ptr.hbm [resolvable:$true] %s4224
          %4227 = dma.vmem_to_hbm [thread:$0]  %s4223, 16, %s4225, %s4191
        $region36: #{tpu_custom_call.1} parent=27 // pred_fallthru
          _
        // Predicated region
        $region37: #{tpu_custom_call.1} parent=27 // pred_check
          %p4228 = pneg %p139
        $region38: #{tpu_custom_call.1} parent=27 // pred_check_branch
          %4230 = sbr.rel (%p4228) target = $region40
        $region39: #{tpu_custom_call.1} parent=27 // pred_region
          %4232 = vsyncadd %s4195, 0
          %s4233 = scalar_lea.hbm %s4, %s22
          %s4235 = sshll.u32 %s4197, 4
          %s4236 = int_to_ptr.vmem [resolvable:$true] %s4235
          %s4237 = sshll.u32 %s4233, 4
          %s4238 = int_to_ptr.hbm [resolvable:$true] %s4237
          %4240 = dma.vmem_to_hbm [thread:$0]  %s4236, 16, %s4238, %s4195
        $region40: #{tpu_custom_call.1} parent=27 // pred_fallthru
          _
      $region28: #{tpu_custom_call.1} parent=5 // pred_fallthru
        _
      %p4241 = scmp.le.s32.totalorder 2, %s17
      // Predicated region
      $region41: #{tpu_custom_call.1} parent=5 // pred_check
        %p4242 = pneg %p4241
      $region42: #{tpu_custom_call.1} parent=5 // pred_check_branch
        %4244 = sbr.rel (%p4242) target = $region44
      $region43: #{tpu_custom_call.1} parent=5 // pred_region
        %s4245 = ssub.s32 %s17, 2
        // Predicated region
        $region45: #{tpu_custom_call.1} parent=43 // pred_check
          %p4246 = pneg %p93
        $region46: #{tpu_custom_call.1} parent=43 // pred_check_branch
          %4248 = sbr.rel (%p4246) target = $region48
        $region47: #{tpu_custom_call.1} parent=43 // pred_region
          %s4249 = sand.u32 %s78, 1
          %s4250 = scalar_lea.sflag [#allocation3], %s4249
          %s4251 = sand.u32 %s78, 1
          %s4252 = smul.addr %s4251, 256
          %s4253 = scalar_lea.vmem [#allocation2], %s4252
          %4255 = dma.done %s4250, 4096
        $region48: #{tpu_custom_call.1} parent=43 // pred_fallthru
          _
        // Predicated region
        $region49: #{tpu_custom_call.1} parent=43 // pred_check
          %p4256 = pneg %p119
        $region50: #{tpu_custom_call.1} parent=43 // pred_check_branch
          %4258 = sbr.rel (%p4256) target = $region52
        $region51: #{tpu_custom_call.1} parent=43 // pred_region
          %s4259 = sand.u32 %s23, 1
          %s4260 = scalar_lea.sflag [#allocation5], %s4259
          %s4261 = sand.u32 %s104, 1
          %s4262 = scalar_lea.vmem [#allocation4], %s4261
          %4264 = dma.done %s4260, 16
        $region52: #{tpu_custom_call.1} parent=43 // pred_fallthru
          _
        // Predicated region
        $region53: #{tpu_custom_call.1} parent=43 // pred_check
          %p4265 = pneg %p145
        $region54: #{tpu_custom_call.1} parent=43 // pred_check_branch
          %4267 = sbr.rel (%p4265) target = $region56
        $region55: #{tpu_custom_call.1} parent=43 // pred_region
          %s4268 = sand.u32 %s23, 1
          %s4269 = scalar_lea.sflag [#allocation5], %s4268
          %s4270 = sand.u32 %s130, 1
          %s4271 = scalar_lea.vmem [#allocation6], %s4270
          %4273 = dma.done %s4269, 16
        $region56: #{tpu_custom_call.1} parent=43 // pred_fallthru
          _
      $region44: #{tpu_custom_call.1} parent=5 // pred_fallthru
        _
    $region6: #{tpu_custom_call.1} parent=1 // loop_footer
      %s21 = sadd.s32 1, %s17
    $region7: #{tpu_custom_call.1} parent=1 // loop_footer_branch
      %16 = sbr.rel target = $region3
    $region8: #{tpu_custom_call.1} parent=1 // loop_exit
      _
    %4274 = vsyncpa [#allocation3], 1
    %s4275 = scalar_lea.sflag [#allocation3], 1
    %4276 = vsyncpa %s4275, 1
    %4277 = vsyncpa [#allocation5], 1
    %s4278 = scalar_lea.sflag [#allocation5], 1
    %4279 = vsyncpa %s4278, 1

</llo_original>
